<compile_context>
chip_gen: v7x
topology: tpu7x:2x2x1
jax: 0.10.0
libtpu: 0.0.40
codegen_flags: <defaults>
</compile_context>

<pallas_src>
import math

import jax
import jax.numpy as jnp
from jax.experimental import pallas as pl
from jax.experimental.pallas import tpu as pltpu


# ---------------------------------------------------------------------------
# Kernel
# ---------------------------------------------------------------------------
def _make_fused_kernel(K, rt, W, C_in, demodulate, eps):
    """Returns (kernel, kernel_prepped) for row-tile rt, output width W."""

    def _accumulate_taps(xv, w_fin_ref):
        # xv:        (rt + 2p, W + 2p, C_in)  compute dtype (window value)
        # w_fin_ref: (K*K, C_in, C_out)       compute dtype (ref)
        # returns    (rt * W, C_out)          f32
        acc = None
        for ky in range(K):
            for kx in range(K):
                patch = xv[ky:ky + rt, kx:kx + W, :].reshape(rt * W, C_in)
                part = jnp.dot(patch, w_fin_ref[ky * K + kx],
                               preferred_element_type=jnp.float32)
                acc = part if acc is None else acc + part
        return acc

    def kernel(style_ref, w_ref, xwin_ref, out_ref, w_fin_ref):
        # style_ref: (1, C_in, 1)            f32   conv_scale * EqualLinear(style)
        # w_ref:     (K*K, C_in, C_out)      compute dtype (base weight, (ky,kx,ic,oc))
        # xwin_ref:  (1, rt+2p, W+2p, C_in)  compute dtype (haloed row window)
        # out_ref:   (1, rt*W, C_out)        out dtype
        # w_fin_ref: (K*K, C_in, C_out)      compute dtype VMEM scratch

        # --- modulate + demodulate once per batch element (spatial tile 0 only) ---
        @pl.when(pl.program_id(1) == 0)
        def _prepare_weight():
            w = w_ref[...].astype(jnp.float32) * style_ref[0]        # (KK,Cin,Cout)
            if demodulate:
                d = jax.lax.rsqrt(
                    jnp.sum(w * w, axis=(0, 1), keepdims=True) + eps)
                w = w * d
            w_fin_ref[...] = w.astype(w_fin_ref.dtype)

        # --- fused im2col: K*K shifted MXU matmuls, f32 accumulate, one store ---
        xv = xwin_ref[...][0]
        out_ref[0] = _accumulate_taps(xv, w_fin_ref).astype(out_ref.dtype)

    def kernel_prepped(w_fin_ref, xwin_ref, out_ref):
        # B == 1 path: weight already modulated/demodulated in the wrapper.
        xv = xwin_ref[...][0]
        out_ref[0] = _accumulate_taps(xv, w_fin_ref).astype(out_ref.dtype)

    return kernel, kernel_prepped


# ---------------------------------------------------------------------------
# Wrapper helpers
# ---------------------------------------------------------------------------
def _vmem_budget():
    """Generation-aware VMEM working-set budget (bytes)."""
    cap = 64 * 1024 * 1024            # conservative fallback (v7x-sized)
    try:
        cap = int(pltpu.get_tpu_info().vmem_capacity_bytes)
    except Exception:
        pass
    return cap, int(cap * 7 // 10)    # ~45 MiB on v7x, ~90 MiB on v5e/v6e


def _vmem_bytes(rt, W, Wp, C_in, C_out, KK, p, in_bytes, out_bytes):
    """Estimated VMEM working set for a given row tile."""
    win = (rt + 2 * p) * Wp * C_in * in_bytes     # one input-window buffer
    out = rt * W * C_out * out_bytes              # one output-block buffer
    wgt = KK * C_in * C_out * in_bytes            # base weight block
    acc = rt * W * C_out * 4                      # f32 accumulator temp
    tmp = 3 * rt * W * C_in * in_bytes            # tap-slice temporaries (slack)
    prep = KK * C_in * C_out * 4                  # f32 modulated-weight temp
    sty = C_in * 4
    return (2 * win + 2 * out                     # double-buffered streams
            + 2 * wgt + wgt                       # pipelined weight (2x) + w_fin scratch
            + acc + tmp + prep + 2 * sty)


_MAX_M_SUBLANES = 8192   # cap on the matmul M dim (= rt * W) to bound temporaries


def _pick_row_tile(H, W, est_fn, budget):
    """Largest row tile rt dividing H whose working set fits the VMEM budget."""
    cands = [d for d in range(H, 0, -1)
             if H % d == 0 and ((d * W) % 8 == 0 or d == H)]
    sized = [d for d in cands if d * W <= _MAX_M_SUBLANES] or [cands[-1]]
    for d in sized:
        if est_fn(d) <= budget:
            return d
    return sized[-1]   # best effort (smallest candidate)


def _extract_row_windows(x_nhwc, p, rt):
    """(B, H, W, C) -> (B*n_s, rt+2p, W+2p, C) overlapping haloed row windows."""
    B, H, W, C = x_nhwc.shape
    xp = jnp.pad(x_nhwc, ((0, 0), (p, p), (p, p), (0, 0)))
    n_s = H // rt
    wins = [xp[:, s * rt: s * rt + rt + 2 * p] for s in range(n_s)]
    x_win = jnp.stack(wins, axis=1)                      # (B, n_s, rt+2p, Wp, C)
    return x_win.reshape(B * n_s, rt + 2 * p, W + 2 * p, C), n_s


# ---------------------------------------------------------------------------
# Public entry point
# ---------------------------------------------------------------------------
def modulated_conv2d(x, style, conv_weight, mod_weight, mod_bias, kernel_size,
                     demodulate=True, eps=1e-8, lr_mul=1.0,
                     compute_dtype=jnp.bfloat16, out_dtype=None):
    """Fused ModulatedConv2d forward (upsample=False, downsample=False).

    x:           (B, C_in, H, W)     float32, NCHW
    style:       (B, style_dim)      float32
    conv_weight: (1, C_out, C_in, K, K)
    mod_weight:  (C_in, style_dim)   (EqualLinear weight)
    mod_bias:    (C_in,)             (EqualLinear bias, bias_init=1)
    returns:     (B, C_out, H, W)    out_dtype (defaults to compute_dtype)
    """
    B, C_in, H, W = x.shape
    _, C_out, _, K, K2 = conv_weight.shape
    assert K == kernel_size and K2 == K
    assert K % 2 == 1, "only odd kernel sizes preserve H,W with padding=K//2"
    style_dim = style.shape[1]
    KK = K * K
    p = K // 2
    Wp = W + 2 * p
    HW = H * W
    out_dtype = compute_dtype if out_dtype is None else out_dtype
    in_bytes = jnp.dtype(compute_dtype).itemsize
    out_bytes = jnp.dtype(out_dtype).itemsize

    conv_scale = 1.0 / math.sqrt(C_in * K * K)
    mod_scale = (1.0 / math.sqrt(style_dim)) * lr_mul

    # --- EqualLinear modulation in plain XLA (M=1 matmul, not worth the MXU) ---
    style_mod = (style.astype(jnp.float32)
                 @ (mod_weight.astype(jnp.float32).T * mod_scale)
                 + mod_bias.astype(jnp.float32) * lr_mul)              # (B, C_in)
    style_vec = (conv_scale * style_mod).reshape(B, C_in, 1)           # f32

    # --- base conv weight, (ky, kx, ic, oc) with lane-dense C_out, compute dtype ---
    w_base = jnp.transpose(conv_weight.reshape(C_out, C_in, K, K),
                           (2, 3, 1, 0)).reshape(KK, C_in, C_out).astype(compute_dtype)

    # --- channels-last input; halo is handled by cheap overlapping row windows ---
    x_nhwc = jnp.transpose(x, (0, 2, 3, 1)).astype(compute_dtype)      # (B, H, W, C_in)

    cap, budget = _vmem_budget()
    est_fn = lambda r: _vmem_bytes(r, W, Wp, C_in, C_out, KK, p, in_bytes, out_bytes)
    rt = _pick_row_tile(H, W, est_fn, budget)
    vmem_est = est_fn(rt)
    x_win, n_s = _extract_row_windows(x_nhwc, p, rt)                   # (B*n_s, rt+2p, Wp, C_in)

    kernel, kernel_prepped = _make_fused_kernel(K, rt, W, C_in, demodulate, eps)
    vmem_limit = int(min(cap * 9 // 10,
                         max(32 * 1024 * 1024, vmem_est * 5 // 4)))

    if B == 1:
        # v7x megacore: prep the weight in the wrapper, drop the scratch + gate,
        # and let the spatial axis shard across both TensorCores.
        w_mod = w_base.astype(jnp.float32) * style_vec[0]              # (KK,Cin,Cout)
        if demodulate:
            d = jax.lax.rsqrt(jnp.sum(w_mod * w_mod, axis=(0, 1), keepdims=True) + eps)
            w_mod = w_mod * d
        w_fin = w_mod.astype(compute_dtype)

        out_flat = pl.pallas_call(
            kernel_prepped,
            out_shape=jax.ShapeDtypeStruct((B, HW, C_out), out_dtype),
            grid_spec=pltpu.PrefetchScalarGridSpec(
                num_scalar_prefetch=0,
                grid=(n_s,),
                in_specs=[
                    pl.BlockSpec((KK, C_in, C_out), lambda s: (0, 0, 0)),
                    pl.BlockSpec((1, rt + 2 * p, Wp, C_in), lambda s: (s, 0, 0, 0)),
                ],
                out_specs=pl.BlockSpec((1, rt * W, C_out), lambda s: (0, s, 0)),
            ),
            compiler_params=pltpu.CompilerParams(
                dimension_semantics=("parallel",),
                vmem_limit_bytes=vmem_limit,
            ),
        )(w_fin, x_win)
    else:
        out_flat = pl.pallas_call(
            kernel,
            out_shape=jax.ShapeDtypeStruct((B, HW, C_out), out_dtype),
            grid_spec=pltpu.PrefetchScalarGridSpec(
                num_scalar_prefetch=0,
                grid=(B, n_s),
                in_specs=[
                    pl.BlockSpec((1, C_in, 1), lambda b, s: (b, 0, 0)),        # style
                    pl.BlockSpec((KK, C_in, C_out), lambda b, s: (0, 0, 0)),   # base weight
                    pl.BlockSpec((1, rt + 2 * p, Wp, C_in),
                                 lambda b, s: (b * n_s + s, 0, 0, 0)),         # row window
                ],
                out_specs=pl.BlockSpec((1, rt * W, C_out), lambda b, s: (b, s, 0)),
                scratch_shapes=[pltpu.VMEM((KK, C_in, C_out), compute_dtype)],  # w_fin
            ),
            compiler_params=pltpu.CompilerParams(
                # Batch is megacore-parallel; spatial stays "arbitrary" so each core
                # hits spatial_id == 0 for every batch element it owns (w_fin gate).
                dimension_semantics=("parallel", "arbitrary"),
                vmem_limit_bytes=vmem_limit,
            ),
        )(style_vec, w_base, x_win)

    out = out_flat.reshape(B, H, W, C_out)
    return jnp.transpose(out, (0, 3, 1, 2))


# ---------------------------------------------------------------------------
# Pure-JAX reference (mirrors the PyTorch fused forward, full f32)
# ---------------------------------------------------------------------------
def _im2col_ref(x, K, pad):
    B, C, H, W = x.shape
    xp = jnp.pad(x, ((0, 0), (0, 0), (pad, pad), (pad, pad)))
    cols = [xp[:, :, ky:ky + H, kx:kx + W].reshape(B, C, H * W)
            for ky in range(K) for kx in range(K)]
    patches = jnp.stack(cols, axis=1)                   # (B, K*K, C, H*W)
    return patches.reshape(B, K * K * C, H * W)


def modulated_conv2d_ref(x, style, conv_weight, mod_weight, mod_bias,
                         kernel_size, demodulate=True, eps=1e-8, lr_mul=1.0):
    B, C_in, H, W = x.shape
    _, C_out, _, K, _ = conv_weight.shape
    style_dim = style.shape[1]
    conv_scale = 1.0 / math.sqrt(C_in * K * K)
    mod_scale = (1.0 / math.sqrt(style_dim)) * lr_mul
    pad = K // 2

    s = style @ (mod_weight * mod_scale).T + mod_bias * lr_mul          # (B, C_in)
    w = conv_scale * conv_weight * s[:, None, :, None, None]            # (B,Cout,Cin,K,K)
    if demodulate:
        demod = jax.lax.rsqrt(jnp.sum(w * w, axis=(2, 3, 4)) + eps)
        w = w * demod[:, :, None, None, None]

    patches = _im2col_ref(x, K, pad)                                    # (B, K*K*Cin, HW)
    w_flat = jnp.transpose(w, (0, 1, 3, 4, 2)).reshape(B, C_out, K * K * C_in)
    out = jnp.einsum('bof,bfs->bos', w_flat, patches)
    return out.reshape(B, C_out, H, W)


# ---------------------------------------------------------------------------
if __name__ == "__main__":
    B, C_in, C_out = 2, 4, 8
    H = W = 16
    K = 3
    style_dim = 8

    key = jax.random.PRNGKey(0)
    k1, k2, k3, k4 = jax.random.split(key, 4)

    x = jax.random.normal(k1, (B, C_in, H, W), dtype=jnp.float32)
    style = jax.random.normal(k2, (B, style_dim), dtype=jnp.float32)
    # nn.Parameter(torch.randn(1, out, in, K, K))
    conv_weight = jax.random.normal(k3, (1, C_out, C_in, K, K), dtype=jnp.float32)
    # EqualLinear(style_dim, in_channel, bias_init=1): weight ~ randn / lr_mul, bias = 1
    mod_weight = jax.random.normal(k4, (C_in, style_dim), dtype=jnp.float32)
    mod_bias = jnp.ones((C_in,), dtype=jnp.float32)

    ref = jax.block_until_ready(
        modulated_conv2d_ref(x, style, conv_weight, mod_weight, mod_bias, K))

    # f32 compute path (exact-ish math, f32 output).
    out_f32 = jax.block_until_ready(
        modulated_conv2d(x, style, conv_weight, mod_weight, mod_bias, K,
                         compute_dtype=jnp.float32))
    assert out_f32.shape == (B, C_out, H, W), out_f32.shape
    err_f32 = float(jnp.max(jnp.abs(out_f32.astype(jnp.float32) - ref)))
    assert err_f32 < 1e-3, err_f32

    # Production path: bf16 weight/activations/output, f32 MXU accumulation.
    out_bf16 = jax.block_until_ready(
        modulated_conv2d(x, style, conv_weight, mod_weight, mod_bias, K))
    assert out_bf16.shape == (B, C_out, H, W), out_bf16.shape
    err_bf16 = float(jnp.max(jnp.abs(out_bf16.astype(jnp.float32) - ref)))
    assert err_bf16 < 5e-2, err_bf16

    # B == 1 path (wrapper-side weight prep, spatial axis parallel).
    out_b1 = jax.block_until_ready(
        modulated_conv2d(x[:1], style[:1], conv_weight, mod_weight, mod_bias, K))
    assert out_b1.shape == (1, C_out, H, W), out_b1.shape
    err_b1 = float(jnp.max(jnp.abs(out_b1.astype(jnp.float32) - ref[:1])))
    assert err_b1 < 5e-2, err_b1

    print("KERNEL_OK")
</pallas_src>

<mosaic_0001>
module attributes {stable_mosaic.version = 11 : i64} {
  func.func @kernel(%arg0: i32, %arg1: i32, %arg2: memref<1x4x1xf32, #tpu.memory_space<vmem>>, %arg3: memref<9x4x8xf32, #tpu.memory_space<vmem>>, %arg4: memref<1x18x18x4xf32, #tpu.memory_space<vmem>>, %arg5: memref<1x256x8xf32, #tpu.memory_space<vmem>>, %arg6: memref<9x4x8xf32, #tpu.memory_space<vmem>>) attributes {dimension_semantics = [#tpu.dimension_semantics<parallel>, #tpu.dimension_semantics<arbitrary>], iteration_bounds = array<i64: 2, 1>, scalar_prefetch = 0 : i64, scratch_operands = 1 : i64, tpu.core_type = #tpu.core_type<tc>, window_params = [{transform_indices = @transform_0, window_bounds = array<i64: 1, 4, 1>}, {pipeline_mode = #tpu.pipeline_mode<synchronous>, transform_indices = @transform_1, window_bounds = array<i64: 9, 4, 8>}, {transform_indices = @transform_2, window_bounds = array<i64: 1, 18, 18, 4>}, {transform_indices = @transform_3, window_bounds = array<i64: 1, 256, 8>}]} {
    %c0_i32 = arith.constant 0 : i32
    %0 = arith.cmpi eq, %arg1, %c0_i32 : i32
    %1 = arith.extui %0 : i1 to i32
    %c0_i32_0 = arith.constant 0 : i32
    %2 = arith.cmpi ne, %1, %c0_i32_0 : i32
    scf.if %2 {
      %c0_34 = arith.constant 0 : index
      %c0_35 = arith.constant 0 : index
      %c0_36 = arith.constant 0 : index
      %61 = vector.load %arg3[%c0_34, %c0_35, %c0_36] : memref<9x4x8xf32, #tpu.memory_space<vmem>>, vector<9x4x8xf32>
      %c0_37 = arith.constant 0 : index
      %c0_38 = arith.constant 0 : index
      %c0_39 = arith.constant 0 : index
      %62 = vector.load %arg2[%c0_37, %c0_38, %c0_39] : memref<1x4x1xf32, #tpu.memory_space<vmem>>, vector<1x4x1xf32>
      %63 = vector.shape_cast %62 : vector<1x4x1xf32> to vector<4x1xf32>
      %64 = vector.shape_cast %63 : vector<4x1xf32> to vector<1x4x1xf32>
      %65 = vector.broadcast %64 : vector<1x4x1xf32> to vector<9x4x8xf32>
      %66 = arith.mulf %61, %65 : vector<9x4x8xf32>
      %67 = arith.mulf %66, %66 : vector<9x4x8xf32>
      %cst_40 = arith.constant dense<0.000000e+00> : vector<8xf32>
      %68 = vector.multi_reduction <add>, %67, %cst_40 [0, 1] : vector<9x4x8xf32> to vector<8xf32>
      %69 = vector.shape_cast %68 : vector<8xf32> to vector<1x1x8xf32>
      %cst_41 = arith.constant 9.99999993E-9 : f32
      %70 = vector.broadcast %cst_41 : f32 to vector<1x1x8xf32>
      %71 = arith.addf %69, %70 : vector<1x1x8xf32>
      %72 = math.rsqrt %71 : vector<1x1x8xf32>
      %73 = vector.broadcast %72 : vector<1x1x8xf32> to vector<9x4x8xf32>
      %74 = arith.mulf %66, %73 : vector<9x4x8xf32>
      %c0_42 = arith.constant 0 : index
      %c0_43 = arith.constant 0 : index
      %c0_44 = arith.constant 0 : index
      %75 = vector.load %arg6[%c0_42, %c0_43, %c0_44] : memref<9x4x8xf32, #tpu.memory_space<vmem>>, vector<9x4x8xf32>
      tpu.vector_store %arg6[%c0_42, %c0_43, %c0_44], %74 {strides = array<i32>} : memref<9x4x8xf32, #tpu.memory_space<vmem>>, vector<9x4x8xf32>,
    } else {
    }
    %c0 = arith.constant 0 : index
    %c0_1 = arith.constant 0 : index
    %c0_2 = arith.constant 0 : index
    %c0_3 = arith.constant 0 : index
    %3 = vector.load %arg4[%c0, %c0_1, %c0_2, %c0_3] : memref<1x18x18x4xf32, #tpu.memory_space<vmem>>, vector<1x18x18x4xf32>
    %4 = vector.shape_cast %3 : vector<1x18x18x4xf32> to vector<18x18x4xf32>
    %5 = vector.extract_strided_slice %4 {offsets = [0, 0, 0], sizes = [16, 16, 4], strides = [1, 1, 1]} : vector<18x18x4xf32> to vector<16x16x4xf32>
    %6 = vector.shape_cast %5 : vector<16x16x4xf32> to vector<256x4xf32>
    %c0_4 = arith.constant 0 : index
    %c0_5 = arith.constant 0 : index
    %c0_6 = arith.constant 0 : index
    %7 = vector.load %arg6[%c0_4, %c0_5, %c0_6] : memref<9x4x8xf32, #tpu.memory_space<vmem>>, vector<1x4x8xf32>
    %8 = vector.shape_cast %7 : vector<1x4x8xf32> to vector<4x8xf32>
    %cst = arith.constant dense<0.000000e+00> : vector<256x8xf32>
    %9 = tpu.matmul %6, %8, %cst {dimension_numbers = #tpu.dot_dimension_numbers<[1], [0], [0], [1], [0, 0, 1, 1], [], []>} : vector<256x4xf32>, vector<4x8xf32>, vector<256x8xf32> -> vector<256x8xf32>
    %10 = vector.extract_strided_slice %4 {offsets = [0, 1, 0], sizes = [16, 16, 4], strides = [1, 1, 1]} : vector<18x18x4xf32> to vector<16x16x4xf32>
    %11 = vector.shape_cast %10 : vector<16x16x4xf32> to vector<256x4xf32>
    %c1 = arith.constant 1 : index
    %c0_7 = arith.constant 0 : index
    %c0_8 = arith.constant 0 : index
    %12 = vector.load %arg6[%c1, %c0_7, %c0_8] : memref<9x4x8xf32, #tpu.memory_space<vmem>>, vector<1x4x8xf32>
    %13 = vector.shape_cast %12 : vector<1x4x8xf32> to vector<4x8xf32>
    %cst_9 = arith.constant dense<0.000000e+00> : vector<256x8xf32>
    %14 = tpu.matmul %11, %13, %cst_9 {dimension_numbers = #tpu.dot_dimension_numbers<[1], [0], [0], [1], [0, 0, 1, 1], [], []>} : vector<256x4xf32>, vector<4x8xf32>, vector<256x8xf32> -> vector<256x8xf32>
    %15 = arith.addf %9, %14 : vector<256x8xf32>
    %16 = vector.extract_strided_slice %4 {offsets = [0, 2, 0], sizes = [16, 16, 4], strides = [1, 1, 1]} : vector<18x18x4xf32> to vector<16x16x4xf32>
    %17 = vector.shape_cast %16 : vector<16x16x4xf32> to vector<256x4xf32>
    %c2 = arith.constant 2 : index
    %c0_10 = arith.constant 0 : index
    %c0_11 = arith.constant 0 : index
    %18 = vector.load %arg6[%c2, %c0_10, %c0_11] : memref<9x4x8xf32, #tpu.memory_space<vmem>>, vector<1x4x8xf32>
    %19 = vector.shape_cast %18 : vector<1x4x8xf32> to vector<4x8xf32>
    %cst_12 = arith.constant dense<0.000000e+00> : vector<256x8xf32>
    %20 = tpu.matmul %17, %19, %cst_12 {dimension_numbers = #tpu.dot_dimension_numbers<[1], [0], [0], [1], [0, 0, 1, 1], [], []>} : vector<256x4xf32>, vector<4x8xf32>, vector<256x8xf32> -> vector<256x8xf32>
    %21 = arith.addf %15, %20 : vector<256x8xf32>
    %22 = vector.extract_strided_slice %4 {offsets = [1, 0, 0], sizes = [16, 16, 4], strides = [1, 1, 1]} : vector<18x18x4xf32> to vector<16x16x4xf32>
    %23 = vector.shape_cast %22 : vector<16x16x4xf32> to vector<256x4xf32>
    %c3 = arith.constant 3 : index
    %c0_13 = arith.constant 0 : index
    %c0_14 = arith.constant 0 : index
    %24 = vector.load %arg6[%c3, %c0_13, %c0_14] : memref<9x4x8xf32, #tpu.memory_space<vmem>>, vector<1x4x8xf32>
    %25 = vector.shape_cast %24 : vector<1x4x8xf32> to vector<4x8xf32>
    %cst_15 = arith.constant dense<0.000000e+00> : vector<256x8xf32>
    %26 = tpu.matmul %23, %25, %cst_15 {dimension_numbers = #tpu.dot_dimension_numbers<[1], [0], [0], [1], [0, 0, 1, 1], [], []>} : vector<256x4xf32>, vector<4x8xf32>, vector<256x8xf32> -> vector<256x8xf32>
    %27 = arith.addf %21, %26 : vector<256x8xf32>
    %28 = vector.extract_strided_slice %4 {offsets = [1, 1, 0], sizes = [16, 16, 4], strides = [1, 1, 1]} : vector<18x18x4xf32> to vector<16x16x4xf32>
    %29 = vector.shape_cast %28 : vector<16x16x4xf32> to vector<256x4xf32>
    %c4 = arith.constant 4 : index
    %c0_16 = arith.constant 0 : index
    %c0_17 = arith.constant 0 : index
    %30 = vector.load %arg6[%c4, %c0_16, %c0_17] : memref<9x4x8xf32, #tpu.memory_space<vmem>>, vector<1x4x8xf32>
    %31 = vector.shape_cast %30 : vector<1x4x8xf32> to vector<4x8xf32>
    %cst_18 = arith.constant dense<0.000000e+00> : vector<256x8xf32>
    %32 = tpu.matmul %29, %31, %cst_18 {dimension_numbers = #tpu.dot_dimension_numbers<[1], [0], [0], [1], [0, 0, 1, 1], [], []>} : vector<256x4xf32>, vector<4x8xf32>, vector<256x8xf32> -> vector<256x8xf32>
    %33 = arith.addf %27, %32 : vector<256x8xf32>
    %34 = vector.extract_strided_slice %4 {offsets = [1, 2, 0], sizes = [16, 16, 4], strides = [1, 1, 1]} : vector<18x18x4xf32> to vector<16x16x4xf32>
    %35 = vector.shape_cast %34 : vector<16x16x4xf32> to vector<256x4xf32>
    %c5 = arith.constant 5 : index
    %c0_19 = arith.constant 0 : index
    %c0_20 = arith.constant 0 : index
    %36 = vector.load %arg6[%c5, %c0_19, %c0_20] : memref<9x4x8xf32, #tpu.memory_space<vmem>>, vector<1x4x8xf32>
    %37 = vector.shape_cast %36 : vector<1x4x8xf32> to vector<4x8xf32>
    %cst_21 = arith.constant dense<0.000000e+00> : vector<256x8xf32>
    %38 = tpu.matmul %35, %37, %cst_21 {dimension_numbers = #tpu.dot_dimension_numbers<[1], [0], [0], [1], [0, 0, 1, 1], [], []>} : vector<256x4xf32>, vector<4x8xf32>, vector<256x8xf32> -> vector<256x8xf32>
    %39 = arith.addf %33, %38 : vector<256x8xf32>
    %40 = vector.extract_strided_slice %4 {offsets = [2, 0, 0], sizes = [16, 16, 4], strides = [1, 1, 1]} : vector<18x18x4xf32> to vector<16x16x4xf32>
    %41 = vector.shape_cast %40 : vector<16x16x4xf32> to vector<256x4xf32>
    %c6 = arith.constant 6 : index
    %c0_22 = arith.constant 0 : index
    %c0_23 = arith.constant 0 : index
    %42 = vector.load %arg6[%c6, %c0_22, %c0_23] : memref<9x4x8xf32, #tpu.memory_space<vmem>>, vector<1x4x8xf32>
    %43 = vector.shape_cast %42 : vector<1x4x8xf32> to vector<4x8xf32>
    %cst_24 = arith.constant dense<0.000000e+00> : vector<256x8xf32>
    %44 = tpu.matmul %41, %43, %cst_24 {dimension_numbers = #tpu.dot_dimension_numbers<[1], [0], [0], [1], [0, 0, 1, 1], [], []>} : vector<256x4xf32>, vector<4x8xf32>, vector<256x8xf32> -> vector<256x8xf32>
    %45 = arith.addf %39, %44 : vector<256x8xf32>
    %46 = vector.extract_strided_slice %4 {offsets = [2, 1, 0], sizes = [16, 16, 4], strides = [1, 1, 1]} : vector<18x18x4xf32> to vector<16x16x4xf32>
    %47 = vector.shape_cast %46 : vector<16x16x4xf32> to vector<256x4xf32>
    %c7 = arith.constant 7 : index
    %c0_25 = arith.constant 0 : index
    %c0_26 = arith.constant 0 : index
    %48 = vector.load %arg6[%c7, %c0_25, %c0_26] : memref<9x4x8xf32, #tpu.memory_space<vmem>>, vector<1x4x8xf32>
    %49 = vector.shape_cast %48 : vector<1x4x8xf32> to vector<4x8xf32>
    %cst_27 = arith.constant dense<0.000000e+00> : vector<256x8xf32>
    %50 = tpu.matmul %47, %49, %cst_27 {dimension_numbers = #tpu.dot_dimension_numbers<[1], [0], [0], [1], [0, 0, 1, 1], [], []>} : vector<256x4xf32>, vector<4x8xf32>, vector<256x8xf32> -> vector<256x8xf32>
    %51 = arith.addf %45, %50 : vector<256x8xf32>
    %52 = vector.extract_strided_slice %4 {offsets = [2, 2, 0], sizes = [16, 16, 4], strides = [1, 1, 1]} : vector<18x18x4xf32> to vector<16x16x4xf32>
    %53 = vector.shape_cast %52 : vector<16x16x4xf32> to vector<256x4xf32>
    %c8 = arith.constant 8 : index
    %c0_28 = arith.constant 0 : index
    %c0_29 = arith.constant 0 : index
    %54 = vector.load %arg6[%c8, %c0_28, %c0_29] : memref<9x4x8xf32, #tpu.memory_space<vmem>>, vector<1x4x8xf32>
    %55 = vector.shape_cast %54 : vector<1x4x8xf32> to vector<4x8xf32>
    %cst_30 = arith.constant dense<0.000000e+00> : vector<256x8xf32>
    %56 = tpu.matmul %53, %55, %cst_30 {dimension_numbers = #tpu.dot_dimension_numbers<[1], [0], [0], [1], [0, 0, 1, 1], [], []>} : vector<256x4xf32>, vector<4x8xf32>, vector<256x8xf32> -> vector<256x8xf32>
    %57 = arith.addf %51, %56 : vector<256x8xf32>
    %c0_31 = arith.constant 0 : index
    %c0_32 = arith.constant 0 : index
    %c0_33 = arith.constant 0 : index
    %58 = vector.load %arg5[%c0_31, %c0_32, %c0_33] : memref<1x256x8xf32, #tpu.memory_space<vmem>>, vector<1x256x8xf32>
    %59 = vector.shape_cast %58 : vector<1x256x8xf32> to vector<256x8xf32>
    %60 = vector.shape_cast %57 : vector<256x8xf32> to vector<1x256x8xf32>
    tpu.vector_store %arg5[%c0_31, %c0_32, %c0_33], %60 {strides = array<i32>} : memref<1x256x8xf32, #tpu.memory_space<vmem>>, vector<1x256x8xf32>,
    return
  }
  func.func @transform_0(%arg0: i32, %arg1: i32) -> (i32, i32, i32) {
    %c0_i32 = arith.constant 0 : i32
    %c0_i32_0 = arith.constant 0 : i32
    %c0_i32_1 = arith.constant 0 : i32
    return %arg0, %c0_i32, %c0_i32_0 : i32, i32, i32
  }
  func.func @transform_1(%arg0: i32, %arg1: i32) -> (i32, i32, i32) {
    %c0_i32 = arith.constant 0 : i32
    %c0_i32_0 = arith.constant 0 : i32
    %c0_i32_1 = arith.constant 0 : i32
    %c0_i32_2 = arith.constant 0 : i32
    return %c0_i32, %c0_i32_0, %c0_i32_1 : i32, i32, i32
  }
  func.func @transform_2(%arg0: i32, %arg1: i32) -> (i32, i32, i32, i32) {
    %c1_i32 = arith.constant 1 : i32
    %0 = arith.muli %arg0, %c1_i32 : i32
    %1 = arith.addi %0, %arg1 : i32
    %c0_i32 = arith.constant 0 : i32
    %c0_i32_0 = arith.constant 0 : i32
    %c0_i32_1 = arith.constant 0 : i32
    %c0_i32_2 = arith.constant 0 : i32
    return %1, %c0_i32, %c0_i32_0, %c0_i32_1 : i32, i32, i32, i32
  }
  func.func @transform_3(%arg0: i32, %arg1: i32) -> (i32, i32, i32) {
    %c0_i32 = arith.constant 0 : i32
    %c0_i32_0 = arith.constant 0 : i32
    return %arg0, %arg1, %c0_i32 : i32, i32, i32
  }
}

</mosaic_0001>

<llo_original>
// kernel: tpu_custom_call.1
$region0: #{tpu_custom_call.1}
  #allocation0 [shape = 'u32[]', space=smem, size = 0x4, offset = 0x4, fixed_abs, tag = 'smem constant byte address 0x4 - core index']
  #allocation1 [shape = 'u32[144,128]{1,0:T(1,128)}', space=vmem, size = 0x12000, scoped, tag = 'internal scratch']
  #allocation2 [shape = 'f32[9,4,8]{2,1,0:T(4,128)}', space=vmem, size = 0x4800, scoped, tag = 'scratch operand']
  %s0 = inlined_call_operand.vmem [shape: f32[2,4,1], index: 0, kind: input, shape index: {}]
  %s1 = inlined_call_operand.vmem [shape: f32[9,4,8], index: 1, kind: input, shape index: {}]
  %s2 = inlined_call_operand.vmem [shape: f32[2,18,18,4], index: 2, kind: input, shape index: {}]
  %s3 = inlined_call_operand.vmem [shape: f32[2,256,8], index: 3, kind: output, shape index: {}]
  %s4 = sld [smem:[#allocation0]]
  $region49: #{tpu_custom_call.1} parent=0
    _
  %s6 = ssub.s32 1, %s4
  %s7 = scalar_select 0, %s6, %s4
  loop: start=0, step=1, limit=4
  $region2: #{tpu_custom_call.1} parent=0 // loop_pre_header
    _
  $region3: #{tpu_custom_call.1} parent=0 // loop_header
    %s9 = sphi 0, %s13
    %p10 = scmp.ge.s32.totalorder %s9, 4
    %s16 = sphi 0, %s28
    %s17 = sphi 0, %s24
    %s18 = sphi 0, %s16
    %s19 = sphi 0, %s17
    %s20 = sphi 0, %s18
    %s21 = sphi 0, %s19
    %s31 = sphi 0, %s33
    %s34 = sphi 0, %s31
    %s35 = sphi 0, %s34
    %s51 = sphi 0, %s35
    %s55 = sphi 0, %s55
    %s57 = sphi 0, %s55
    %s58 = sphi 0, %s57
    %s72 = sphi 0, %s58
    %s80 = sphi 0, %s82
    %s83 = sphi 0, %s80
    %s84 = sphi 0, %s83
    %s100 = sphi 0, %s84
    %s108 = sphi 0, %s110
    %s111 = sphi 0, %s108
    %s112 = sphi 0, %s111
    %s128 = sphi 0, %s112
  $region4: #{tpu_custom_call.1} parent=0 // loop_header_branch
    %12 = sbr.rel (%p10) target = $region8
  $region5: #{tpu_custom_call.1} parent=0 // loop_body
    %s14 = ssub.s32 %s9, 1
    %s15 = ssub.s32 %s9, 2
    %s22 = sadd.s32 1, %s17
    %p23 = scmp.ge.s32.totalorder %s22, 1
    %s24 = scalar_select %p23, 0, %s22
    %s25 = sadd.s32 1, %s16
    %s26 = scalar_select %p23, %s25, %s16
    %p27 = scmp.ge.s32.totalorder %s26, 2
    %s28 = scalar_select %p27, 0, %s26
    %s29 = ssub.s32 %s16, %s28
    %p30 = scmp.eq.s32.totalorder %s29, 0
    %s32 = sadd.s32 %s31, 1
    %s33 = scalar_select %p30, %s31, %s32
    %p36 = pneg %p30
    %p37 = scmp.eq.s32.totalorder %s9, 1
    %p38 = por %p36, %p37
    %p39 = scmp.ne.s32.totalorder %s31, %s34
    %p40 = scmp.eq.s32.totalorder %s9, 0
    %p41 = por %p39, %p40
    %p42 = scmp.ne.s32.totalorder %s31, %s34
    %p43 = scmp.eq.s32.totalorder %s14, 1
    %p44 = por %p42, %p43
    %p45 = scmp.ne.s32.totalorder %s34, %s35
    %p46 = scmp.eq.s32.totalorder %s14, 0
    %p47 = por %p45, %p46
    %p48 = scmp.ne.s32.totalorder %s34, %s35
    %p49 = scmp.eq.s32.totalorder %s15, 1
    %p50 = por %p48, %p49
    %p52 = scmp.ne.s32.totalorder %s35, %s51
    %p53 = scmp.eq.s32.totalorder %s15, 0
    %p54 = por %p52, %p53
    %s56 = sadd.s32 %s55, 1
    %p59 = scmp.eq.s32.totalorder %s9, 1
    %p60 = scmp.ne.s32.totalorder %s55, %s57
    %p61 = scmp.eq.s32.totalorder %s9, 0
    %p62 = por %p60, %p61
    %p63 = scmp.ne.s32.totalorder %s55, %s57
    %p64 = scmp.eq.s32.totalorder %s14, 1
    %p65 = por %p63, %p64
    %p66 = scmp.ne.s32.totalorder %s57, %s58
    %p67 = scmp.eq.s32.totalorder %s14, 0
    %p68 = por %p66, %p67
    %p69 = scmp.ne.s32.totalorder %s57, %s58
    %p70 = scmp.eq.s32.totalorder %s15, 1
    %p71 = por %p69, %p70
    %p73 = scmp.ne.s32.totalorder %s58, %s72
    %p74 = scmp.eq.s32.totalorder %s15, 0
    %p75 = por %p73, %p74
    %s76 = sadd.s32 %s16, %s17
    %s77 = sadd.s32 %s28, %s24
    %s78 = ssub.s32 %s76, %s77
    %p79 = scmp.eq.s32.totalorder %s78, 0
    %s81 = sadd.s32 %s80, 1
    %s82 = scalar_select %p79, %s80, %s81
    %p85 = pneg %p79
    %p86 = scmp.eq.s32.totalorder %s9, 1
    %p87 = por %p85, %p86
    %p88 = scmp.ne.s32.totalorder %s80, %s83
    %p89 = scmp.eq.s32.totalorder %s9, 0
    %p90 = por %p88, %p89
    %p91 = scmp.ne.s32.totalorder %s80, %s83
    %p92 = scmp.eq.s32.totalorder %s14, 1
    %p93 = por %p91, %p92
    %p94 = scmp.ne.s32.totalorder %s83, %s84
    %p95 = scmp.eq.s32.totalorder %s14, 0
    %p96 = por %p94, %p95
    %p97 = scmp.ne.s32.totalorder %s83, %s84
    %p98 = scmp.eq.s32.totalorder %s15, 1
    %p99 = por %p97, %p98
    %p101 = scmp.ne.s32.totalorder %s84, %s100
    %p102 = scmp.eq.s32.totalorder %s15, 0
    %p103 = por %p101, %p102
    %s104 = ssub.s32 %s16, %s28
    %s105 = ssub.s32 %s17, %s24
    %s106 = sor.u32 %s104, %s105
    %p107 = scmp.eq.s32.totalorder %s106, 0
    %s109 = sadd.s32 %s108, 1
    %s110 = scalar_select %p107, %s108, %s109
    %p113 = pneg %p107
    %p114 = scmp.eq.s32.totalorder %s9, 1
    %p115 = por %p113, %p114
    %p116 = scmp.ne.s32.totalorder %s108, %s111
    %p117 = scmp.eq.s32.totalorder %s9, 0
    %p118 = por %p116, %p117
    %p119 = scmp.ne.s32.totalorder %s108, %s111
    %p120 = scmp.eq.s32.totalorder %s14, 1
    %p121 = por %p119, %p120
    %p122 = scmp.ne.s32.totalorder %s111, %s112
    %p123 = scmp.eq.s32.totalorder %s14, 0
    %p124 = por %p122, %p123
    %p125 = scmp.ne.s32.totalorder %s111, %s112
    %p126 = scmp.eq.s32.totalorder %s15, 1
    %p127 = por %p125, %p126
    %p129 = scmp.ne.s32.totalorder %s112, %s128
    %p130 = scmp.eq.s32.totalorder %s15, 0
    %p131 = por %p129, %p130
    %p132 = scmp.le.s32.totalorder 1, %s9
    %p133 = scmp.lt.s32.totalorder %s9, 3
    %p134 = pnand %p132, %p133
    %p135 = pneg %p134
    // Predicated region
    $region9: #{tpu_custom_call.1} parent=5 // pred_check
      _
    $region10: #{tpu_custom_call.1} parent=5 // pred_check_branch
      %137 = sbr.rel (%p134) target = $region12
    $region11: #{tpu_custom_call.1} parent=5 // pred_region
      %s138 = ssub.s32 %s9, 1
      // Predicated region
      $region13: #{tpu_custom_call.1} parent=11 // pred_check
        %p139 = pneg %p68
      $region14: #{tpu_custom_call.1} parent=11 // pred_check_branch
        %141 = sbr.rel (%p139) target = $region16
      $region15: #{tpu_custom_call.1} parent=11 // pred_region
        _
      $region16: #{tpu_custom_call.1} parent=11 // pred_fallthru
        _
    $region12: #{tpu_custom_call.1} parent=5 // pred_fallthru
      _
    %p142 = scmp.lt.s32.totalorder %s9, 2
    // Predicated region
    $region17: #{tpu_custom_call.1} parent=5 // pred_check
      %p143 = pneg %p142
    $region18: #{tpu_custom_call.1} parent=5 // pred_check_branch
      %145 = sbr.rel (%p143) target = $region20
    $region19: #{tpu_custom_call.1} parent=5 // pred_region
      // Predicated region
      $region21: #{tpu_custom_call.1} parent=19 // pred_check
        %p146 = pneg %p41
      $region22: #{tpu_custom_call.1} parent=19 // pred_check_branch
        %148 = sbr.rel (%p146) target = $region24
      $region23: #{tpu_custom_call.1} parent=19 // pred_region
        %p149 = scmp.lt.s32.totalorder %s16, 1
        %s150 = scalar_select %p149, %s16, 1
        %s151 = smul.addr %s150, 4
        %s152 = scalar_lea.vmem %s0, %s151
      $region24: #{tpu_custom_call.1} parent=19 // pred_fallthru
        _
      // Predicated region
      $region25: #{tpu_custom_call.1} parent=19 // pred_check
        %p153 = pneg %p90
      $region26: #{tpu_custom_call.1} parent=19 // pred_check_branch
        %155 = sbr.rel (%p153) target = $region28
      $region27: #{tpu_custom_call.1} parent=19 // pred_region
        %s156 = sadd.s32 %s16, %s17
        %p157 = scmp.lt.s32.totalorder %s156, 1
        %s158 = scalar_select %p157, %s156, 1
        %s159 = smul.addr %s158, 54
        %s160 = smul.addr %s159, 8
        %s161 = scalar_lea.vmem %s2, %s160
        %s162 = sadd.s32 %s16, %s17
      $region28: #{tpu_custom_call.1} parent=19 // pred_fallthru
        _
    $region20: #{tpu_custom_call.1} parent=5 // pred_fallthru
      _
    %p163 = scmp.le.s32.totalorder 1, %s9
    %p164 = scmp.lt.s32.totalorder %s9, 3
    %p165 = pnand %p163, %p164
    %p166 = pneg %p165
    // Predicated region
    $region29: #{tpu_custom_call.1} parent=5 // pred_check
      _
    $region30: #{tpu_custom_call.1} parent=5 // pred_check_branch
      %168 = sbr.rel (%p165) target = $region32
    $region31: #{tpu_custom_call.1} parent=5 // pred_region
      %s169 = ssub.s32 %s9, 1
      %p170 = scmp.lt.s32.totalorder %s18, 1
      %s171 = scalar_select %p170, %s18, 1
      %s172 = smul.addr %s171, 4
      %s173 = scalar_lea.vmem %s0, %s172
      %p174 = pneg %p47
      %p175 = pneg %p44
      %p176 = pneg %p68
      %p177 = pneg %p65
      %s178 = sadd.s32 %s18, %s19
      %p179 = scmp.lt.s32.totalorder %s178, 1
      %s180 = scalar_select %p179, %s178, 1
      %s181 = smul.addr %s180, 54
      %s182 = smul.addr %s181, 8
      %s183 = scalar_lea.vmem %s2, %s182
      %p184 = pneg %p96
      %p185 = pneg %p93
      %p186 = pneg %p124
      %p187 = pneg %p121
      %s188 = smul.u32 32, %s19
      %p189 = scmp.lt.s32.totalorder %s18, 1
      %s190 = scalar_select %p189, %s18, 1
      %p191 = scmp.lt.s32.totalorder %s188, 31
      %s192 = scalar_select %p191, %s188, 31
      %s193 = smul.addr %s190, 32
      %s194 = sadd.s32 %s192, %s193
      %s195 = smul.addr %s194, 8
      %s196 = scalar_lea.vmem %s3, %s195
      %p197 = scmp.lt.s32.totalorder %s18, 1
      %s198 = scalar_select %p197, %s18, 1
      %s199 = smul.addr %s198, 4
      %s200 = scalar_lea.vmem %s0, %s199
      %s201 = sadd.s32 %s18, %s19
      %p202 = scmp.lt.s32.totalorder %s201, 1
      %s203 = scalar_select %p202, %s201, 1
      %s204 = smul.addr %s203, 54
      %s205 = smul.addr %s204, 8
      %s206 = scalar_lea.vmem %s2, %s205
      %s207 = sadd.s32 %s18, %s19
      %s208 = smul.u32 32, %s19
      %p209 = scmp.lt.s32.totalorder %s18, 1
      %s210 = scalar_select %p209, %s18, 1
      %p211 = scmp.lt.s32.totalorder %s208, 31
      %s212 = scalar_select %p211, %s208, 31
      %s213 = smul.addr %s210, 32
      %s214 = sadd.s32 %s212, %s213
      %s215 = smul.addr %s214, 8
      %s216 = scalar_lea.vmem %s3, %s215
      %s217 = smul.u32 32, %s19
      %p218 = scmp.eq.s32.totalorder %s19, 0
      // Predicated region
      $region33: #{tpu_custom_call.1} parent=31 // pred_check
        %p219 = pneg %p218
      $region34: #{tpu_custom_call.1} parent=31 // pred_check_branch
        %221 = sbr.rel (%p219) target = $region36
      $region35: #{tpu_custom_call.1} parent=31 // pred_region
        %v222 = vld [vmem:[%s1] sm:$0xf]
        %v223 = vld [vmem:[%s1 + $0x4] sm:$0xf]
        %v224 = vld [vmem:[%s1 + $0x8] sm:$0xf]
        %v225 = vld [vmem:[%s1 + $0xc] sm:$0xf]
        %v226 = vld [vmem:[%s1 + $0x10] sm:$0xf]
        %v227 = vld [vmem:[%s1 + $0x14] sm:$0xf]
        %v228 = vld [vmem:[%s1 + $0x18] sm:$0xf]
        %v229 = vld [vmem:[%s1 + $0x1c] sm:$0xf]
        %v230 = vld [vmem:[%s1 + $0x20] sm:$0xf]
        %v231 = vld [vmem:[%s200] sm:$0xf]
        %233 = vset.pattern.permute.xlu0 0
        %234 = vperm.xlu0 %233, %v231
        %v235 = vpop.permute.xlu0 %234
        %v237 = vmul.f32 %v222, %v235
        %v238 = vmul.f32 %v223, %v235
        %v239 = vmul.f32 %v224, %v235
        %v240 = vmul.f32 %v225, %v235
        %v241 = vmul.f32 %v226, %v235
        %v242 = vmul.f32 %v227, %v235
        %v243 = vmul.f32 %v228, %v235
        %v244 = vmul.f32 %v229, %v235
        %v245 = vmul.f32 %v230, %v235
        %v246 = vmul.f32 %v237, %v237
        %v247 = vmul.f32 %v238, %v238
        %v248 = vmul.f32 %v239, %v239
        %v249 = vmul.f32 %v240, %v240
        %v250 = vmul.f32 %v241, %v241
        %v251 = vmul.f32 %v242, %v242
        %v252 = vmul.f32 %v243, %v243
        %v253 = vmul.f32 %v244, %v244
        %v254 = vmul.f32 %v245, %v245
        %vm255 = vcmask 60416
        %v256 = vsel %vm255, %v246, 0.0
        %v257 = vsel %vm255, %v247, 0.0
        %v258 = vadd.f32 %v256, %v257
        %v259 = vsel %vm255, %v248, 0.0
        %v260 = vadd.f32 %v258, %v259
        %v261 = vsel %vm255, %v249, 0.0
        %v262 = vadd.f32 %v260, %v261
        %v263 = vsel %vm255, %v250, 0.0
        %v264 = vadd.f32 %v262, %v263
        %v265 = vsel %vm255, %v251, 0.0
        %v266 = vadd.f32 %v264, %v265
        %v267 = vsel %vm255, %v252, 0.0
        %v268 = vadd.f32 %v266, %v267
        %v269 = vsel %vm255, %v253, 0.0
        %v270 = vadd.f32 %v268, %v269
        %v271 = vsel %vm255, %v254, 0.0
        %v272 = vadd.f32 %v270, %v271
        %v273 = vrot.slane %v272, 4
        %v274 = vadd.f32 %v272, %v273
        %v275 = vrot.slane %v274, 2
        %v276 = vadd.f32 %v274, %v275
        %v277 = vrot.slane %v276, 1
        %v278 = vadd.f32 %v276, %v277
        %v279 = vadd.f32 %v278, 1e-08
        %v280 = vrsqrt.pop %v279
        %v281 = vmul.f32 %v237, %v280
        %v282 = vmul.f32 %v238, %v280
        %v283 = vmul.f32 %v239, %v280
        %v284 = vmul.f32 %v240, %v280
        %v285 = vmul.f32 %v241, %v280
        %v286 = vmul.f32 %v242, %v280
        %v287 = vmul.f32 %v243, %v280
        %v288 = vmul.f32 %v244, %v280
        %v289 = vmul.f32 %v245, %v280
        %290 = vst.msk [vmem:[#allocation2] sm:$0xf] %vm255, %v281
        %291 = vst.msk [vmem:[#allocation2 + $0x4] sm:$0xf] %vm255, %v282
        %292 = vst.msk [vmem:[#allocation2 + $0x8] sm:$0xf] %vm255, %v283
        %293 = vst.msk [vmem:[#allocation2 + $0xc] sm:$0xf] %vm255, %v284
        %294 = vst.msk [vmem:[#allocation2 + $0x10] sm:$0xf] %vm255, %v285
        %295 = vst.msk [vmem:[#allocation2 + $0x14] sm:$0xf] %vm255, %v286
        %296 = vst.msk [vmem:[#allocation2 + $0x18] sm:$0xf] %vm255, %v287
        %297 = vst.msk [vmem:[#allocation2 + $0x1c] sm:$0xf] %vm255, %v288
        %298 = vst.msk [vmem:[#allocation2 + $0x20] sm:$0xf] %vm255, %v289
      $region36: #{tpu_custom_call.1} parent=31 // pred_fallthru
        _
      %v299 = vld [vmem:[%s206] sm:$0xff]
      %v300 = vld [vmem:[%s206 + $0x8] sm:$0xff]
      %v301 = vld [vmem:[%s206 + $0x10] sm:$0x3]
      %v302 = vld [vmem:[%s206 + $0x18] sm:$0xff]
      %v303 = vld [vmem:[%s206 + $0x20] sm:$0xff]
      %v304 = vld [vmem:[%s206 + $0x28] sm:$0x3]
      %v305 = vld [vmem:[%s206 + $0x30] sm:$0xff]
      %v306 = vld [vmem:[%s206 + $0x38] sm:$0xff]
      %v307 = vld [vmem:[%s206 + $0x40] sm:$0x3]
      %v308 = vld [vmem:[%s206 + $0x48] sm:$0xff]
      %v309 = vld [vmem:[%s206 + $0x50] sm:$0xff]
      %v310 = vld [vmem:[%s206 + $0x58] sm:$0x3]
      %v311 = vld [vmem:[%s206 + $0x60] sm:$0xff]
      %v312 = vld [vmem:[%s206 + $0x68] sm:$0xff]
      %v313 = vld [vmem:[%s206 + $0x70] sm:$0x3]
      %v314 = vld [vmem:[%s206 + $0x78] sm:$0xff]
      %v315 = vld [vmem:[%s206 + $0x80] sm:$0xff]
      %v316 = vld [vmem:[%s206 + $0x88] sm:$0x3]
      %v317 = vld [vmem:[%s206 + $0x90] sm:$0xff]
      %v318 = vld [vmem:[%s206 + $0x98] sm:$0xff]
      %v319 = vld [vmem:[%s206 + $0xa0] sm:$0x3]
      %v320 = vld [vmem:[%s206 + $0xa8] sm:$0xff]
      %v321 = vld [vmem:[%s206 + $0xb0] sm:$0xff]
      %v322 = vld [vmem:[%s206 + $0xb8] sm:$0x3]
      %v323 = vld [vmem:[%s206 + $0xc0] sm:$0xff]
      %v324 = vld [vmem:[%s206 + $0xc8] sm:$0xff]
      %v325 = vld [vmem:[%s206 + $0xd0] sm:$0x3]
      %v326 = vld [vmem:[%s206 + $0xd8] sm:$0xff]
      %v327 = vld [vmem:[%s206 + $0xe0] sm:$0xff]
      %v328 = vld [vmem:[%s206 + $0xe8] sm:$0x3]
      %v329 = vld [vmem:[%s206 + $0xf0] sm:$0xff]
      %v330 = vld [vmem:[%s206 + $0xf8] sm:$0xff]
      %v331 = vld [vmem:[%s206 + $0x100] sm:$0x3]
      %v332 = vld [vmem:[%s206 + $0x108] sm:$0xff]
      %v333 = vld [vmem:[%s206 + $0x110] sm:$0xff]
      %v334 = vld [vmem:[%s206 + $0x118] sm:$0x3]
      %v335 = vld [vmem:[%s206 + $0x120] sm:$0xff]
      %v336 = vld [vmem:[%s206 + $0x128] sm:$0xff]
      %v337 = vld [vmem:[%s206 + $0x130] sm:$0x3]
      %v338 = vld [vmem:[%s206 + $0x138] sm:$0xff]
      %v339 = vld [vmem:[%s206 + $0x140] sm:$0xff]
      %v340 = vld [vmem:[%s206 + $0x148] sm:$0x3]
      %v341 = vld [vmem:[%s206 + $0x150] sm:$0xff]
      %v342 = vld [vmem:[%s206 + $0x158] sm:$0xff]
      %v343 = vld [vmem:[%s206 + $0x160] sm:$0x3]
      %v344 = vld [vmem:[%s206 + $0x168] sm:$0xff]
      %v345 = vld [vmem:[%s206 + $0x170] sm:$0xff]
      %v346 = vld [vmem:[%s206 + $0x178] sm:$0x3]
      %v347 = vld [vmem:[%s206 + $0x180] sm:$0xff]
      %v348 = vld [vmem:[%s206 + $0x188] sm:$0xff]
      %v349 = vld [vmem:[%s206 + $0x190] sm:$0x3]
      %v350 = vld [vmem:[%s206 + $0x198] sm:$0xff]
      %v351 = vld [vmem:[%s206 + $0x1a0] sm:$0xff]
      %v352 = vld [vmem:[%s206 + $0x1a8] sm:$0x3]
      %v353 = vld [vmem:[#allocation2] sm:$0xf]
      %vm402 = vcmask 1046528
      %v403 = vrot.slane %v299, 1
      %v404 = vrot.slane %v300, 1
      %v405 = vsel %vm402, %v403, %v404
      %v406 = vrot.slane %v301, 1
      %v407 = vsel %vm402, %v404, %v406
      %v408 = vrot.slane %v302, 1
      %v409 = vrot.slane %v303, 1
      %v410 = vsel %vm402, %v408, %v409
      %v411 = vrot.slane %v304, 1
      %v412 = vsel %vm402, %v409, %v411
      %v413 = vrot.slane %v305, 1
      %v414 = vrot.slane %v306, 1
      %v415 = vsel %vm402, %v413, %v414
      %v416 = vrot.slane %v307, 1
      %v417 = vsel %vm402, %v414, %v416
      %v418 = vrot.slane %v308, 1
      %v419 = vrot.slane %v309, 1
      %v420 = vsel %vm402, %v418, %v419
      %v421 = vrot.slane %v310, 1
      %v422 = vsel %vm402, %v419, %v421
      %v423 = vrot.slane %v311, 1
      %v424 = vrot.slane %v312, 1
      %v425 = vsel %vm402, %v423, %v424
      %v426 = vrot.slane %v313, 1
      %v427 = vsel %vm402, %v424, %v426
      %v428 = vrot.slane %v314, 1
      %v429 = vrot.slane %v315, 1
      %v430 = vsel %vm402, %v428, %v429
      %v431 = vrot.slane %v316, 1
      %v432 = vsel %vm402, %v429, %v431
      %v433 = vrot.slane %v317, 1
      %v434 = vrot.slane %v318, 1
      %v435 = vsel %vm402, %v433, %v434
      %v436 = vrot.slane %v319, 1
      %v437 = vsel %vm402, %v434, %v436
      %v438 = vrot.slane %v320, 1
      %v439 = vrot.slane %v321, 1
      %v440 = vsel %vm402, %v438, %v439
      %v441 = vrot.slane %v322, 1
      %v442 = vsel %vm402, %v439, %v441
      %v443 = vrot.slane %v323, 1
      %v444 = vrot.slane %v324, 1
      %v445 = vsel %vm402, %v443, %v444
      %v446 = vrot.slane %v325, 1
      %v447 = vsel %vm402, %v444, %v446
      %v448 = vrot.slane %v326, 1
      %v449 = vrot.slane %v327, 1
      %v450 = vsel %vm402, %v448, %v449
      %v451 = vrot.slane %v328, 1
      %v452 = vsel %vm402, %v449, %v451
      %v453 = vrot.slane %v329, 1
      %v454 = vrot.slane %v330, 1
      %v455 = vsel %vm402, %v453, %v454
      %v456 = vrot.slane %v331, 1
      %v457 = vsel %vm402, %v454, %v456
      %v458 = vrot.slane %v332, 1
      %v459 = vrot.slane %v333, 1
      %v460 = vsel %vm402, %v458, %v459
      %v461 = vrot.slane %v334, 1
      %v462 = vsel %vm402, %v459, %v461
      %v463 = vrot.slane %v335, 1
      %v464 = vrot.slane %v336, 1
      %v465 = vsel %vm402, %v463, %v464
      %v466 = vrot.slane %v337, 1
      %v467 = vsel %vm402, %v464, %v466
      %v468 = vrot.slane %v338, 1
      %v469 = vrot.slane %v339, 1
      %v470 = vsel %vm402, %v468, %v469
      %v471 = vrot.slane %v340, 1
      %v472 = vsel %vm402, %v469, %v471
      %v473 = vrot.slane %v341, 1
      %v474 = vrot.slane %v342, 1
      %v475 = vsel %vm402, %v473, %v474
      %v476 = vrot.slane %v343, 1
      %v477 = vsel %vm402, %v474, %v476
      %v478 = vrot.slane %v344, 1
      %v479 = vrot.slane %v345, 1
      %v480 = vsel %vm402, %v478, %v479
      %v481 = vrot.slane %v346, 1
      %v482 = vsel %vm402, %v479, %v481
      %s483 = scalar_lea.vmem [#allocation2], 4
      %v484 = vld [vmem:[%s483] sm:$0xf]
      %vm485 = vcmask 31744
      %v486 = vsel %vm485, %v405, 0
      %v488 = vsel %vm485, %v407, 0
      %v490 = vsel %vm485, %v410, 0
      %v492 = vsel %vm485, %v412, 0
      %v494 = vsel %vm485, %v415, 0
      %v496 = vsel %vm485, %v417, 0
      %v498 = vsel %vm485, %v420, 0
      %v500 = vsel %vm485, %v422, 0
      %v502 = vsel %vm485, %v425, 0
      %v504 = vsel %vm485, %v427, 0
      %v506 = vsel %vm485, %v430, 0
      %v508 = vsel %vm485, %v432, 0
      %v510 = vsel %vm485, %v435, 0
      %v512 = vsel %vm485, %v437, 0
      %v514 = vsel %vm485, %v440, 0
      %v516 = vsel %vm485, %v442, 0
      %v518 = vsel %vm485, %v445, 0
      %v520 = vsel %vm485, %v447, 0
      %v522 = vsel %vm485, %v450, 0
      %v524 = vsel %vm485, %v452, 0
      %v526 = vsel %vm485, %v455, 0
      %v528 = vsel %vm485, %v457, 0
      %v530 = vsel %vm485, %v460, 0
      %v532 = vsel %vm485, %v462, 0
      %v534 = vsel %vm485, %v465, 0
      %v536 = vsel %vm485, %v467, 0
      %v538 = vsel %vm485, %v470, 0
      %v540 = vsel %vm485, %v472, 0
      %v542 = vsel %vm485, %v475, 0
      %v544 = vsel %vm485, %v477, 0
      %v546 = vsel %vm485, %v480, 0
      %v548 = vsel %vm485, %v482, 0
      %vm550 = vcmask 1043456
      %v552 = vsel %vm550, %v484, 0
      %554 = vmatprep.subr.mxu0 0.0
      %555 = vmatpush1.msra.mxu0 %v552
      %556 = vmatprep.subr.mxu0 0.0
      %557 = vmatpush1.msra.mxu0 0.0
      %558 = vmatprep.subr.mxu0 0.0
      %559 = vmatpush1.msra.mxu0 0.0
      %560 = vmatprep.subr.mxu0 0.0
      %561 = vmatpush1.msra.mxu0 0.0
      %562 = vmatprep.subr.mxu0 0.0
      %563 = vmatpush1.msra.mxu0 0.0
      %564 = vmatprep.subr.mxu0 0.0
      %565 = vmatpush1.msra.mxu0 0.0
      %566 = vmatprep.subr.mxu0 0.0
      %567 = vmatpush1.msra.mxu0 0.0
      %568 = vmatprep.subr.mxu0 0.0
      %569 = vmatpush1.msra.mxu0 0.0
      %570 = vmatprep.subr.mxu0 0.0
      %571 = vmatpush1.msra.mxu0 0.0
      %572 = vmatprep.subr.mxu0 0.0
      %573 = vmatpush1.msra.mxu0 0.0
      %574 = vmatprep.subr.mxu0 0.0
      %575 = vmatpush1.msra.mxu0 0.0
      %576 = vmatprep.subr.mxu0 0.0
      %577 = vmatpush1.msra.mxu0 0.0
      %578 = vmatprep.subr.mxu0 0.0
      %579 = vmatpush1.msra.mxu0 0.0
      %580 = vmatprep.subr.mxu0 0.0
      %581 = vmatpush1.msra.mxu0 0.0
      %582 = vmatprep.subr.mxu0 0.0
      %583 = vmatpush1.msra.mxu0 0.0
      %584 = vmatprep.subr.mxu0 0.0
      %585 = vmatpush1.msra.mxu0 0.0
      %586 = vmatprep.subr.mxu0 0.0
      %587 = vmatpush1.msra.mxu0 0.0
      %588 = vmatprep.subr.mxu0 0.0
      %589 = vmatpush1.msra.mxu0 0.0
      %590 = vmatprep.subr.mxu0 0.0
      %591 = vmatpush1.msra.mxu0 0.0
      %592 = vmatprep.subr.mxu0 0.0
      %593 = vmatpush1.msra.mxu0 0.0
      %594 = vmatprep.subr.mxu0 0.0
      %595 = vmatpush1.msra.mxu0 0.0
      %596 = vmatprep.subr.mxu0 0.0
      %597 = vmatpush1.msra.mxu0 0.0
      %598 = vmatprep.subr.mxu0 0.0
      %599 = vmatpush1.msra.mxu0 0.0
      %600 = vmatprep.subr.mxu0 0.0
      %601 = vmatpush1.msra.mxu0 0.0
      %602 = vmatprep.subr.mxu0 0.0
      %603 = vmatpush1.msra.mxu0 0.0
      %604 = vmatprep.subr.mxu0 0.0
      %605 = vmatpush1.msra.mxu0 0.0
      %606 = vmatprep.subr.mxu0 0.0
      %607 = vmatpush1.msra.mxu0 0.0
      %608 = vmatprep.subr.mxu0 0.0
      %609 = vmatpush1.msra.mxu0 0.0
      %610 = vmatprep.subr.mxu0 0.0
      %611 = vmatpush1.msra.mxu0 0.0
      %612 = vmatprep.subr.mxu0 0.0
      %613 = vmatpush1.msra.mxu0 0.0
      %614 = vmatprep.subr.mxu0 0.0
      %615 = vmatpush1.msra.mxu0 0.0
      %616 = vmatprep.subr.mxu0 0.0
      %617 = vmatpush1.msra.mxu0 0.0
      %618 = vmatprep.mubr.f32.mxu0 0.0
      %619 = vmatmul.mubr.f32.gmra.mrb[0].mxu0 %v486
      %v620 = vpop.f32.mrb[0].mxu0
      %v621 = vadd.f32 0.0, %v620
      %v622 = vpop.f32.mrb[0].mxu0
      %623 = vmatprep.mubr.f32.mxu0 0.0
      %624 = vmatmul.mubr.f32.gmra.mrb[0].mxu0 %v488
      %v625 = vpop.f32.mrb[0].mxu0
      %v626 = vadd.f32 0.0, %v625
      %v627 = vpop.f32.mrb[0].mxu0
      %628 = vmatprep.mubr.f32.mxu0 0.0
      %629 = vmatmul.mubr.f32.gmra.mrb[0].mxu0 %v490
      %v630 = vpop.f32.mrb[0].mxu0
      %v631 = vadd.f32 0.0, %v630
      %v632 = vpop.f32.mrb[0].mxu0
      %633 = vmatprep.mubr.f32.mxu0 0.0
      %634 = vmatmul.mubr.f32.gmra.mrb[0].mxu0 %v492
      %v635 = vpop.f32.mrb[0].mxu0
      %v636 = vadd.f32 0.0, %v635
      %v637 = vpop.f32.mrb[0].mxu0
      %638 = vmatprep.mubr.f32.mxu0 0.0
      %639 = vmatmul.mubr.f32.gmra.mrb[0].mxu0 %v494
      %v640 = vpop.f32.mrb[0].mxu0
      %v641 = vadd.f32 0.0, %v640
      %v642 = vpop.f32.mrb[0].mxu0
      %643 = vmatprep.mubr.f32.mxu0 0.0
      %644 = vmatmul.mubr.f32.gmra.mrb[0].mxu0 %v496
      %v645 = vpop.f32.mrb[0].mxu0
      %v646 = vadd.f32 0.0, %v645
      %v647 = vpop.f32.mrb[0].mxu0
      %648 = vmatprep.mubr.f32.mxu0 0.0
      %649 = vmatmul.mubr.f32.gmra.mrb[0].mxu0 %v498
      %v650 = vpop.f32.mrb[0].mxu0
      %v651 = vadd.f32 0.0, %v650
      %v652 = vpop.f32.mrb[0].mxu0
      %653 = vmatprep.mubr.f32.mxu0 0.0
      %654 = vmatmul.mubr.f32.gmra.mrb[0].mxu0 %v500
      %v655 = vpop.f32.mrb[0].mxu0
      %v656 = vadd.f32 0.0, %v655
      %v657 = vpop.f32.mrb[0].mxu0
      %658 = vmatprep.mubr.f32.mxu0 0.0
      %659 = vmatmul.mubr.f32.gmra.mrb[0].mxu0 %v502
      %v660 = vpop.f32.mrb[0].mxu0
      %v661 = vadd.f32 0.0, %v660
      %v662 = vpop.f32.mrb[0].mxu0
      %663 = vmatprep.mubr.f32.mxu0 0.0
      %664 = vmatmul.mubr.f32.gmra.mrb[0].mxu0 %v504
      %v665 = vpop.f32.mrb[0].mxu0
      %v666 = vadd.f32 0.0, %v665
      %v667 = vpop.f32.mrb[0].mxu0
      %668 = vmatprep.mubr.f32.mxu0 0.0
      %669 = vmatmul.mubr.f32.gmra.mrb[0].mxu0 %v506
      %v670 = vpop.f32.mrb[0].mxu0
      %v671 = vadd.f32 0.0, %v670
      %v672 = vpop.f32.mrb[0].mxu0
      %673 = vmatprep.mubr.f32.mxu0 0.0
      %674 = vmatmul.mubr.f32.gmra.mrb[0].mxu0 %v508
      %v675 = vpop.f32.mrb[0].mxu0
      %v676 = vadd.f32 0.0, %v675
      %v677 = vpop.f32.mrb[0].mxu0
      %678 = vmatprep.mubr.f32.mxu0 0.0
      %679 = vmatmul.mubr.f32.gmra.mrb[0].mxu0 %v510
      %v680 = vpop.f32.mrb[0].mxu0
      %v681 = vadd.f32 0.0, %v680
      %v682 = vpop.f32.mrb[0].mxu0
      %683 = vmatprep.mubr.f32.mxu0 0.0
      %684 = vmatmul.mubr.f32.gmra.mrb[0].mxu0 %v512
      %v685 = vpop.f32.mrb[0].mxu0
      %v686 = vadd.f32 0.0, %v685
      %v687 = vpop.f32.mrb[0].mxu0
      %688 = vmatprep.mubr.f32.mxu0 0.0
      %689 = vmatmul.mubr.f32.gmra.mrb[0].mxu0 %v514
      %v690 = vpop.f32.mrb[0].mxu0
      %v691 = vadd.f32 0.0, %v690
      %v692 = vpop.f32.mrb[0].mxu0
      %693 = vmatprep.mubr.f32.mxu0 0.0
      %694 = vmatmul.mubr.f32.gmra.mrb[0].mxu0 %v516
      %v695 = vpop.f32.mrb[0].mxu0
      %v696 = vadd.f32 0.0, %v695
      %v697 = vpop.f32.mrb[0].mxu0
      %698 = vmatprep.mubr.f32.mxu0 0.0
      %699 = vmatmul.mubr.f32.gmra.mrb[0].mxu0 %v518
      %v700 = vpop.f32.mrb[0].mxu0
      %v701 = vadd.f32 0.0, %v700
      %v702 = vpop.f32.mrb[0].mxu0
      %703 = vmatprep.mubr.f32.mxu0 0.0
      %704 = vmatmul.mubr.f32.gmra.mrb[0].mxu0 %v520
      %v705 = vpop.f32.mrb[0].mxu0
      %v706 = vadd.f32 0.0, %v705
      %v707 = vpop.f32.mrb[0].mxu0
      %708 = vmatprep.mubr.f32.mxu0 0.0
      %709 = vmatmul.mubr.f32.gmra.mrb[0].mxu0 %v522
      %v710 = vpop.f32.mrb[0].mxu0
      %v711 = vadd.f32 0.0, %v710
      %v712 = vpop.f32.mrb[0].mxu0
      %713 = vmatprep.mubr.f32.mxu0 0.0
      %714 = vmatmul.mubr.f32.gmra.mrb[0].mxu0 %v524
      %v715 = vpop.f32.mrb[0].mxu0
      %v716 = vadd.f32 0.0, %v715
      %v717 = vpop.f32.mrb[0].mxu0
      %718 = vmatprep.mubr.f32.mxu0 0.0
      %719 = vmatmul.mubr.f32.gmra.mrb[0].mxu0 %v526
      %v720 = vpop.f32.mrb[0].mxu0
      %v721 = vadd.f32 0.0, %v720
      %v722 = vpop.f32.mrb[0].mxu0
      %723 = vmatprep.mubr.f32.mxu0 0.0
      %724 = vmatmul.mubr.f32.gmra.mrb[0].mxu0 %v528
      %v725 = vpop.f32.mrb[0].mxu0
      %v726 = vadd.f32 0.0, %v725
      %v727 = vpop.f32.mrb[0].mxu0
      %728 = vmatprep.mubr.f32.mxu0 0.0
      %729 = vmatmul.mubr.f32.gmra.mrb[0].mxu0 %v530
      %v730 = vpop.f32.mrb[0].mxu0
      %v731 = vadd.f32 0.0, %v730
      %v732 = vpop.f32.mrb[0].mxu0
      %733 = vmatprep.mubr.f32.mxu0 0.0
      %734 = vmatmul.mubr.f32.gmra.mrb[0].mxu0 %v532
      %v735 = vpop.f32.mrb[0].mxu0
      %v736 = vadd.f32 0.0, %v735
      %v737 = vpop.f32.mrb[0].mxu0
      %738 = vmatprep.mubr.f32.mxu0 0.0
      %739 = vmatmul.mubr.f32.gmra.mrb[0].mxu0 %v534
      %v740 = vpop.f32.mrb[0].mxu0
      %v741 = vadd.f32 0.0, %v740
      %v742 = vpop.f32.mrb[0].mxu0
      %743 = vmatprep.mubr.f32.mxu0 0.0
      %744 = vmatmul.mubr.f32.gmra.mrb[0].mxu0 %v536
      %v745 = vpop.f32.mrb[0].mxu0
      %v746 = vadd.f32 0.0, %v745
      %v747 = vpop.f32.mrb[0].mxu0
      %748 = vmatprep.mubr.f32.mxu0 0.0
      %749 = vmatmul.mubr.f32.gmra.mrb[0].mxu0 %v538
      %v750 = vpop.f32.mrb[0].mxu0
      %v751 = vadd.f32 0.0, %v750
      %v752 = vpop.f32.mrb[0].mxu0
      %753 = vmatprep.mubr.f32.mxu0 0.0
      %754 = vmatmul.mubr.f32.gmra.mrb[0].mxu0 %v540
      %v755 = vpop.f32.mrb[0].mxu0
      %v756 = vadd.f32 0.0, %v755
      %v757 = vpop.f32.mrb[0].mxu0
      %758 = vmatprep.mubr.f32.mxu0 0.0
      %759 = vmatmul.mubr.f32.gmra.mrb[0].mxu0 %v542
      %v760 = vpop.f32.mrb[0].mxu0
      %v761 = vadd.f32 0.0, %v760
      %v762 = vpop.f32.mrb[0].mxu0
      %763 = vmatprep.mubr.f32.mxu0 0.0
      %764 = vmatmul.mubr.f32.gmra.mrb[0].mxu0 %v544
      %v765 = vpop.f32.mrb[0].mxu0
      %v766 = vadd.f32 0.0, %v765
      %v767 = vpop.f32.mrb[0].mxu0
      %768 = vmatprep.mubr.f32.mxu0 0.0
      %769 = vmatmul.mubr.f32.gmra.mrb[0].mxu0 %v546
      %v770 = vpop.f32.mrb[0].mxu0
      %v771 = vadd.f32 0.0, %v770
      %v772 = vpop.f32.mrb[0].mxu0
      %773 = vmatprep.mubr.f32.mxu0 0.0
      %774 = vmatmul.mubr.f32.gmra.mrb[0].mxu0 %v548
      %v775 = vpop.f32.mrb[0].mxu0
      %v776 = vadd.f32 0.0, %v775
      %v777 = vpop.f32.mrb[0].mxu0
      %778 = vdwg.mxu0
      %v779 = vsel %vm485, %v299, 0
      %v781 = vsel %vm485, %v300, 0
      %v783 = vsel %vm485, %v302, 0
      %v785 = vsel %vm485, %v303, 0
      %v787 = vsel %vm485, %v305, 0
      %v789 = vsel %vm485, %v306, 0
      %v791 = vsel %vm485, %v308, 0
      %v793 = vsel %vm485, %v309, 0
      %v795 = vsel %vm485, %v311, 0
      %v797 = vsel %vm485, %v312, 0
      %v799 = vsel %vm485, %v314, 0
      %v801 = vsel %vm485, %v315, 0
      %v803 = vsel %vm485, %v317, 0
      %v805 = vsel %vm485, %v318, 0
      %v807 = vsel %vm485, %v320, 0
      %v809 = vsel %vm485, %v321, 0
      %v811 = vsel %vm485, %v323, 0
      %v813 = vsel %vm485, %v324, 0
      %v815 = vsel %vm485, %v326, 0
      %v817 = vsel %vm485, %v327, 0
      %v819 = vsel %vm485, %v329, 0
      %v821 = vsel %vm485, %v330, 0
      %v823 = vsel %vm485, %v332, 0
      %v825 = vsel %vm485, %v333, 0
      %v827 = vsel %vm485, %v335, 0
      %v829 = vsel %vm485, %v336, 0
      %v831 = vsel %vm485, %v338, 0
      %v833 = vsel %vm485, %v339, 0
      %v835 = vsel %vm485, %v341, 0
      %v837 = vsel %vm485, %v342, 0
      %v839 = vsel %vm485, %v344, 0
      %v841 = vsel %vm485, %v345, 0
      %v844 = vsel %vm550, %v353, 0
      %846 = vmatprep.subr.mxu0 0.0
      %847 = vmatpush1.msra.mxu0 %v844
      %848 = vmatprep.subr.mxu0 0.0
      %849 = vmatpush1.msra.mxu0 0.0
      %850 = vmatprep.subr.mxu0 0.0
      %851 = vmatpush1.msra.mxu0 0.0
      %852 = vmatprep.subr.mxu0 0.0
      %853 = vmatpush1.msra.mxu0 0.0
      %854 = vmatprep.subr.mxu0 0.0
      %855 = vmatpush1.msra.mxu0 0.0
      %856 = vmatprep.subr.mxu0 0.0
      %857 = vmatpush1.msra.mxu0 0.0
      %858 = vmatprep.subr.mxu0 0.0
      %859 = vmatpush1.msra.mxu0 0.0
      %860 = vmatprep.subr.mxu0 0.0
      %861 = vmatpush1.msra.mxu0 0.0
      %862 = vmatprep.subr.mxu0 0.0
      %863 = vmatpush1.msra.mxu0 0.0
      %864 = vmatprep.subr.mxu0 0.0
      %865 = vmatpush1.msra.mxu0 0.0
      %866 = vmatprep.subr.mxu0 0.0
      %867 = vmatpush1.msra.mxu0 0.0
      %868 = vmatprep.subr.mxu0 0.0
      %869 = vmatpush1.msra.mxu0 0.0
      %870 = vmatprep.subr.mxu0 0.0
      %871 = vmatpush1.msra.mxu0 0.0
      %872 = vmatprep.subr.mxu0 0.0
      %873 = vmatpush1.msra.mxu0 0.0
      %874 = vmatprep.subr.mxu0 0.0
      %875 = vmatpush1.msra.mxu0 0.0
      %876 = vmatprep.subr.mxu0 0.0
      %877 = vmatpush1.msra.mxu0 0.0
      %878 = vmatprep.subr.mxu0 0.0
      %879 = vmatpush1.msra.mxu0 0.0
      %880 = vmatprep.subr.mxu0 0.0
      %881 = vmatpush1.msra.mxu0 0.0
      %882 = vmatprep.subr.mxu0 0.0
      %883 = vmatpush1.msra.mxu0 0.0
      %884 = vmatprep.subr.mxu0 0.0
      %885 = vmatpush1.msra.mxu0 0.0
      %886 = vmatprep.subr.mxu0 0.0
      %887 = vmatpush1.msra.mxu0 0.0
      %888 = vmatprep.subr.mxu0 0.0
      %889 = vmatpush1.msra.mxu0 0.0
      %890 = vmatprep.subr.mxu0 0.0
      %891 = vmatpush1.msra.mxu0 0.0
      %892 = vmatprep.subr.mxu0 0.0
      %893 = vmatpush1.msra.mxu0 0.0
      %894 = vmatprep.subr.mxu0 0.0
      %895 = vmatpush1.msra.mxu0 0.0
      %896 = vmatprep.subr.mxu0 0.0
      %897 = vmatpush1.msra.mxu0 0.0
      %898 = vmatprep.subr.mxu0 0.0
      %899 = vmatpush1.msra.mxu0 0.0
      %900 = vmatprep.subr.mxu0 0.0
      %901 = vmatpush1.msra.mxu0 0.0
      %902 = vmatprep.subr.mxu0 0.0
      %903 = vmatpush1.msra.mxu0 0.0
      %904 = vmatprep.subr.mxu0 0.0
      %905 = vmatpush1.msra.mxu0 0.0
      %906 = vmatprep.subr.mxu0 0.0
      %907 = vmatpush1.msra.mxu0 0.0
      %908 = vmatprep.subr.mxu0 0.0
      %909 = vmatpush1.msra.mxu0 0.0
      %910 = vmatprep.mubr.f32.mxu0 0.0
      %911 = vmatmul.mubr.f32.gmra.mrb[0].mxu0 %v779
      %v912 = vpop.f32.mrb[0].mxu0
      %v913 = vadd.f32 %v621, %v912
      %v914 = vpop.f32.mrb[0].mxu0
      %915 = vmatprep.mubr.f32.mxu0 0.0
      %916 = vmatmul.mubr.f32.gmra.mrb[0].mxu0 %v781
      %v917 = vpop.f32.mrb[0].mxu0
      %v918 = vadd.f32 %v626, %v917
      %v919 = vpop.f32.mrb[0].mxu0
      %920 = vmatprep.mubr.f32.mxu0 0.0
      %921 = vmatmul.mubr.f32.gmra.mrb[0].mxu0 %v783
      %v922 = vpop.f32.mrb[0].mxu0
      %v923 = vadd.f32 %v631, %v922
      %v924 = vpop.f32.mrb[0].mxu0
      %925 = vmatprep.mubr.f32.mxu0 0.0
      %926 = vmatmul.mubr.f32.gmra.mrb[0].mxu0 %v785
      %v927 = vpop.f32.mrb[0].mxu0
      %v928 = vadd.f32 %v636, %v927
      %v929 = vpop.f32.mrb[0].mxu0
      %930 = vmatprep.mubr.f32.mxu0 0.0
      %931 = vmatmul.mubr.f32.gmra.mrb[0].mxu0 %v787
      %v932 = vpop.f32.mrb[0].mxu0
      %v933 = vadd.f32 %v641, %v932
      %v934 = vpop.f32.mrb[0].mxu0
      %935 = vmatprep.mubr.f32.mxu0 0.0
      %936 = vmatmul.mubr.f32.gmra.mrb[0].mxu0 %v789
      %v937 = vpop.f32.mrb[0].mxu0
      %v938 = vadd.f32 %v646, %v937
      %v939 = vpop.f32.mrb[0].mxu0
      %940 = vmatprep.mubr.f32.mxu0 0.0
      %941 = vmatmul.mubr.f32.gmra.mrb[0].mxu0 %v791
      %v942 = vpop.f32.mrb[0].mxu0
      %v943 = vadd.f32 %v651, %v942
      %v944 = vpop.f32.mrb[0].mxu0
      %945 = vmatprep.mubr.f32.mxu0 0.0
      %946 = vmatmul.mubr.f32.gmra.mrb[0].mxu0 %v793
      %v947 = vpop.f32.mrb[0].mxu0
      %v948 = vadd.f32 %v656, %v947
      %v949 = vpop.f32.mrb[0].mxu0
      %950 = vmatprep.mubr.f32.mxu0 0.0
      %951 = vmatmul.mubr.f32.gmra.mrb[0].mxu0 %v795
      %v952 = vpop.f32.mrb[0].mxu0
      %v953 = vadd.f32 %v661, %v952
      %v954 = vpop.f32.mrb[0].mxu0
      %955 = vmatprep.mubr.f32.mxu0 0.0
      %956 = vmatmul.mubr.f32.gmra.mrb[0].mxu0 %v797
      %v957 = vpop.f32.mrb[0].mxu0
      %v958 = vadd.f32 %v666, %v957
      %v959 = vpop.f32.mrb[0].mxu0
      %960 = vmatprep.mubr.f32.mxu0 0.0
      %961 = vmatmul.mubr.f32.gmra.mrb[0].mxu0 %v799
      %v962 = vpop.f32.mrb[0].mxu0
      %v963 = vadd.f32 %v671, %v962
      %v964 = vpop.f32.mrb[0].mxu0
      %965 = vmatprep.mubr.f32.mxu0 0.0
      %966 = vmatmul.mubr.f32.gmra.mrb[0].mxu0 %v801
      %v967 = vpop.f32.mrb[0].mxu0
      %v968 = vadd.f32 %v676, %v967
      %v969 = vpop.f32.mrb[0].mxu0
      %970 = vmatprep.mubr.f32.mxu0 0.0
      %971 = vmatmul.mubr.f32.gmra.mrb[0].mxu0 %v803
      %v972 = vpop.f32.mrb[0].mxu0
      %v973 = vadd.f32 %v681, %v972
      %v974 = vpop.f32.mrb[0].mxu0
      %975 = vmatprep.mubr.f32.mxu0 0.0
      %976 = vmatmul.mubr.f32.gmra.mrb[0].mxu0 %v805
      %v977 = vpop.f32.mrb[0].mxu0
      %v978 = vadd.f32 %v686, %v977
      %v979 = vpop.f32.mrb[0].mxu0
      %980 = vmatprep.mubr.f32.mxu0 0.0
      %981 = vmatmul.mubr.f32.gmra.mrb[0].mxu0 %v807
      %v982 = vpop.f32.mrb[0].mxu0
      %v983 = vadd.f32 %v691, %v982
      %v984 = vpop.f32.mrb[0].mxu0
      %985 = vmatprep.mubr.f32.mxu0 0.0
      %986 = vmatmul.mubr.f32.gmra.mrb[0].mxu0 %v809
      %v987 = vpop.f32.mrb[0].mxu0
      %v988 = vadd.f32 %v696, %v987
      %v989 = vpop.f32.mrb[0].mxu0
      %990 = vmatprep.mubr.f32.mxu0 0.0
      %991 = vmatmul.mubr.f32.gmra.mrb[0].mxu0 %v811
      %v992 = vpop.f32.mrb[0].mxu0
      %v993 = vadd.f32 %v701, %v992
      %v994 = vpop.f32.mrb[0].mxu0
      %995 = vmatprep.mubr.f32.mxu0 0.0
      %996 = vmatmul.mubr.f32.gmra.mrb[0].mxu0 %v813
      %v997 = vpop.f32.mrb[0].mxu0
      %v998 = vadd.f32 %v706, %v997
      %v999 = vpop.f32.mrb[0].mxu0
      %1000 = vmatprep.mubr.f32.mxu0 0.0
      %1001 = vmatmul.mubr.f32.gmra.mrb[0].mxu0 %v815
      %v1002 = vpop.f32.mrb[0].mxu0
      %v1003 = vadd.f32 %v711, %v1002
      %v1004 = vpop.f32.mrb[0].mxu0
      %1005 = vmatprep.mubr.f32.mxu0 0.0
      %1006 = vmatmul.mubr.f32.gmra.mrb[0].mxu0 %v817
      %v1007 = vpop.f32.mrb[0].mxu0
      %v1008 = vadd.f32 %v716, %v1007
      %v1009 = vpop.f32.mrb[0].mxu0
      %1010 = vmatprep.mubr.f32.mxu0 0.0
      %1011 = vmatmul.mubr.f32.gmra.mrb[0].mxu0 %v819
      %v1012 = vpop.f32.mrb[0].mxu0
      %v1013 = vadd.f32 %v721, %v1012
      %v1014 = vpop.f32.mrb[0].mxu0
      %1015 = vmatprep.mubr.f32.mxu0 0.0
      %1016 = vmatmul.mubr.f32.gmra.mrb[0].mxu0 %v821
      %v1017 = vpop.f32.mrb[0].mxu0
      %v1018 = vadd.f32 %v726, %v1017
      %v1019 = vpop.f32.mrb[0].mxu0
      %1020 = vmatprep.mubr.f32.mxu0 0.0
      %1021 = vmatmul.mubr.f32.gmra.mrb[0].mxu0 %v823
      %v1022 = vpop.f32.mrb[0].mxu0
      %v1023 = vadd.f32 %v731, %v1022
      %v1024 = vpop.f32.mrb[0].mxu0
      %1025 = vmatprep.mubr.f32.mxu0 0.0
      %1026 = vmatmul.mubr.f32.gmra.mrb[0].mxu0 %v825
      %v1027 = vpop.f32.mrb[0].mxu0
      %v1028 = vadd.f32 %v736, %v1027
      %v1029 = vpop.f32.mrb[0].mxu0
      %1030 = vmatprep.mubr.f32.mxu0 0.0
      %1031 = vmatmul.mubr.f32.gmra.mrb[0].mxu0 %v827
      %v1032 = vpop.f32.mrb[0].mxu0
      %v1033 = vadd.f32 %v741, %v1032
      %v1034 = vpop.f32.mrb[0].mxu0
      %1035 = vmatprep.mubr.f32.mxu0 0.0
      %1036 = vmatmul.mubr.f32.gmra.mrb[0].mxu0 %v829
      %v1037 = vpop.f32.mrb[0].mxu0
      %v1038 = vadd.f32 %v746, %v1037
      %v1039 = vpop.f32.mrb[0].mxu0
      %1040 = vmatprep.mubr.f32.mxu0 0.0
      %1041 = vmatmul.mubr.f32.gmra.mrb[0].mxu0 %v831
      %v1042 = vpop.f32.mrb[0].mxu0
      %v1043 = vadd.f32 %v751, %v1042
      %v1044 = vpop.f32.mrb[0].mxu0
      %1045 = vmatprep.mubr.f32.mxu0 0.0
      %1046 = vmatmul.mubr.f32.gmra.mrb[0].mxu0 %v833
      %v1047 = vpop.f32.mrb[0].mxu0
      %v1048 = vadd.f32 %v756, %v1047
      %v1049 = vpop.f32.mrb[0].mxu0
      %1050 = vmatprep.mubr.f32.mxu0 0.0
      %1051 = vmatmul.mubr.f32.gmra.mrb[0].mxu0 %v835
      %v1052 = vpop.f32.mrb[0].mxu0
      %v1053 = vadd.f32 %v761, %v1052
      %v1054 = vpop.f32.mrb[0].mxu0
      %1055 = vmatprep.mubr.f32.mxu0 0.0
      %1056 = vmatmul.mubr.f32.gmra.mrb[0].mxu0 %v837
      %v1057 = vpop.f32.mrb[0].mxu0
      %v1058 = vadd.f32 %v766, %v1057
      %v1059 = vpop.f32.mrb[0].mxu0
      %1060 = vmatprep.mubr.f32.mxu0 0.0
      %1061 = vmatmul.mubr.f32.gmra.mrb[0].mxu0 %v839
      %v1062 = vpop.f32.mrb[0].mxu0
      %v1063 = vadd.f32 %v771, %v1062
      %v1064 = vpop.f32.mrb[0].mxu0
      %1065 = vmatprep.mubr.f32.mxu0 0.0
      %1066 = vmatmul.mubr.f32.gmra.mrb[0].mxu0 %v841
      %v1067 = vpop.f32.mrb[0].mxu0
      %v1068 = vadd.f32 %v776, %v1067
      %v1069 = vpop.f32.mrb[0].mxu0
      %1070 = vdwg.mxu0
      %vm1071 = vcmask 1045504
      %v1072 = vrot.slane %v299, 2
      %v1073 = vrot.slane %v300, 2
      %v1074 = vsel %vm1071, %v1072, %v1073
      %v1075 = vrot.slane %v301, 2
      %v1076 = vsel %vm1071, %v1073, %v1075
      %v1077 = vrot.slane %v302, 2
      %v1078 = vrot.slane %v303, 2
      %v1079 = vsel %vm1071, %v1077, %v1078
      %v1080 = vrot.slane %v304, 2
      %v1081 = vsel %vm1071, %v1078, %v1080
      %v1082 = vrot.slane %v305, 2
      %v1083 = vrot.slane %v306, 2
      %v1084 = vsel %vm1071, %v1082, %v1083
      %v1085 = vrot.slane %v307, 2
      %v1086 = vsel %vm1071, %v1083, %v1085
      %v1087 = vrot.slane %v308, 2
      %v1088 = vrot.slane %v309, 2
      %v1089 = vsel %vm1071, %v1087, %v1088
      %v1090 = vrot.slane %v310, 2
      %v1091 = vsel %vm1071, %v1088, %v1090
      %v1092 = vrot.slane %v311, 2
      %v1093 = vrot.slane %v312, 2
      %v1094 = vsel %vm1071, %v1092, %v1093
      %v1095 = vrot.slane %v313, 2
      %v1096 = vsel %vm1071, %v1093, %v1095
      %v1097 = vrot.slane %v314, 2
      %v1098 = vrot.slane %v315, 2
      %v1099 = vsel %vm1071, %v1097, %v1098
      %v1100 = vrot.slane %v316, 2
      %v1101 = vsel %vm1071, %v1098, %v1100
      %v1102 = vrot.slane %v317, 2
      %v1103 = vrot.slane %v318, 2
      %v1104 = vsel %vm1071, %v1102, %v1103
      %v1105 = vrot.slane %v319, 2
      %v1106 = vsel %vm1071, %v1103, %v1105
      %v1107 = vrot.slane %v320, 2
      %v1108 = vrot.slane %v321, 2
      %v1109 = vsel %vm1071, %v1107, %v1108
      %v1110 = vrot.slane %v322, 2
      %v1111 = vsel %vm1071, %v1108, %v1110
      %v1112 = vrot.slane %v323, 2
      %v1113 = vrot.slane %v324, 2
      %v1114 = vsel %vm1071, %v1112, %v1113
      %v1115 = vrot.slane %v325, 2
      %v1116 = vsel %vm1071, %v1113, %v1115
      %v1117 = vrot.slane %v326, 2
      %v1118 = vrot.slane %v327, 2
      %v1119 = vsel %vm1071, %v1117, %v1118
      %v1120 = vrot.slane %v328, 2
      %v1121 = vsel %vm1071, %v1118, %v1120
      %v1122 = vrot.slane %v329, 2
      %v1123 = vrot.slane %v330, 2
      %v1124 = vsel %vm1071, %v1122, %v1123
      %v1125 = vrot.slane %v331, 2
      %v1126 = vsel %vm1071, %v1123, %v1125
      %v1127 = vrot.slane %v332, 2
      %v1128 = vrot.slane %v333, 2
      %v1129 = vsel %vm1071, %v1127, %v1128
      %v1130 = vrot.slane %v334, 2
      %v1131 = vsel %vm1071, %v1128, %v1130
      %v1132 = vrot.slane %v335, 2
      %v1133 = vrot.slane %v336, 2
      %v1134 = vsel %vm1071, %v1132, %v1133
      %v1135 = vrot.slane %v337, 2
      %v1136 = vsel %vm1071, %v1133, %v1135
      %v1137 = vrot.slane %v338, 2
      %v1138 = vrot.slane %v339, 2
      %v1139 = vsel %vm1071, %v1137, %v1138
      %v1140 = vrot.slane %v340, 2
      %v1141 = vsel %vm1071, %v1138, %v1140
      %v1142 = vrot.slane %v341, 2
      %v1143 = vrot.slane %v342, 2
      %v1144 = vsel %vm1071, %v1142, %v1143
      %v1145 = vrot.slane %v343, 2
      %v1146 = vsel %vm1071, %v1143, %v1145
      %v1147 = vrot.slane %v344, 2
      %v1148 = vrot.slane %v345, 2
      %v1149 = vsel %vm1071, %v1147, %v1148
      %v1150 = vrot.slane %v346, 2
      %v1151 = vsel %vm1071, %v1148, %v1150
      %s1152 = scalar_lea.vmem [#allocation2], 8
      %v1153 = vld [vmem:[%s1152] sm:$0xf]
      %v1154 = vsel %vm485, %v1074, 0
      %v1156 = vsel %vm485, %v1076, 0
      %v1158 = vsel %vm485, %v1079, 0
      %v1160 = vsel %vm485, %v1081, 0
      %v1162 = vsel %vm485, %v1084, 0
      %v1164 = vsel %vm485, %v1086, 0
      %v1166 = vsel %vm485, %v1089, 0
      %v1168 = vsel %vm485, %v1091, 0
      %v1170 = vsel %vm485, %v1094, 0
      %v1172 = vsel %vm485, %v1096, 0
      %v1174 = vsel %vm485, %v1099, 0
      %v1176 = vsel %vm485, %v1101, 0
      %v1178 = vsel %vm485, %v1104, 0
      %v1180 = vsel %vm485, %v1106, 0
      %v1182 = vsel %vm485, %v1109, 0
      %v1184 = vsel %vm485, %v1111, 0
      %v1186 = vsel %vm485, %v1114, 0
      %v1188 = vsel %vm485, %v1116, 0
      %v1190 = vsel %vm485, %v1119, 0
      %v1192 = vsel %vm485, %v1121, 0
      %v1194 = vsel %vm485, %v1124, 0
      %v1196 = vsel %vm485, %v1126, 0
      %v1198 = vsel %vm485, %v1129, 0
      %v1200 = vsel %vm485, %v1131, 0
      %v1202 = vsel %vm485, %v1134, 0
      %v1204 = vsel %vm485, %v1136, 0
      %v1206 = vsel %vm485, %v1139, 0
      %v1208 = vsel %vm485, %v1141, 0
      %v1210 = vsel %vm485, %v1144, 0
      %v1212 = vsel %vm485, %v1146, 0
      %v1214 = vsel %vm485, %v1149, 0
      %v1216 = vsel %vm485, %v1151, 0
      %v1219 = vsel %vm550, %v1153, 0
      %1221 = vmatprep.subr.mxu0 0.0
      %1222 = vmatpush1.msra.mxu0 %v1219
      %1223 = vmatprep.subr.mxu0 0.0
      %1224 = vmatpush1.msra.mxu0 0.0
      %1225 = vmatprep.subr.mxu0 0.0
      %1226 = vmatpush1.msra.mxu0 0.0
      %1227 = vmatprep.subr.mxu0 0.0
      %1228 = vmatpush1.msra.mxu0 0.0
      %1229 = vmatprep.subr.mxu0 0.0
      %1230 = vmatpush1.msra.mxu0 0.0
      %1231 = vmatprep.subr.mxu0 0.0
      %1232 = vmatpush1.msra.mxu0 0.0
      %1233 = vmatprep.subr.mxu0 0.0
      %1234 = vmatpush1.msra.mxu0 0.0
      %1235 = vmatprep.subr.mxu0 0.0
      %1236 = vmatpush1.msra.mxu0 0.0
      %1237 = vmatprep.subr.mxu0 0.0
      %1238 = vmatpush1.msra.mxu0 0.0
      %1239 = vmatprep.subr.mxu0 0.0
      %1240 = vmatpush1.msra.mxu0 0.0
      %1241 = vmatprep.subr.mxu0 0.0
      %1242 = vmatpush1.msra.mxu0 0.0
      %1243 = vmatprep.subr.mxu0 0.0
      %1244 = vmatpush1.msra.mxu0 0.0
      %1245 = vmatprep.subr.mxu0 0.0
      %1246 = vmatpush1.msra.mxu0 0.0
      %1247 = vmatprep.subr.mxu0 0.0
      %1248 = vmatpush1.msra.mxu0 0.0
      %1249 = vmatprep.subr.mxu0 0.0
      %1250 = vmatpush1.msra.mxu0 0.0
      %1251 = vmatprep.subr.mxu0 0.0
      %1252 = vmatpush1.msra.mxu0 0.0
      %1253 = vmatprep.subr.mxu0 0.0
      %1254 = vmatpush1.msra.mxu0 0.0
      %1255 = vmatprep.subr.mxu0 0.0
      %1256 = vmatpush1.msra.mxu0 0.0
      %1257 = vmatprep.subr.mxu0 0.0
      %1258 = vmatpush1.msra.mxu0 0.0
      %1259 = vmatprep.subr.mxu0 0.0
      %1260 = vmatpush1.msra.mxu0 0.0
      %1261 = vmatprep.subr.mxu0 0.0
      %1262 = vmatpush1.msra.mxu0 0.0
      %1263 = vmatprep.subr.mxu0 0.0
      %1264 = vmatpush1.msra.mxu0 0.0
      %1265 = vmatprep.subr.mxu0 0.0
      %1266 = vmatpush1.msra.mxu0 0.0
      %1267 = vmatprep.subr.mxu0 0.0
      %1268 = vmatpush1.msra.mxu0 0.0
      %1269 = vmatprep.subr.mxu0 0.0
      %1270 = vmatpush1.msra.mxu0 0.0
      %1271 = vmatprep.subr.mxu0 0.0
      %1272 = vmatpush1.msra.mxu0 0.0
      %1273 = vmatprep.subr.mxu0 0.0
      %1274 = vmatpush1.msra.mxu0 0.0
      %1275 = vmatprep.subr.mxu0 0.0
      %1276 = vmatpush1.msra.mxu0 0.0
      %1277 = vmatprep.subr.mxu0 0.0
      %1278 = vmatpush1.msra.mxu0 0.0
      %1279 = vmatprep.subr.mxu0 0.0
      %1280 = vmatpush1.msra.mxu0 0.0
      %1281 = vmatprep.subr.mxu0 0.0
      %1282 = vmatpush1.msra.mxu0 0.0
      %1283 = vmatprep.subr.mxu0 0.0
      %1284 = vmatpush1.msra.mxu0 0.0
      %1285 = vmatprep.mubr.f32.mxu0 0.0
      %1286 = vmatmul.mubr.f32.gmra.mrb[0].mxu0 %v1154
      %v1287 = vpop.f32.mrb[0].mxu0
      %v1288 = vadd.f32 0.0, %v1287
      %v1289 = vpop.f32.mrb[0].mxu0
      %1290 = vmatprep.mubr.f32.mxu0 0.0
      %1291 = vmatmul.mubr.f32.gmra.mrb[0].mxu0 %v1156
      %v1292 = vpop.f32.mrb[0].mxu0
      %v1293 = vadd.f32 0.0, %v1292
      %v1294 = vpop.f32.mrb[0].mxu0
      %1295 = vmatprep.mubr.f32.mxu0 0.0
      %1296 = vmatmul.mubr.f32.gmra.mrb[0].mxu0 %v1158
      %v1297 = vpop.f32.mrb[0].mxu0
      %v1298 = vadd.f32 0.0, %v1297
      %v1299 = vpop.f32.mrb[0].mxu0
      %1300 = vmatprep.mubr.f32.mxu0 0.0
      %1301 = vmatmul.mubr.f32.gmra.mrb[0].mxu0 %v1160
      %v1302 = vpop.f32.mrb[0].mxu0
      %v1303 = vadd.f32 0.0, %v1302
      %v1304 = vpop.f32.mrb[0].mxu0
      %1305 = vmatprep.mubr.f32.mxu0 0.0
      %1306 = vmatmul.mubr.f32.gmra.mrb[0].mxu0 %v1162
      %v1307 = vpop.f32.mrb[0].mxu0
      %v1308 = vadd.f32 0.0, %v1307
      %v1309 = vpop.f32.mrb[0].mxu0
      %1310 = vmatprep.mubr.f32.mxu0 0.0
      %1311 = vmatmul.mubr.f32.gmra.mrb[0].mxu0 %v1164
      %v1312 = vpop.f32.mrb[0].mxu0
      %v1313 = vadd.f32 0.0, %v1312
      %v1314 = vpop.f32.mrb[0].mxu0
      %1315 = vmatprep.mubr.f32.mxu0 0.0
      %1316 = vmatmul.mubr.f32.gmra.mrb[0].mxu0 %v1166
      %v1317 = vpop.f32.mrb[0].mxu0
      %v1318 = vadd.f32 0.0, %v1317
      %v1319 = vpop.f32.mrb[0].mxu0
      %1320 = vmatprep.mubr.f32.mxu0 0.0
      %1321 = vmatmul.mubr.f32.gmra.mrb[0].mxu0 %v1168
      %v1322 = vpop.f32.mrb[0].mxu0
      %v1323 = vadd.f32 0.0, %v1322
      %v1324 = vpop.f32.mrb[0].mxu0
      %1325 = vmatprep.mubr.f32.mxu0 0.0
      %1326 = vmatmul.mubr.f32.gmra.mrb[0].mxu0 %v1170
      %v1327 = vpop.f32.mrb[0].mxu0
      %v1328 = vadd.f32 0.0, %v1327
      %v1329 = vpop.f32.mrb[0].mxu0
      %1330 = vmatprep.mubr.f32.mxu0 0.0
      %1331 = vmatmul.mubr.f32.gmra.mrb[0].mxu0 %v1172
      %v1332 = vpop.f32.mrb[0].mxu0
      %v1333 = vadd.f32 0.0, %v1332
      %v1334 = vpop.f32.mrb[0].mxu0
      %1335 = vmatprep.mubr.f32.mxu0 0.0
      %1336 = vmatmul.mubr.f32.gmra.mrb[0].mxu0 %v1174
      %v1337 = vpop.f32.mrb[0].mxu0
      %v1338 = vadd.f32 0.0, %v1337
      %v1339 = vpop.f32.mrb[0].mxu0
      %1340 = vmatprep.mubr.f32.mxu0 0.0
      %1341 = vmatmul.mubr.f32.gmra.mrb[0].mxu0 %v1176
      %v1342 = vpop.f32.mrb[0].mxu0
      %v1343 = vadd.f32 0.0, %v1342
      %v1344 = vpop.f32.mrb[0].mxu0
      %1345 = vmatprep.mubr.f32.mxu0 0.0
      %1346 = vmatmul.mubr.f32.gmra.mrb[0].mxu0 %v1178
      %v1347 = vpop.f32.mrb[0].mxu0
      %v1348 = vadd.f32 0.0, %v1347
      %v1349 = vpop.f32.mrb[0].mxu0
      %1350 = vmatprep.mubr.f32.mxu0 0.0
      %1351 = vmatmul.mubr.f32.gmra.mrb[0].mxu0 %v1180
      %v1352 = vpop.f32.mrb[0].mxu0
      %v1353 = vadd.f32 0.0, %v1352
      %v1354 = vpop.f32.mrb[0].mxu0
      %1355 = vmatprep.mubr.f32.mxu0 0.0
      %1356 = vmatmul.mubr.f32.gmra.mrb[0].mxu0 %v1182
      %v1357 = vpop.f32.mrb[0].mxu0
      %v1358 = vadd.f32 0.0, %v1357
      %v1359 = vpop.f32.mrb[0].mxu0
      %1360 = vmatprep.mubr.f32.mxu0 0.0
      %1361 = vmatmul.mubr.f32.gmra.mrb[0].mxu0 %v1184
      %v1362 = vpop.f32.mrb[0].mxu0
      %v1363 = vadd.f32 0.0, %v1362
      %v1364 = vpop.f32.mrb[0].mxu0
      %1365 = vmatprep.mubr.f32.mxu0 0.0
      %1366 = vmatmul.mubr.f32.gmra.mrb[0].mxu0 %v1186
      %v1367 = vpop.f32.mrb[0].mxu0
      %v1368 = vadd.f32 0.0, %v1367
      %v1369 = vpop.f32.mrb[0].mxu0
      %1370 = vmatprep.mubr.f32.mxu0 0.0
      %1371 = vmatmul.mubr.f32.gmra.mrb[0].mxu0 %v1188
      %v1372 = vpop.f32.mrb[0].mxu0
      %v1373 = vadd.f32 0.0, %v1372
      %v1374 = vpop.f32.mrb[0].mxu0
      %1375 = vmatprep.mubr.f32.mxu0 0.0
      %1376 = vmatmul.mubr.f32.gmra.mrb[0].mxu0 %v1190
      %v1377 = vpop.f32.mrb[0].mxu0
      %v1378 = vadd.f32 0.0, %v1377
      %v1379 = vpop.f32.mrb[0].mxu0
      %1380 = vmatprep.mubr.f32.mxu0 0.0
      %1381 = vmatmul.mubr.f32.gmra.mrb[0].mxu0 %v1192
      %v1382 = vpop.f32.mrb[0].mxu0
      %v1383 = vadd.f32 0.0, %v1382
      %v1384 = vpop.f32.mrb[0].mxu0
      %1385 = vmatprep.mubr.f32.mxu0 0.0
      %1386 = vmatmul.mubr.f32.gmra.mrb[0].mxu0 %v1194
      %v1387 = vpop.f32.mrb[0].mxu0
      %v1388 = vadd.f32 0.0, %v1387
      %v1389 = vpop.f32.mrb[0].mxu0
      %1390 = vmatprep.mubr.f32.mxu0 0.0
      %1391 = vmatmul.mubr.f32.gmra.mrb[0].mxu0 %v1196
      %v1392 = vpop.f32.mrb[0].mxu0
      %v1393 = vadd.f32 0.0, %v1392
      %v1394 = vpop.f32.mrb[0].mxu0
      %1395 = vmatprep.mubr.f32.mxu0 0.0
      %1396 = vmatmul.mubr.f32.gmra.mrb[0].mxu0 %v1198
      %v1397 = vpop.f32.mrb[0].mxu0
      %v1398 = vadd.f32 0.0, %v1397
      %v1399 = vpop.f32.mrb[0].mxu0
      %1400 = vmatprep.mubr.f32.mxu0 0.0
      %1401 = vmatmul.mubr.f32.gmra.mrb[0].mxu0 %v1200
      %v1402 = vpop.f32.mrb[0].mxu0
      %v1403 = vadd.f32 0.0, %v1402
      %v1404 = vpop.f32.mrb[0].mxu0
      %1405 = vmatprep.mubr.f32.mxu0 0.0
      %1406 = vmatmul.mubr.f32.gmra.mrb[0].mxu0 %v1202
      %v1407 = vpop.f32.mrb[0].mxu0
      %v1408 = vadd.f32 0.0, %v1407
      %v1409 = vpop.f32.mrb[0].mxu0
      %1410 = vmatprep.mubr.f32.mxu0 0.0
      %1411 = vmatmul.mubr.f32.gmra.mrb[0].mxu0 %v1204
      %v1412 = vpop.f32.mrb[0].mxu0
      %v1413 = vadd.f32 0.0, %v1412
      %v1414 = vpop.f32.mrb[0].mxu0
      %1415 = vmatprep.mubr.f32.mxu0 0.0
      %1416 = vmatmul.mubr.f32.gmra.mrb[0].mxu0 %v1206
      %v1417 = vpop.f32.mrb[0].mxu0
      %v1418 = vadd.f32 0.0, %v1417
      %v1419 = vpop.f32.mrb[0].mxu0
      %1420 = vmatprep.mubr.f32.mxu0 0.0
      %1421 = vmatmul.mubr.f32.gmra.mrb[0].mxu0 %v1208
      %v1422 = vpop.f32.mrb[0].mxu0
      %v1423 = vadd.f32 0.0, %v1422
      %v1424 = vpop.f32.mrb[0].mxu0
      %1425 = vmatprep.mubr.f32.mxu0 0.0
      %1426 = vmatmul.mubr.f32.gmra.mrb[0].mxu0 %v1210
      %v1427 = vpop.f32.mrb[0].mxu0
      %v1428 = vadd.f32 0.0, %v1427
      %v1429 = vpop.f32.mrb[0].mxu0
      %1430 = vmatprep.mubr.f32.mxu0 0.0
      %1431 = vmatmul.mubr.f32.gmra.mrb[0].mxu0 %v1212
      %v1432 = vpop.f32.mrb[0].mxu0
      %v1433 = vadd.f32 0.0, %v1432
      %v1434 = vpop.f32.mrb[0].mxu0
      %1435 = vmatprep.mubr.f32.mxu0 0.0
      %1436 = vmatmul.mubr.f32.gmra.mrb[0].mxu0 %v1214
      %v1437 = vpop.f32.mrb[0].mxu0
      %v1438 = vadd.f32 0.0, %v1437
      %v1439 = vpop.f32.mrb[0].mxu0
      %1440 = vmatprep.mubr.f32.mxu0 0.0
      %1441 = vmatmul.mubr.f32.gmra.mrb[0].mxu0 %v1216
      %v1442 = vpop.f32.mrb[0].mxu0
      %v1443 = vadd.f32 0.0, %v1442
      %v1444 = vpop.f32.mrb[0].mxu0
      %1445 = vdwg.mxu0
      %v1446 = vadd.f32 %v913, %v1288
      %v1447 = vadd.f32 %v918, %v1293
      %v1448 = vadd.f32 %v923, %v1298
      %v1449 = vadd.f32 %v928, %v1303
      %v1450 = vadd.f32 %v933, %v1308
      %v1451 = vadd.f32 %v938, %v1313
      %v1452 = vadd.f32 %v943, %v1318
      %v1453 = vadd.f32 %v948, %v1323
      %v1454 = vadd.f32 %v953, %v1328
      %v1455 = vadd.f32 %v958, %v1333
      %v1456 = vadd.f32 %v963, %v1338
      %v1457 = vadd.f32 %v968, %v1343
      %v1458 = vadd.f32 %v973, %v1348
      %v1459 = vadd.f32 %v978, %v1353
      %v1460 = vadd.f32 %v983, %v1358
      %v1461 = vadd.f32 %v988, %v1363
      %v1462 = vadd.f32 %v993, %v1368
      %v1463 = vadd.f32 %v998, %v1373
      %v1464 = vadd.f32 %v1003, %v1378
      %v1465 = vadd.f32 %v1008, %v1383
      %v1466 = vadd.f32 %v1013, %v1388
      %v1467 = vadd.f32 %v1018, %v1393
      %v1468 = vadd.f32 %v1023, %v1398
      %v1469 = vadd.f32 %v1028, %v1403
      %v1470 = vadd.f32 %v1033, %v1408
      %v1471 = vadd.f32 %v1038, %v1413
      %v1472 = vadd.f32 %v1043, %v1418
      %v1473 = vadd.f32 %v1048, %v1423
      %v1474 = vadd.f32 %v1053, %v1428
      %v1475 = vadd.f32 %v1058, %v1433
      %v1476 = vadd.f32 %v1063, %v1438
      %v1477 = vadd.f32 %v1068, %v1443
      %s1478 = scalar_lea.vmem [#allocation2], 12
      %v1479 = vld [vmem:[%s1478] sm:$0xf]
      %v1481 = vsel %vm485, %v347, 0
      %v1484 = vsel %vm485, %v348, 0
      %v1487 = vsel %vm550, %v1479, 0
      %1489 = vmatprep.subr.mxu0 0.0
      %1490 = vmatpush1.msra.mxu0 %v1487
      %1491 = vmatprep.subr.mxu0 0.0
      %1492 = vmatpush1.msra.mxu0 0.0
      %1493 = vmatprep.subr.mxu0 0.0
      %1494 = vmatpush1.msra.mxu0 0.0
      %1495 = vmatprep.subr.mxu0 0.0
      %1496 = vmatpush1.msra.mxu0 0.0
      %1497 = vmatprep.subr.mxu0 0.0
      %1498 = vmatpush1.msra.mxu0 0.0
      %1499 = vmatprep.subr.mxu0 0.0
      %1500 = vmatpush1.msra.mxu0 0.0
      %1501 = vmatprep.subr.mxu0 0.0
      %1502 = vmatpush1.msra.mxu0 0.0
      %1503 = vmatprep.subr.mxu0 0.0
      %1504 = vmatpush1.msra.mxu0 0.0
      %1505 = vmatprep.subr.mxu0 0.0
      %1506 = vmatpush1.msra.mxu0 0.0
      %1507 = vmatprep.subr.mxu0 0.0
      %1508 = vmatpush1.msra.mxu0 0.0
      %1509 = vmatprep.subr.mxu0 0.0
      %1510 = vmatpush1.msra.mxu0 0.0
      %1511 = vmatprep.subr.mxu0 0.0
      %1512 = vmatpush1.msra.mxu0 0.0
      %1513 = vmatprep.subr.mxu0 0.0
      %1514 = vmatpush1.msra.mxu0 0.0
      %1515 = vmatprep.subr.mxu0 0.0
      %1516 = vmatpush1.msra.mxu0 0.0
      %1517 = vmatprep.subr.mxu0 0.0
      %1518 = vmatpush1.msra.mxu0 0.0
      %1519 = vmatprep.subr.mxu0 0.0
      %1520 = vmatpush1.msra.mxu0 0.0
      %1521 = vmatprep.subr.mxu0 0.0
      %1522 = vmatpush1.msra.mxu0 0.0
      %1523 = vmatprep.subr.mxu0 0.0
      %1524 = vmatpush1.msra.mxu0 0.0
      %1525 = vmatprep.subr.mxu0 0.0
      %1526 = vmatpush1.msra.mxu0 0.0
      %1527 = vmatprep.subr.mxu0 0.0
      %1528 = vmatpush1.msra.mxu0 0.0
      %1529 = vmatprep.subr.mxu0 0.0
      %1530 = vmatpush1.msra.mxu0 0.0
      %1531 = vmatprep.subr.mxu0 0.0
      %1532 = vmatpush1.msra.mxu0 0.0
      %1533 = vmatprep.subr.mxu0 0.0
      %1534 = vmatpush1.msra.mxu0 0.0
      %1535 = vmatprep.subr.mxu0 0.0
      %1536 = vmatpush1.msra.mxu0 0.0
      %1537 = vmatprep.subr.mxu0 0.0
      %1538 = vmatpush1.msra.mxu0 0.0
      %1539 = vmatprep.subr.mxu0 0.0
      %1540 = vmatpush1.msra.mxu0 0.0
      %1541 = vmatprep.subr.mxu0 0.0
      %1542 = vmatpush1.msra.mxu0 0.0
      %1543 = vmatprep.subr.mxu0 0.0
      %1544 = vmatpush1.msra.mxu0 0.0
      %1545 = vmatprep.subr.mxu0 0.0
      %1546 = vmatpush1.msra.mxu0 0.0
      %1547 = vmatprep.subr.mxu0 0.0
      %1548 = vmatpush1.msra.mxu0 0.0
      %1549 = vmatprep.subr.mxu0 0.0
      %1550 = vmatpush1.msra.mxu0 0.0
      %1551 = vmatprep.subr.mxu0 0.0
      %1552 = vmatpush1.msra.mxu0 0.0
      %1553 = vmatprep.mubr.f32.mxu0 0.0
      %1554 = vmatmul.mubr.f32.gmra.mrb[0].mxu0 %v783
      %v1555 = vpop.f32.mrb[0].mxu0
      %v1556 = vadd.f32 0.0, %v1555
      %v1557 = vpop.f32.mrb[0].mxu0
      %1558 = vmatprep.mubr.f32.mxu0 0.0
      %1559 = vmatmul.mubr.f32.gmra.mrb[0].mxu0 %v785
      %v1560 = vpop.f32.mrb[0].mxu0
      %v1561 = vadd.f32 0.0, %v1560
      %v1562 = vpop.f32.mrb[0].mxu0
      %1563 = vmatprep.mubr.f32.mxu0 0.0
      %1564 = vmatmul.mubr.f32.gmra.mrb[0].mxu0 %v787
      %v1565 = vpop.f32.mrb[0].mxu0
      %v1566 = vadd.f32 0.0, %v1565
      %v1567 = vpop.f32.mrb[0].mxu0
      %1568 = vmatprep.mubr.f32.mxu0 0.0
      %1569 = vmatmul.mubr.f32.gmra.mrb[0].mxu0 %v789
      %v1570 = vpop.f32.mrb[0].mxu0
      %v1571 = vadd.f32 0.0, %v1570
      %v1572 = vpop.f32.mrb[0].mxu0
      %1573 = vmatprep.mubr.f32.mxu0 0.0
      %1574 = vmatmul.mubr.f32.gmra.mrb[0].mxu0 %v791
      %v1575 = vpop.f32.mrb[0].mxu0
      %v1576 = vadd.f32 0.0, %v1575
      %v1577 = vpop.f32.mrb[0].mxu0
      %1578 = vmatprep.mubr.f32.mxu0 0.0
      %1579 = vmatmul.mubr.f32.gmra.mrb[0].mxu0 %v793
      %v1580 = vpop.f32.mrb[0].mxu0
      %v1581 = vadd.f32 0.0, %v1580
      %v1582 = vpop.f32.mrb[0].mxu0
      %1583 = vmatprep.mubr.f32.mxu0 0.0
      %1584 = vmatmul.mubr.f32.gmra.mrb[0].mxu0 %v795
      %v1585 = vpop.f32.mrb[0].mxu0
      %v1586 = vadd.f32 0.0, %v1585
      %v1587 = vpop.f32.mrb[0].mxu0
      %1588 = vmatprep.mubr.f32.mxu0 0.0
      %1589 = vmatmul.mubr.f32.gmra.mrb[0].mxu0 %v797
      %v1590 = vpop.f32.mrb[0].mxu0
      %v1591 = vadd.f32 0.0, %v1590
      %v1592 = vpop.f32.mrb[0].mxu0
      %1593 = vmatprep.mubr.f32.mxu0 0.0
      %1594 = vmatmul.mubr.f32.gmra.mrb[0].mxu0 %v799
      %v1595 = vpop.f32.mrb[0].mxu0
      %v1596 = vadd.f32 0.0, %v1595
      %v1597 = vpop.f32.mrb[0].mxu0
      %1598 = vmatprep.mubr.f32.mxu0 0.0
      %1599 = vmatmul.mubr.f32.gmra.mrb[0].mxu0 %v801
      %v1600 = vpop.f32.mrb[0].mxu0
      %v1601 = vadd.f32 0.0, %v1600
      %v1602 = vpop.f32.mrb[0].mxu0
      %1603 = vmatprep.mubr.f32.mxu0 0.0
      %1604 = vmatmul.mubr.f32.gmra.mrb[0].mxu0 %v803
      %v1605 = vpop.f32.mrb[0].mxu0
      %v1606 = vadd.f32 0.0, %v1605
      %v1607 = vpop.f32.mrb[0].mxu0
      %1608 = vmatprep.mubr.f32.mxu0 0.0
      %1609 = vmatmul.mubr.f32.gmra.mrb[0].mxu0 %v805
      %v1610 = vpop.f32.mrb[0].mxu0
      %v1611 = vadd.f32 0.0, %v1610
      %v1612 = vpop.f32.mrb[0].mxu0
      %1613 = vmatprep.mubr.f32.mxu0 0.0
      %1614 = vmatmul.mubr.f32.gmra.mrb[0].mxu0 %v807
      %v1615 = vpop.f32.mrb[0].mxu0
      %v1616 = vadd.f32 0.0, %v1615
      %v1617 = vpop.f32.mrb[0].mxu0
      %1618 = vmatprep.mubr.f32.mxu0 0.0
      %1619 = vmatmul.mubr.f32.gmra.mrb[0].mxu0 %v809
      %v1620 = vpop.f32.mrb[0].mxu0
      %v1621 = vadd.f32 0.0, %v1620
      %v1622 = vpop.f32.mrb[0].mxu0
      %1623 = vmatprep.mubr.f32.mxu0 0.0
      %1624 = vmatmul.mubr.f32.gmra.mrb[0].mxu0 %v811
      %v1625 = vpop.f32.mrb[0].mxu0
      %v1626 = vadd.f32 0.0, %v1625
      %v1627 = vpop.f32.mrb[0].mxu0
      %1628 = vmatprep.mubr.f32.mxu0 0.0
      %1629 = vmatmul.mubr.f32.gmra.mrb[0].mxu0 %v813
      %v1630 = vpop.f32.mrb[0].mxu0
      %v1631 = vadd.f32 0.0, %v1630
      %v1632 = vpop.f32.mrb[0].mxu0
      %1633 = vmatprep.mubr.f32.mxu0 0.0
      %1634 = vmatmul.mubr.f32.gmra.mrb[0].mxu0 %v815
      %v1635 = vpop.f32.mrb[0].mxu0
      %v1636 = vadd.f32 0.0, %v1635
      %v1637 = vpop.f32.mrb[0].mxu0
      %1638 = vmatprep.mubr.f32.mxu0 0.0
      %1639 = vmatmul.mubr.f32.gmra.mrb[0].mxu0 %v817
      %v1640 = vpop.f32.mrb[0].mxu0
      %v1641 = vadd.f32 0.0, %v1640
      %v1642 = vpop.f32.mrb[0].mxu0
      %1643 = vmatprep.mubr.f32.mxu0 0.0
      %1644 = vmatmul.mubr.f32.gmra.mrb[0].mxu0 %v819
      %v1645 = vpop.f32.mrb[0].mxu0
      %v1646 = vadd.f32 0.0, %v1645
      %v1647 = vpop.f32.mrb[0].mxu0
      %1648 = vmatprep.mubr.f32.mxu0 0.0
      %1649 = vmatmul.mubr.f32.gmra.mrb[0].mxu0 %v821
      %v1650 = vpop.f32.mrb[0].mxu0
      %v1651 = vadd.f32 0.0, %v1650
      %v1652 = vpop.f32.mrb[0].mxu0
      %1653 = vmatprep.mubr.f32.mxu0 0.0
      %1654 = vmatmul.mubr.f32.gmra.mrb[0].mxu0 %v823
      %v1655 = vpop.f32.mrb[0].mxu0
      %v1656 = vadd.f32 0.0, %v1655
      %v1657 = vpop.f32.mrb[0].mxu0
      %1658 = vmatprep.mubr.f32.mxu0 0.0
      %1659 = vmatmul.mubr.f32.gmra.mrb[0].mxu0 %v825
      %v1660 = vpop.f32.mrb[0].mxu0
      %v1661 = vadd.f32 0.0, %v1660
      %v1662 = vpop.f32.mrb[0].mxu0
      %1663 = vmatprep.mubr.f32.mxu0 0.0
      %1664 = vmatmul.mubr.f32.gmra.mrb[0].mxu0 %v827
      %v1665 = vpop.f32.mrb[0].mxu0
      %v1666 = vadd.f32 0.0, %v1665
      %v1667 = vpop.f32.mrb[0].mxu0
      %1668 = vmatprep.mubr.f32.mxu0 0.0
      %1669 = vmatmul.mubr.f32.gmra.mrb[0].mxu0 %v829
      %v1670 = vpop.f32.mrb[0].mxu0
      %v1671 = vadd.f32 0.0, %v1670
      %v1672 = vpop.f32.mrb[0].mxu0
      %1673 = vmatprep.mubr.f32.mxu0 0.0
      %1674 = vmatmul.mubr.f32.gmra.mrb[0].mxu0 %v831
      %v1675 = vpop.f32.mrb[0].mxu0
      %v1676 = vadd.f32 0.0, %v1675
      %v1677 = vpop.f32.mrb[0].mxu0
      %1678 = vmatprep.mubr.f32.mxu0 0.0
      %1679 = vmatmul.mubr.f32.gmra.mrb[0].mxu0 %v833
      %v1680 = vpop.f32.mrb[0].mxu0
      %v1681 = vadd.f32 0.0, %v1680
      %v1682 = vpop.f32.mrb[0].mxu0
      %1683 = vmatprep.mubr.f32.mxu0 0.0
      %1684 = vmatmul.mubr.f32.gmra.mrb[0].mxu0 %v835
      %v1685 = vpop.f32.mrb[0].mxu0
      %v1686 = vadd.f32 0.0, %v1685
      %v1687 = vpop.f32.mrb[0].mxu0
      %1688 = vmatprep.mubr.f32.mxu0 0.0
      %1689 = vmatmul.mubr.f32.gmra.mrb[0].mxu0 %v837
      %v1690 = vpop.f32.mrb[0].mxu0
      %v1691 = vadd.f32 0.0, %v1690
      %v1692 = vpop.f32.mrb[0].mxu0
      %1693 = vmatprep.mubr.f32.mxu0 0.0
      %1694 = vmatmul.mubr.f32.gmra.mrb[0].mxu0 %v839
      %v1695 = vpop.f32.mrb[0].mxu0
      %v1696 = vadd.f32 0.0, %v1695
      %v1697 = vpop.f32.mrb[0].mxu0
      %1698 = vmatprep.mubr.f32.mxu0 0.0
      %1699 = vmatmul.mubr.f32.gmra.mrb[0].mxu0 %v841
      %v1700 = vpop.f32.mrb[0].mxu0
      %v1701 = vadd.f32 0.0, %v1700
      %v1702 = vpop.f32.mrb[0].mxu0
      %1703 = vmatprep.mubr.f32.mxu0 0.0
      %1704 = vmatmul.mubr.f32.gmra.mrb[0].mxu0 %v1481
      %v1705 = vpop.f32.mrb[0].mxu0
      %v1706 = vadd.f32 0.0, %v1705
      %v1707 = vpop.f32.mrb[0].mxu0
      %1708 = vmatprep.mubr.f32.mxu0 0.0
      %1709 = vmatmul.mubr.f32.gmra.mrb[0].mxu0 %v1484
      %v1710 = vpop.f32.mrb[0].mxu0
      %v1711 = vadd.f32 0.0, %v1710
      %v1712 = vpop.f32.mrb[0].mxu0
      %1713 = vdwg.mxu0
      %v1714 = vadd.f32 %v1446, %v1556
      %v1715 = vadd.f32 %v1447, %v1561
      %v1716 = vadd.f32 %v1448, %v1566
      %v1717 = vadd.f32 %v1449, %v1571
      %v1718 = vadd.f32 %v1450, %v1576
      %v1719 = vadd.f32 %v1451, %v1581
      %v1720 = vadd.f32 %v1452, %v1586
      %v1721 = vadd.f32 %v1453, %v1591
      %v1722 = vadd.f32 %v1454, %v1596
      %v1723 = vadd.f32 %v1455, %v1601
      %v1724 = vadd.f32 %v1456, %v1606
      %v1725 = vadd.f32 %v1457, %v1611
      %v1726 = vadd.f32 %v1458, %v1616
      %v1727 = vadd.f32 %v1459, %v1621
      %v1728 = vadd.f32 %v1460, %v1626
      %v1729 = vadd.f32 %v1461, %v1631
      %v1730 = vadd.f32 %v1462, %v1636
      %v1731 = vadd.f32 %v1463, %v1641
      %v1732 = vadd.f32 %v1464, %v1646
      %v1733 = vadd.f32 %v1465, %v1651
      %v1734 = vadd.f32 %v1466, %v1656
      %v1735 = vadd.f32 %v1467, %v1661
      %v1736 = vadd.f32 %v1468, %v1666
      %v1737 = vadd.f32 %v1469, %v1671
      %v1738 = vadd.f32 %v1470, %v1676
      %v1739 = vadd.f32 %v1471, %v1681
      %v1740 = vadd.f32 %v1472, %v1686
      %v1741 = vadd.f32 %v1473, %v1691
      %v1742 = vadd.f32 %v1474, %v1696
      %v1743 = vadd.f32 %v1475, %v1701
      %v1744 = vadd.f32 %v1476, %v1706
      %v1745 = vadd.f32 %v1477, %v1711
      %v1747 = vrot.slane %v347, 1
      %v1748 = vrot.slane %v348, 1
      %v1749 = vsel %vm402, %v1747, %v1748
      %v1750 = vrot.slane %v349, 1
      %v1751 = vsel %vm402, %v1748, %v1750
      %s1752 = scalar_lea.vmem [#allocation2], 16
      %v1753 = vld [vmem:[%s1752] sm:$0xf]
      %v1754 = vsel %vm485, %v1749, 0
      %v1756 = vsel %vm485, %v1751, 0
      %v1759 = vsel %vm550, %v1753, 0
      %1761 = vmatprep.subr.mxu0 0.0
      %1762 = vmatpush1.msra.mxu0 %v1759
      %1763 = vmatprep.subr.mxu0 0.0
      %1764 = vmatpush1.msra.mxu0 0.0
      %1765 = vmatprep.subr.mxu0 0.0
      %1766 = vmatpush1.msra.mxu0 0.0
      %1767 = vmatprep.subr.mxu0 0.0
      %1768 = vmatpush1.msra.mxu0 0.0
      %1769 = vmatprep.subr.mxu0 0.0
      %1770 = vmatpush1.msra.mxu0 0.0
      %1771 = vmatprep.subr.mxu0 0.0
      %1772 = vmatpush1.msra.mxu0 0.0
      %1773 = vmatprep.subr.mxu0 0.0
      %1774 = vmatpush1.msra.mxu0 0.0
      %1775 = vmatprep.subr.mxu0 0.0
      %1776 = vmatpush1.msra.mxu0 0.0
      %1777 = vmatprep.subr.mxu0 0.0
      %1778 = vmatpush1.msra.mxu0 0.0
      %1779 = vmatprep.subr.mxu0 0.0
      %1780 = vmatpush1.msra.mxu0 0.0
      %1781 = vmatprep.subr.mxu0 0.0
      %1782 = vmatpush1.msra.mxu0 0.0
      %1783 = vmatprep.subr.mxu0 0.0
      %1784 = vmatpush1.msra.mxu0 0.0
      %1785 = vmatprep.subr.mxu0 0.0
      %1786 = vmatpush1.msra.mxu0 0.0
      %1787 = vmatprep.subr.mxu0 0.0
      %1788 = vmatpush1.msra.mxu0 0.0
      %1789 = vmatprep.subr.mxu0 0.0
      %1790 = vmatpush1.msra.mxu0 0.0
      %1791 = vmatprep.subr.mxu0 0.0
      %1792 = vmatpush1.msra.mxu0 0.0
      %1793 = vmatprep.subr.mxu0 0.0
      %1794 = vmatpush1.msra.mxu0 0.0
      %1795 = vmatprep.subr.mxu0 0.0
      %1796 = vmatpush1.msra.mxu0 0.0
      %1797 = vmatprep.subr.mxu0 0.0
      %1798 = vmatpush1.msra.mxu0 0.0
      %1799 = vmatprep.subr.mxu0 0.0
      %1800 = vmatpush1.msra.mxu0 0.0
      %1801 = vmatprep.subr.mxu0 0.0
      %1802 = vmatpush1.msra.mxu0 0.0
      %1803 = vmatprep.subr.mxu0 0.0
      %1804 = vmatpush1.msra.mxu0 0.0
      %1805 = vmatprep.subr.mxu0 0.0
      %1806 = vmatpush1.msra.mxu0 0.0
      %1807 = vmatprep.subr.mxu0 0.0
      %1808 = vmatpush1.msra.mxu0 0.0
      %1809 = vmatprep.subr.mxu0 0.0
      %1810 = vmatpush1.msra.mxu0 0.0
      %1811 = vmatprep.subr.mxu0 0.0
      %1812 = vmatpush1.msra.mxu0 0.0
      %1813 = vmatprep.subr.mxu0 0.0
      %1814 = vmatpush1.msra.mxu0 0.0
      %1815 = vmatprep.subr.mxu0 0.0
      %1816 = vmatpush1.msra.mxu0 0.0
      %1817 = vmatprep.subr.mxu0 0.0
      %1818 = vmatpush1.msra.mxu0 0.0
      %1819 = vmatprep.subr.mxu0 0.0
      %1820 = vmatpush1.msra.mxu0 0.0
      %1821 = vmatprep.subr.mxu0 0.0
      %1822 = vmatpush1.msra.mxu0 0.0
      %1823 = vmatprep.subr.mxu0 0.0
      %1824 = vmatpush1.msra.mxu0 0.0
      %1825 = vmatprep.mubr.f32.mxu0 0.0
      %1826 = vmatmul.mubr.f32.gmra.mrb[0].mxu0 %v490
      %v1827 = vpop.f32.mrb[0].mxu0
      %v1828 = vadd.f32 0.0, %v1827
      %v1829 = vpop.f32.mrb[0].mxu0
      %1830 = vmatprep.mubr.f32.mxu0 0.0
      %1831 = vmatmul.mubr.f32.gmra.mrb[0].mxu0 %v492
      %v1832 = vpop.f32.mrb[0].mxu0
      %v1833 = vadd.f32 0.0, %v1832
      %v1834 = vpop.f32.mrb[0].mxu0
      %1835 = vmatprep.mubr.f32.mxu0 0.0
      %1836 = vmatmul.mubr.f32.gmra.mrb[0].mxu0 %v494
      %v1837 = vpop.f32.mrb[0].mxu0
      %v1838 = vadd.f32 0.0, %v1837
      %v1839 = vpop.f32.mrb[0].mxu0
      %1840 = vmatprep.mubr.f32.mxu0 0.0
      %1841 = vmatmul.mubr.f32.gmra.mrb[0].mxu0 %v496
      %v1842 = vpop.f32.mrb[0].mxu0
      %v1843 = vadd.f32 0.0, %v1842
      %v1844 = vpop.f32.mrb[0].mxu0
      %1845 = vmatprep.mubr.f32.mxu0 0.0
      %1846 = vmatmul.mubr.f32.gmra.mrb[0].mxu0 %v498
      %v1847 = vpop.f32.mrb[0].mxu0
      %v1848 = vadd.f32 0.0, %v1847
      %v1849 = vpop.f32.mrb[0].mxu0
      %1850 = vmatprep.mubr.f32.mxu0 0.0
      %1851 = vmatmul.mubr.f32.gmra.mrb[0].mxu0 %v500
      %v1852 = vpop.f32.mrb[0].mxu0
      %v1853 = vadd.f32 0.0, %v1852
      %v1854 = vpop.f32.mrb[0].mxu0
      %1855 = vmatprep.mubr.f32.mxu0 0.0
      %1856 = vmatmul.mubr.f32.gmra.mrb[0].mxu0 %v502
      %v1857 = vpop.f32.mrb[0].mxu0
      %v1858 = vadd.f32 0.0, %v1857
      %v1859 = vpop.f32.mrb[0].mxu0
      %1860 = vmatprep.mubr.f32.mxu0 0.0
      %1861 = vmatmul.mubr.f32.gmra.mrb[0].mxu0 %v504
      %v1862 = vpop.f32.mrb[0].mxu0
      %v1863 = vadd.f32 0.0, %v1862
      %v1864 = vpop.f32.mrb[0].mxu0
      %1865 = vmatprep.mubr.f32.mxu0 0.0
      %1866 = vmatmul.mubr.f32.gmra.mrb[0].mxu0 %v506
      %v1867 = vpop.f32.mrb[0].mxu0
      %v1868 = vadd.f32 0.0, %v1867
      %v1869 = vpop.f32.mrb[0].mxu0
      %1870 = vmatprep.mubr.f32.mxu0 0.0
      %1871 = vmatmul.mubr.f32.gmra.mrb[0].mxu0 %v508
      %v1872 = vpop.f32.mrb[0].mxu0
      %v1873 = vadd.f32 0.0, %v1872
      %v1874 = vpop.f32.mrb[0].mxu0
      %1875 = vmatprep.mubr.f32.mxu0 0.0
      %1876 = vmatmul.mubr.f32.gmra.mrb[0].mxu0 %v510
      %v1877 = vpop.f32.mrb[0].mxu0
      %v1878 = vadd.f32 0.0, %v1877
      %v1879 = vpop.f32.mrb[0].mxu0
      %1880 = vmatprep.mubr.f32.mxu0 0.0
      %1881 = vmatmul.mubr.f32.gmra.mrb[0].mxu0 %v512
      %v1882 = vpop.f32.mrb[0].mxu0
      %v1883 = vadd.f32 0.0, %v1882
      %v1884 = vpop.f32.mrb[0].mxu0
      %1885 = vmatprep.mubr.f32.mxu0 0.0
      %1886 = vmatmul.mubr.f32.gmra.mrb[0].mxu0 %v514
      %v1887 = vpop.f32.mrb[0].mxu0
      %v1888 = vadd.f32 0.0, %v1887
      %v1889 = vpop.f32.mrb[0].mxu0
      %1890 = vmatprep.mubr.f32.mxu0 0.0
      %1891 = vmatmul.mubr.f32.gmra.mrb[0].mxu0 %v516
      %v1892 = vpop.f32.mrb[0].mxu0
      %v1893 = vadd.f32 0.0, %v1892
      %v1894 = vpop.f32.mrb[0].mxu0
      %1895 = vmatprep.mubr.f32.mxu0 0.0
      %1896 = vmatmul.mubr.f32.gmra.mrb[0].mxu0 %v518
      %v1897 = vpop.f32.mrb[0].mxu0
      %v1898 = vadd.f32 0.0, %v1897
      %v1899 = vpop.f32.mrb[0].mxu0
      %1900 = vmatprep.mubr.f32.mxu0 0.0
      %1901 = vmatmul.mubr.f32.gmra.mrb[0].mxu0 %v520
      %v1902 = vpop.f32.mrb[0].mxu0
      %v1903 = vadd.f32 0.0, %v1902
      %v1904 = vpop.f32.mrb[0].mxu0
      %1905 = vmatprep.mubr.f32.mxu0 0.0
      %1906 = vmatmul.mubr.f32.gmra.mrb[0].mxu0 %v522
      %v1907 = vpop.f32.mrb[0].mxu0
      %v1908 = vadd.f32 0.0, %v1907
      %v1909 = vpop.f32.mrb[0].mxu0
      %1910 = vmatprep.mubr.f32.mxu0 0.0
      %1911 = vmatmul.mubr.f32.gmra.mrb[0].mxu0 %v524
      %v1912 = vpop.f32.mrb[0].mxu0
      %v1913 = vadd.f32 0.0, %v1912
      %v1914 = vpop.f32.mrb[0].mxu0
      %1915 = vmatprep.mubr.f32.mxu0 0.0
      %1916 = vmatmul.mubr.f32.gmra.mrb[0].mxu0 %v526
      %v1917 = vpop.f32.mrb[0].mxu0
      %v1918 = vadd.f32 0.0, %v1917
      %v1919 = vpop.f32.mrb[0].mxu0
      %1920 = vmatprep.mubr.f32.mxu0 0.0
      %1921 = vmatmul.mubr.f32.gmra.mrb[0].mxu0 %v528
      %v1922 = vpop.f32.mrb[0].mxu0
      %v1923 = vadd.f32 0.0, %v1922
      %v1924 = vpop.f32.mrb[0].mxu0
      %1925 = vmatprep.mubr.f32.mxu0 0.0
      %1926 = vmatmul.mubr.f32.gmra.mrb[0].mxu0 %v530
      %v1927 = vpop.f32.mrb[0].mxu0
      %v1928 = vadd.f32 0.0, %v1927
      %v1929 = vpop.f32.mrb[0].mxu0
      %1930 = vmatprep.mubr.f32.mxu0 0.0
      %1931 = vmatmul.mubr.f32.gmra.mrb[0].mxu0 %v532
      %v1932 = vpop.f32.mrb[0].mxu0
      %v1933 = vadd.f32 0.0, %v1932
      %v1934 = vpop.f32.mrb[0].mxu0
      %1935 = vmatprep.mubr.f32.mxu0 0.0
      %1936 = vmatmul.mubr.f32.gmra.mrb[0].mxu0 %v534
      %v1937 = vpop.f32.mrb[0].mxu0
      %v1938 = vadd.f32 0.0, %v1937
      %v1939 = vpop.f32.mrb[0].mxu0
      %1940 = vmatprep.mubr.f32.mxu0 0.0
      %1941 = vmatmul.mubr.f32.gmra.mrb[0].mxu0 %v536
      %v1942 = vpop.f32.mrb[0].mxu0
      %v1943 = vadd.f32 0.0, %v1942
      %v1944 = vpop.f32.mrb[0].mxu0
      %1945 = vmatprep.mubr.f32.mxu0 0.0
      %1946 = vmatmul.mubr.f32.gmra.mrb[0].mxu0 %v538
      %v1947 = vpop.f32.mrb[0].mxu0
      %v1948 = vadd.f32 0.0, %v1947
      %v1949 = vpop.f32.mrb[0].mxu0
      %1950 = vmatprep.mubr.f32.mxu0 0.0
      %1951 = vmatmul.mubr.f32.gmra.mrb[0].mxu0 %v540
      %v1952 = vpop.f32.mrb[0].mxu0
      %v1953 = vadd.f32 0.0, %v1952
      %v1954 = vpop.f32.mrb[0].mxu0
      %1955 = vmatprep.mubr.f32.mxu0 0.0
      %1956 = vmatmul.mubr.f32.gmra.mrb[0].mxu0 %v542
      %v1957 = vpop.f32.mrb[0].mxu0
      %v1958 = vadd.f32 0.0, %v1957
      %v1959 = vpop.f32.mrb[0].mxu0
      %1960 = vmatprep.mubr.f32.mxu0 0.0
      %1961 = vmatmul.mubr.f32.gmra.mrb[0].mxu0 %v544
      %v1962 = vpop.f32.mrb[0].mxu0
      %v1963 = vadd.f32 0.0, %v1962
      %v1964 = vpop.f32.mrb[0].mxu0
      %1965 = vmatprep.mubr.f32.mxu0 0.0
      %1966 = vmatmul.mubr.f32.gmra.mrb[0].mxu0 %v546
      %v1967 = vpop.f32.mrb[0].mxu0
      %v1968 = vadd.f32 0.0, %v1967
      %v1969 = vpop.f32.mrb[0].mxu0
      %1970 = vmatprep.mubr.f32.mxu0 0.0
      %1971 = vmatmul.mubr.f32.gmra.mrb[0].mxu0 %v548
      %v1972 = vpop.f32.mrb[0].mxu0
      %v1973 = vadd.f32 0.0, %v1972
      %v1974 = vpop.f32.mrb[0].mxu0
      %1975 = vmatprep.mubr.f32.mxu0 0.0
      %1976 = vmatmul.mubr.f32.gmra.mrb[0].mxu0 %v1754
      %v1977 = vpop.f32.mrb[0].mxu0
      %v1978 = vadd.f32 0.0, %v1977
      %v1979 = vpop.f32.mrb[0].mxu0
      %1980 = vmatprep.mubr.f32.mxu0 0.0
      %1981 = vmatmul.mubr.f32.gmra.mrb[0].mxu0 %v1756
      %v1982 = vpop.f32.mrb[0].mxu0
      %v1983 = vadd.f32 0.0, %v1982
      %v1984 = vpop.f32.mrb[0].mxu0
      %1985 = vdwg.mxu0
      %v1986 = vadd.f32 %v1714, %v1828
      %v1987 = vadd.f32 %v1715, %v1833
      %v1988 = vadd.f32 %v1716, %v1838
      %v1989 = vadd.f32 %v1717, %v1843
      %v1990 = vadd.f32 %v1718, %v1848
      %v1991 = vadd.f32 %v1719, %v1853
      %v1992 = vadd.f32 %v1720, %v1858
      %v1993 = vadd.f32 %v1721, %v1863
      %v1994 = vadd.f32 %v1722, %v1868
      %v1995 = vadd.f32 %v1723, %v1873
      %v1996 = vadd.f32 %v1724, %v1878
      %v1997 = vadd.f32 %v1725, %v1883
      %v1998 = vadd.f32 %v1726, %v1888
      %v1999 = vadd.f32 %v1727, %v1893
      %v2000 = vadd.f32 %v1728, %v1898
      %v2001 = vadd.f32 %v1729, %v1903
      %v2002 = vadd.f32 %v1730, %v1908
      %v2003 = vadd.f32 %v1731, %v1913
      %v2004 = vadd.f32 %v1732, %v1918
      %v2005 = vadd.f32 %v1733, %v1923
      %v2006 = vadd.f32 %v1734, %v1928
      %v2007 = vadd.f32 %v1735, %v1933
      %v2008 = vadd.f32 %v1736, %v1938
      %v2009 = vadd.f32 %v1737, %v1943
      %v2010 = vadd.f32 %v1738, %v1948
      %v2011 = vadd.f32 %v1739, %v1953
      %v2012 = vadd.f32 %v1740, %v1958
      %v2013 = vadd.f32 %v1741, %v1963
      %v2014 = vadd.f32 %v1742, %v1968
      %v2015 = vadd.f32 %v1743, %v1973
      %v2016 = vadd.f32 %v1744, %v1978
      %v2017 = vadd.f32 %v1745, %v1983
      %v2018 = vrot.slane %v347, 2
      %v2019 = vrot.slane %v348, 2
      %v2020 = vsel %vm1071, %v2018, %v2019
      %v2021 = vrot.slane %v349, 2
      %v2022 = vsel %vm1071, %v2019, %v2021
      %s2023 = scalar_lea.vmem [#allocation2], 20
      %v2024 = vld [vmem:[%s2023] sm:$0xf]
      %v2025 = vsel %vm485, %v2020, 0
      %v2027 = vsel %vm485, %v2022, 0
      %v2030 = vsel %vm550, %v2024, 0
      %2032 = vmatprep.subr.mxu0 0.0
      %2033 = vmatpush1.msra.mxu0 %v2030
      %2034 = vmatprep.subr.mxu0 0.0
      %2035 = vmatpush1.msra.mxu0 0.0
      %2036 = vmatprep.subr.mxu0 0.0
      %2037 = vmatpush1.msra.mxu0 0.0
      %2038 = vmatprep.subr.mxu0 0.0
      %2039 = vmatpush1.msra.mxu0 0.0
      %2040 = vmatprep.subr.mxu0 0.0
      %2041 = vmatpush1.msra.mxu0 0.0
      %2042 = vmatprep.subr.mxu0 0.0
      %2043 = vmatpush1.msra.mxu0 0.0
      %2044 = vmatprep.subr.mxu0 0.0
      %2045 = vmatpush1.msra.mxu0 0.0
      %2046 = vmatprep.subr.mxu0 0.0
      %2047 = vmatpush1.msra.mxu0 0.0
      %2048 = vmatprep.subr.mxu0 0.0
      %2049 = vmatpush1.msra.mxu0 0.0
      %2050 = vmatprep.subr.mxu0 0.0
      %2051 = vmatpush1.msra.mxu0 0.0
      %2052 = vmatprep.subr.mxu0 0.0
      %2053 = vmatpush1.msra.mxu0 0.0
      %2054 = vmatprep.subr.mxu0 0.0
      %2055 = vmatpush1.msra.mxu0 0.0
      %2056 = vmatprep.subr.mxu0 0.0
      %2057 = vmatpush1.msra.mxu0 0.0
      %2058 = vmatprep.subr.mxu0 0.0
      %2059 = vmatpush1.msra.mxu0 0.0
      %2060 = vmatprep.subr.mxu0 0.0
      %2061 = vmatpush1.msra.mxu0 0.0
      %2062 = vmatprep.subr.mxu0 0.0
      %2063 = vmatpush1.msra.mxu0 0.0
      %2064 = vmatprep.subr.mxu0 0.0
      %2065 = vmatpush1.msra.mxu0 0.0
      %2066 = vmatprep.subr.mxu0 0.0
      %2067 = vmatpush1.msra.mxu0 0.0
      %2068 = vmatprep.subr.mxu0 0.0
      %2069 = vmatpush1.msra.mxu0 0.0
      %2070 = vmatprep.subr.mxu0 0.0
      %2071 = vmatpush1.msra.mxu0 0.0
      %2072 = vmatprep.subr.mxu0 0.0
      %2073 = vmatpush1.msra.mxu0 0.0
      %2074 = vmatprep.subr.mxu0 0.0
      %2075 = vmatpush1.msra.mxu0 0.0
      %2076 = vmatprep.subr.mxu0 0.0
      %2077 = vmatpush1.msra.mxu0 0.0
      %2078 = vmatprep.subr.mxu0 0.0
      %2079 = vmatpush1.msra.mxu0 0.0
      %2080 = vmatprep.subr.mxu0 0.0
      %2081 = vmatpush1.msra.mxu0 0.0
      %2082 = vmatprep.subr.mxu0 0.0
      %2083 = vmatpush1.msra.mxu0 0.0
      %2084 = vmatprep.subr.mxu0 0.0
      %2085 = vmatpush1.msra.mxu0 0.0
      %2086 = vmatprep.subr.mxu0 0.0
      %2087 = vmatpush1.msra.mxu0 0.0
      %2088 = vmatprep.subr.mxu0 0.0
      %2089 = vmatpush1.msra.mxu0 0.0
      %2090 = vmatprep.subr.mxu0 0.0
      %2091 = vmatpush1.msra.mxu0 0.0
      %2092 = vmatprep.subr.mxu0 0.0
      %2093 = vmatpush1.msra.mxu0 0.0
      %2094 = vmatprep.subr.mxu0 0.0
      %2095 = vmatpush1.msra.mxu0 0.0
      %2096 = vmatprep.mubr.f32.mxu0 0.0
      %2097 = vmatmul.mubr.f32.gmra.mrb[0].mxu0 %v1158
      %v2098 = vpop.f32.mrb[0].mxu0
      %v2099 = vadd.f32 0.0, %v2098
      %v2100 = vpop.f32.mrb[0].mxu0
      %2101 = vmatprep.mubr.f32.mxu0 0.0
      %2102 = vmatmul.mubr.f32.gmra.mrb[0].mxu0 %v1160
      %v2103 = vpop.f32.mrb[0].mxu0
      %v2104 = vadd.f32 0.0, %v2103
      %v2105 = vpop.f32.mrb[0].mxu0
      %2106 = vmatprep.mubr.f32.mxu0 0.0
      %2107 = vmatmul.mubr.f32.gmra.mrb[0].mxu0 %v1162
      %v2108 = vpop.f32.mrb[0].mxu0
      %v2109 = vadd.f32 0.0, %v2108
      %v2110 = vpop.f32.mrb[0].mxu0
      %2111 = vmatprep.mubr.f32.mxu0 0.0
      %2112 = vmatmul.mubr.f32.gmra.mrb[0].mxu0 %v1164
      %v2113 = vpop.f32.mrb[0].mxu0
      %v2114 = vadd.f32 0.0, %v2113
      %v2115 = vpop.f32.mrb[0].mxu0
      %2116 = vmatprep.mubr.f32.mxu0 0.0
      %2117 = vmatmul.mubr.f32.gmra.mrb[0].mxu0 %v1166
      %v2118 = vpop.f32.mrb[0].mxu0
      %v2119 = vadd.f32 0.0, %v2118
      %v2120 = vpop.f32.mrb[0].mxu0
      %2121 = vmatprep.mubr.f32.mxu0 0.0
      %2122 = vmatmul.mubr.f32.gmra.mrb[0].mxu0 %v1168
      %v2123 = vpop.f32.mrb[0].mxu0
      %v2124 = vadd.f32 0.0, %v2123
      %v2125 = vpop.f32.mrb[0].mxu0
      %2126 = vmatprep.mubr.f32.mxu0 0.0
      %2127 = vmatmul.mubr.f32.gmra.mrb[0].mxu0 %v1170
      %v2128 = vpop.f32.mrb[0].mxu0
      %v2129 = vadd.f32 0.0, %v2128
      %v2130 = vpop.f32.mrb[0].mxu0
      %2131 = vmatprep.mubr.f32.mxu0 0.0
      %2132 = vmatmul.mubr.f32.gmra.mrb[0].mxu0 %v1172
      %v2133 = vpop.f32.mrb[0].mxu0
      %v2134 = vadd.f32 0.0, %v2133
      %v2135 = vpop.f32.mrb[0].mxu0
      %2136 = vmatprep.mubr.f32.mxu0 0.0
      %2137 = vmatmul.mubr.f32.gmra.mrb[0].mxu0 %v1174
      %v2138 = vpop.f32.mrb[0].mxu0
      %v2139 = vadd.f32 0.0, %v2138
      %v2140 = vpop.f32.mrb[0].mxu0
      %2141 = vmatprep.mubr.f32.mxu0 0.0
      %2142 = vmatmul.mubr.f32.gmra.mrb[0].mxu0 %v1176
      %v2143 = vpop.f32.mrb[0].mxu0
      %v2144 = vadd.f32 0.0, %v2143
      %v2145 = vpop.f32.mrb[0].mxu0
      %2146 = vmatprep.mubr.f32.mxu0 0.0
      %2147 = vmatmul.mubr.f32.gmra.mrb[0].mxu0 %v1178
      %v2148 = vpop.f32.mrb[0].mxu0
      %v2149 = vadd.f32 0.0, %v2148
      %v2150 = vpop.f32.mrb[0].mxu0
      %2151 = vmatprep.mubr.f32.mxu0 0.0
      %2152 = vmatmul.mubr.f32.gmra.mrb[0].mxu0 %v1180
      %v2153 = vpop.f32.mrb[0].mxu0
      %v2154 = vadd.f32 0.0, %v2153
      %v2155 = vpop.f32.mrb[0].mxu0
      %2156 = vmatprep.mubr.f32.mxu0 0.0
      %2157 = vmatmul.mubr.f32.gmra.mrb[0].mxu0 %v1182
      %v2158 = vpop.f32.mrb[0].mxu0
      %v2159 = vadd.f32 0.0, %v2158
      %v2160 = vpop.f32.mrb[0].mxu0
      %2161 = vmatprep.mubr.f32.mxu0 0.0
      %2162 = vmatmul.mubr.f32.gmra.mrb[0].mxu0 %v1184
      %v2163 = vpop.f32.mrb[0].mxu0
      %v2164 = vadd.f32 0.0, %v2163
      %v2165 = vpop.f32.mrb[0].mxu0
      %2166 = vmatprep.mubr.f32.mxu0 0.0
      %2167 = vmatmul.mubr.f32.gmra.mrb[0].mxu0 %v1186
      %v2168 = vpop.f32.mrb[0].mxu0
      %v2169 = vadd.f32 0.0, %v2168
      %v2170 = vpop.f32.mrb[0].mxu0
      %2171 = vmatprep.mubr.f32.mxu0 0.0
      %2172 = vmatmul.mubr.f32.gmra.mrb[0].mxu0 %v1188
      %v2173 = vpop.f32.mrb[0].mxu0
      %v2174 = vadd.f32 0.0, %v2173
      %v2175 = vpop.f32.mrb[0].mxu0
      %2176 = vmatprep.mubr.f32.mxu0 0.0
      %2177 = vmatmul.mubr.f32.gmra.mrb[0].mxu0 %v1190
      %v2178 = vpop.f32.mrb[0].mxu0
      %v2179 = vadd.f32 0.0, %v2178
      %v2180 = vpop.f32.mrb[0].mxu0
      %2181 = vmatprep.mubr.f32.mxu0 0.0
      %2182 = vmatmul.mubr.f32.gmra.mrb[0].mxu0 %v1192
      %v2183 = vpop.f32.mrb[0].mxu0
      %v2184 = vadd.f32 0.0, %v2183
      %v2185 = vpop.f32.mrb[0].mxu0
      %2186 = vmatprep.mubr.f32.mxu0 0.0
      %2187 = vmatmul.mubr.f32.gmra.mrb[0].mxu0 %v1194
      %v2188 = vpop.f32.mrb[0].mxu0
      %v2189 = vadd.f32 0.0, %v2188
      %v2190 = vpop.f32.mrb[0].mxu0
      %2191 = vmatprep.mubr.f32.mxu0 0.0
      %2192 = vmatmul.mubr.f32.gmra.mrb[0].mxu0 %v1196
      %v2193 = vpop.f32.mrb[0].mxu0
      %v2194 = vadd.f32 0.0, %v2193
      %v2195 = vpop.f32.mrb[0].mxu0
      %2196 = vmatprep.mubr.f32.mxu0 0.0
      %2197 = vmatmul.mubr.f32.gmra.mrb[0].mxu0 %v1198
      %v2198 = vpop.f32.mrb[0].mxu0
      %v2199 = vadd.f32 0.0, %v2198
      %v2200 = vpop.f32.mrb[0].mxu0
      %2201 = vmatprep.mubr.f32.mxu0 0.0
      %2202 = vmatmul.mubr.f32.gmra.mrb[0].mxu0 %v1200
      %v2203 = vpop.f32.mrb[0].mxu0
      %v2204 = vadd.f32 0.0, %v2203
      %v2205 = vpop.f32.mrb[0].mxu0
      %2206 = vmatprep.mubr.f32.mxu0 0.0
      %2207 = vmatmul.mubr.f32.gmra.mrb[0].mxu0 %v1202
      %v2208 = vpop.f32.mrb[0].mxu0
      %v2209 = vadd.f32 0.0, %v2208
      %v2210 = vpop.f32.mrb[0].mxu0
      %2211 = vmatprep.mubr.f32.mxu0 0.0
      %2212 = vmatmul.mubr.f32.gmra.mrb[0].mxu0 %v1204
      %v2213 = vpop.f32.mrb[0].mxu0
      %v2214 = vadd.f32 0.0, %v2213
      %v2215 = vpop.f32.mrb[0].mxu0
      %2216 = vmatprep.mubr.f32.mxu0 0.0
      %2217 = vmatmul.mubr.f32.gmra.mrb[0].mxu0 %v1206
      %v2218 = vpop.f32.mrb[0].mxu0
      %v2219 = vadd.f32 0.0, %v2218
      %v2220 = vpop.f32.mrb[0].mxu0
      %2221 = vmatprep.mubr.f32.mxu0 0.0
      %2222 = vmatmul.mubr.f32.gmra.mrb[0].mxu0 %v1208
      %v2223 = vpop.f32.mrb[0].mxu0
      %v2224 = vadd.f32 0.0, %v2223
      %v2225 = vpop.f32.mrb[0].mxu0
      %2226 = vmatprep.mubr.f32.mxu0 0.0
      %2227 = vmatmul.mubr.f32.gmra.mrb[0].mxu0 %v1210
      %v2228 = vpop.f32.mrb[0].mxu0
      %v2229 = vadd.f32 0.0, %v2228
      %v2230 = vpop.f32.mrb[0].mxu0
      %2231 = vmatprep.mubr.f32.mxu0 0.0
      %2232 = vmatmul.mubr.f32.gmra.mrb[0].mxu0 %v1212
      %v2233 = vpop.f32.mrb[0].mxu0
      %v2234 = vadd.f32 0.0, %v2233
      %v2235 = vpop.f32.mrb[0].mxu0
      %2236 = vmatprep.mubr.f32.mxu0 0.0
      %2237 = vmatmul.mubr.f32.gmra.mrb[0].mxu0 %v1214
      %v2238 = vpop.f32.mrb[0].mxu0
      %v2239 = vadd.f32 0.0, %v2238
      %v2240 = vpop.f32.mrb[0].mxu0
      %2241 = vmatprep.mubr.f32.mxu0 0.0
      %2242 = vmatmul.mubr.f32.gmra.mrb[0].mxu0 %v1216
      %v2243 = vpop.f32.mrb[0].mxu0
      %v2244 = vadd.f32 0.0, %v2243
      %v2245 = vpop.f32.mrb[0].mxu0
      %2246 = vmatprep.mubr.f32.mxu0 0.0
      %2247 = vmatmul.mubr.f32.gmra.mrb[0].mxu0 %v2025
      %v2248 = vpop.f32.mrb[0].mxu0
      %v2249 = vadd.f32 0.0, %v2248
      %v2250 = vpop.f32.mrb[0].mxu0
      %2251 = vmatprep.mubr.f32.mxu0 0.0
      %2252 = vmatmul.mubr.f32.gmra.mrb[0].mxu0 %v2027
      %v2253 = vpop.f32.mrb[0].mxu0
      %v2254 = vadd.f32 0.0, %v2253
      %v2255 = vpop.f32.mrb[0].mxu0
      %2256 = vdwg.mxu0
      %v2257 = vadd.f32 %v1986, %v2099
      %v2258 = vadd.f32 %v1987, %v2104
      %v2259 = vadd.f32 %v1988, %v2109
      %v2260 = vadd.f32 %v1989, %v2114
      %v2261 = vadd.f32 %v1990, %v2119
      %v2262 = vadd.f32 %v1991, %v2124
      %v2263 = vadd.f32 %v1992, %v2129
      %v2264 = vadd.f32 %v1993, %v2134
      %v2265 = vadd.f32 %v1994, %v2139
      %v2266 = vadd.f32 %v1995, %v2144
      %v2267 = vadd.f32 %v1996, %v2149
      %v2268 = vadd.f32 %v1997, %v2154
      %v2269 = vadd.f32 %v1998, %v2159
      %v2270 = vadd.f32 %v1999, %v2164
      %v2271 = vadd.f32 %v2000, %v2169
      %v2272 = vadd.f32 %v2001, %v2174
      %v2273 = vadd.f32 %v2002, %v2179
      %v2274 = vadd.f32 %v2003, %v2184
      %v2275 = vadd.f32 %v2004, %v2189
      %v2276 = vadd.f32 %v2005, %v2194
      %v2277 = vadd.f32 %v2006, %v2199
      %v2278 = vadd.f32 %v2007, %v2204
      %v2279 = vadd.f32 %v2008, %v2209
      %v2280 = vadd.f32 %v2009, %v2214
      %v2281 = vadd.f32 %v2010, %v2219
      %v2282 = vadd.f32 %v2011, %v2224
      %v2283 = vadd.f32 %v2012, %v2229
      %v2284 = vadd.f32 %v2013, %v2234
      %v2285 = vadd.f32 %v2014, %v2239
      %v2286 = vadd.f32 %v2015, %v2244
      %v2287 = vadd.f32 %v2016, %v2249
      %v2288 = vadd.f32 %v2017, %v2254
      %s2289 = scalar_lea.vmem [#allocation2], 24
      %v2290 = vld [vmem:[%s2289] sm:$0xf]
      %v2292 = vsel %vm485, %v350, 0
      %v2295 = vsel %vm485, %v351, 0
      %v2298 = vsel %vm550, %v2290, 0
      %2300 = vmatprep.subr.mxu0 0.0
      %2301 = vmatpush1.msra.mxu0 %v2298
      %2302 = vmatprep.subr.mxu0 0.0
      %2303 = vmatpush1.msra.mxu0 0.0
      %2304 = vmatprep.subr.mxu0 0.0
      %2305 = vmatpush1.msra.mxu0 0.0
      %2306 = vmatprep.subr.mxu0 0.0
      %2307 = vmatpush1.msra.mxu0 0.0
      %2308 = vmatprep.subr.mxu0 0.0
      %2309 = vmatpush1.msra.mxu0 0.0
      %2310 = vmatprep.subr.mxu0 0.0
      %2311 = vmatpush1.msra.mxu0 0.0
      %2312 = vmatprep.subr.mxu0 0.0
      %2313 = vmatpush1.msra.mxu0 0.0
      %2314 = vmatprep.subr.mxu0 0.0
      %2315 = vmatpush1.msra.mxu0 0.0
      %2316 = vmatprep.subr.mxu0 0.0
      %2317 = vmatpush1.msra.mxu0 0.0
      %2318 = vmatprep.subr.mxu0 0.0
      %2319 = vmatpush1.msra.mxu0 0.0
      %2320 = vmatprep.subr.mxu0 0.0
      %2321 = vmatpush1.msra.mxu0 0.0
      %2322 = vmatprep.subr.mxu0 0.0
      %2323 = vmatpush1.msra.mxu0 0.0
      %2324 = vmatprep.subr.mxu0 0.0
      %2325 = vmatpush1.msra.mxu0 0.0
      %2326 = vmatprep.subr.mxu0 0.0
      %2327 = vmatpush1.msra.mxu0 0.0
      %2328 = vmatprep.subr.mxu0 0.0
      %2329 = vmatpush1.msra.mxu0 0.0
      %2330 = vmatprep.subr.mxu0 0.0
      %2331 = vmatpush1.msra.mxu0 0.0
      %2332 = vmatprep.subr.mxu0 0.0
      %2333 = vmatpush1.msra.mxu0 0.0
      %2334 = vmatprep.subr.mxu0 0.0
      %2335 = vmatpush1.msra.mxu0 0.0
      %2336 = vmatprep.subr.mxu0 0.0
      %2337 = vmatpush1.msra.mxu0 0.0
      %2338 = vmatprep.subr.mxu0 0.0
      %2339 = vmatpush1.msra.mxu0 0.0
      %2340 = vmatprep.subr.mxu0 0.0
      %2341 = vmatpush1.msra.mxu0 0.0
      %2342 = vmatprep.subr.mxu0 0.0
      %2343 = vmatpush1.msra.mxu0 0.0
      %2344 = vmatprep.subr.mxu0 0.0
      %2345 = vmatpush1.msra.mxu0 0.0
      %2346 = vmatprep.subr.mxu0 0.0
      %2347 = vmatpush1.msra.mxu0 0.0
      %2348 = vmatprep.subr.mxu0 0.0
      %2349 = vmatpush1.msra.mxu0 0.0
      %2350 = vmatprep.subr.mxu0 0.0
      %2351 = vmatpush1.msra.mxu0 0.0
      %2352 = vmatprep.subr.mxu0 0.0
      %2353 = vmatpush1.msra.mxu0 0.0
      %2354 = vmatprep.subr.mxu0 0.0
      %2355 = vmatpush1.msra.mxu0 0.0
      %2356 = vmatprep.subr.mxu0 0.0
      %2357 = vmatpush1.msra.mxu0 0.0
      %2358 = vmatprep.subr.mxu0 0.0
      %2359 = vmatpush1.msra.mxu0 0.0
      %2360 = vmatprep.subr.mxu0 0.0
      %2361 = vmatpush1.msra.mxu0 0.0
      %2362 = vmatprep.subr.mxu0 0.0
      %2363 = vmatpush1.msra.mxu0 0.0
      %2364 = vmatprep.mubr.f32.mxu0 0.0
      %2365 = vmatmul.mubr.f32.gmra.mrb[0].mxu0 %v787
      %v2366 = vpop.f32.mrb[0].mxu0
      %v2367 = vadd.f32 0.0, %v2366
      %v2368 = vpop.f32.mrb[0].mxu0
      %2369 = vmatprep.mubr.f32.mxu0 0.0
      %2370 = vmatmul.mubr.f32.gmra.mrb[0].mxu0 %v789
      %v2371 = vpop.f32.mrb[0].mxu0
      %v2372 = vadd.f32 0.0, %v2371
      %v2373 = vpop.f32.mrb[0].mxu0
      %2374 = vmatprep.mubr.f32.mxu0 0.0
      %2375 = vmatmul.mubr.f32.gmra.mrb[0].mxu0 %v791
      %v2376 = vpop.f32.mrb[0].mxu0
      %v2377 = vadd.f32 0.0, %v2376
      %v2378 = vpop.f32.mrb[0].mxu0
      %2379 = vmatprep.mubr.f32.mxu0 0.0
      %2380 = vmatmul.mubr.f32.gmra.mrb[0].mxu0 %v793
      %v2381 = vpop.f32.mrb[0].mxu0
      %v2382 = vadd.f32 0.0, %v2381
      %v2383 = vpop.f32.mrb[0].mxu0
      %2384 = vmatprep.mubr.f32.mxu0 0.0
      %2385 = vmatmul.mubr.f32.gmra.mrb[0].mxu0 %v795
      %v2386 = vpop.f32.mrb[0].mxu0
      %v2387 = vadd.f32 0.0, %v2386
      %v2388 = vpop.f32.mrb[0].mxu0
      %2389 = vmatprep.mubr.f32.mxu0 0.0
      %2390 = vmatmul.mubr.f32.gmra.mrb[0].mxu0 %v797
      %v2391 = vpop.f32.mrb[0].mxu0
      %v2392 = vadd.f32 0.0, %v2391
      %v2393 = vpop.f32.mrb[0].mxu0
      %2394 = vmatprep.mubr.f32.mxu0 0.0
      %2395 = vmatmul.mubr.f32.gmra.mrb[0].mxu0 %v799
      %v2396 = vpop.f32.mrb[0].mxu0
      %v2397 = vadd.f32 0.0, %v2396
      %v2398 = vpop.f32.mrb[0].mxu0
      %2399 = vmatprep.mubr.f32.mxu0 0.0
      %2400 = vmatmul.mubr.f32.gmra.mrb[0].mxu0 %v801
      %v2401 = vpop.f32.mrb[0].mxu0
      %v2402 = vadd.f32 0.0, %v2401
      %v2403 = vpop.f32.mrb[0].mxu0
      %2404 = vmatprep.mubr.f32.mxu0 0.0
      %2405 = vmatmul.mubr.f32.gmra.mrb[0].mxu0 %v803
      %v2406 = vpop.f32.mrb[0].mxu0
      %v2407 = vadd.f32 0.0, %v2406
      %v2408 = vpop.f32.mrb[0].mxu0
      %2409 = vmatprep.mubr.f32.mxu0 0.0
      %2410 = vmatmul.mubr.f32.gmra.mrb[0].mxu0 %v805
      %v2411 = vpop.f32.mrb[0].mxu0
      %v2412 = vadd.f32 0.0, %v2411
      %v2413 = vpop.f32.mrb[0].mxu0
      %2414 = vmatprep.mubr.f32.mxu0 0.0
      %2415 = vmatmul.mubr.f32.gmra.mrb[0].mxu0 %v807
      %v2416 = vpop.f32.mrb[0].mxu0
      %v2417 = vadd.f32 0.0, %v2416
      %v2418 = vpop.f32.mrb[0].mxu0
      %2419 = vmatprep.mubr.f32.mxu0 0.0
      %2420 = vmatmul.mubr.f32.gmra.mrb[0].mxu0 %v809
      %v2421 = vpop.f32.mrb[0].mxu0
      %v2422 = vadd.f32 0.0, %v2421
      %v2423 = vpop.f32.mrb[0].mxu0
      %2424 = vmatprep.mubr.f32.mxu0 0.0
      %2425 = vmatmul.mubr.f32.gmra.mrb[0].mxu0 %v811
      %v2426 = vpop.f32.mrb[0].mxu0
      %v2427 = vadd.f32 0.0, %v2426
      %v2428 = vpop.f32.mrb[0].mxu0
      %2429 = vmatprep.mubr.f32.mxu0 0.0
      %2430 = vmatmul.mubr.f32.gmra.mrb[0].mxu0 %v813
      %v2431 = vpop.f32.mrb[0].mxu0
      %v2432 = vadd.f32 0.0, %v2431
      %v2433 = vpop.f32.mrb[0].mxu0
      %2434 = vmatprep.mubr.f32.mxu0 0.0
      %2435 = vmatmul.mubr.f32.gmra.mrb[0].mxu0 %v815
      %v2436 = vpop.f32.mrb[0].mxu0
      %v2437 = vadd.f32 0.0, %v2436
      %v2438 = vpop.f32.mrb[0].mxu0
      %2439 = vmatprep.mubr.f32.mxu0 0.0
      %2440 = vmatmul.mubr.f32.gmra.mrb[0].mxu0 %v817
      %v2441 = vpop.f32.mrb[0].mxu0
      %v2442 = vadd.f32 0.0, %v2441
      %v2443 = vpop.f32.mrb[0].mxu0
      %2444 = vmatprep.mubr.f32.mxu0 0.0
      %2445 = vmatmul.mubr.f32.gmra.mrb[0].mxu0 %v819
      %v2446 = vpop.f32.mrb[0].mxu0
      %v2447 = vadd.f32 0.0, %v2446
      %v2448 = vpop.f32.mrb[0].mxu0
      %2449 = vmatprep.mubr.f32.mxu0 0.0
      %2450 = vmatmul.mubr.f32.gmra.mrb[0].mxu0 %v821
      %v2451 = vpop.f32.mrb[0].mxu0
      %v2452 = vadd.f32 0.0, %v2451
      %v2453 = vpop.f32.mrb[0].mxu0
      %2454 = vmatprep.mubr.f32.mxu0 0.0
      %2455 = vmatmul.mubr.f32.gmra.mrb[0].mxu0 %v823
      %v2456 = vpop.f32.mrb[0].mxu0
      %v2457 = vadd.f32 0.0, %v2456
      %v2458 = vpop.f32.mrb[0].mxu0
      %2459 = vmatprep.mubr.f32.mxu0 0.0
      %2460 = vmatmul.mubr.f32.gmra.mrb[0].mxu0 %v825
      %v2461 = vpop.f32.mrb[0].mxu0
      %v2462 = vadd.f32 0.0, %v2461
      %v2463 = vpop.f32.mrb[0].mxu0
      %2464 = vmatprep.mubr.f32.mxu0 0.0
      %2465 = vmatmul.mubr.f32.gmra.mrb[0].mxu0 %v827
      %v2466 = vpop.f32.mrb[0].mxu0
      %v2467 = vadd.f32 0.0, %v2466
      %v2468 = vpop.f32.mrb[0].mxu0
      %2469 = vmatprep.mubr.f32.mxu0 0.0
      %2470 = vmatmul.mubr.f32.gmra.mrb[0].mxu0 %v829
      %v2471 = vpop.f32.mrb[0].mxu0
      %v2472 = vadd.f32 0.0, %v2471
      %v2473 = vpop.f32.mrb[0].mxu0
      %2474 = vmatprep.mubr.f32.mxu0 0.0
      %2475 = vmatmul.mubr.f32.gmra.mrb[0].mxu0 %v831
      %v2476 = vpop.f32.mrb[0].mxu0
      %v2477 = vadd.f32 0.0, %v2476
      %v2478 = vpop.f32.mrb[0].mxu0
      %2479 = vmatprep.mubr.f32.mxu0 0.0
      %2480 = vmatmul.mubr.f32.gmra.mrb[0].mxu0 %v833
      %v2481 = vpop.f32.mrb[0].mxu0
      %v2482 = vadd.f32 0.0, %v2481
      %v2483 = vpop.f32.mrb[0].mxu0
      %2484 = vmatprep.mubr.f32.mxu0 0.0
      %2485 = vmatmul.mubr.f32.gmra.mrb[0].mxu0 %v835
      %v2486 = vpop.f32.mrb[0].mxu0
      %v2487 = vadd.f32 0.0, %v2486
      %v2488 = vpop.f32.mrb[0].mxu0
      %2489 = vmatprep.mubr.f32.mxu0 0.0
      %2490 = vmatmul.mubr.f32.gmra.mrb[0].mxu0 %v837
      %v2491 = vpop.f32.mrb[0].mxu0
      %v2492 = vadd.f32 0.0, %v2491
      %v2493 = vpop.f32.mrb[0].mxu0
      %2494 = vmatprep.mubr.f32.mxu0 0.0
      %2495 = vmatmul.mubr.f32.gmra.mrb[0].mxu0 %v839
      %v2496 = vpop.f32.mrb[0].mxu0
      %v2497 = vadd.f32 0.0, %v2496
      %v2498 = vpop.f32.mrb[0].mxu0
      %2499 = vmatprep.mubr.f32.mxu0 0.0
      %2500 = vmatmul.mubr.f32.gmra.mrb[0].mxu0 %v841
      %v2501 = vpop.f32.mrb[0].mxu0
      %v2502 = vadd.f32 0.0, %v2501
      %v2503 = vpop.f32.mrb[0].mxu0
      %2504 = vmatprep.mubr.f32.mxu0 0.0
      %2505 = vmatmul.mubr.f32.gmra.mrb[0].mxu0 %v1481
      %v2506 = vpop.f32.mrb[0].mxu0
      %v2507 = vadd.f32 0.0, %v2506
      %v2508 = vpop.f32.mrb[0].mxu0
      %2509 = vmatprep.mubr.f32.mxu0 0.0
      %2510 = vmatmul.mubr.f32.gmra.mrb[0].mxu0 %v1484
      %v2511 = vpop.f32.mrb[0].mxu0
      %v2512 = vadd.f32 0.0, %v2511
      %v2513 = vpop.f32.mrb[0].mxu0
      %2514 = vmatprep.mubr.f32.mxu0 0.0
      %2515 = vmatmul.mubr.f32.gmra.mrb[0].mxu0 %v2292
      %v2516 = vpop.f32.mrb[0].mxu0
      %v2517 = vadd.f32 0.0, %v2516
      %v2518 = vpop.f32.mrb[0].mxu0
      %2519 = vmatprep.mubr.f32.mxu0 0.0
      %2520 = vmatmul.mubr.f32.gmra.mrb[0].mxu0 %v2295
      %v2521 = vpop.f32.mrb[0].mxu0
      %v2522 = vadd.f32 0.0, %v2521
      %v2523 = vpop.f32.mrb[0].mxu0
      %2524 = vdwg.mxu0
      %v2525 = vadd.f32 %v2257, %v2367
      %v2526 = vadd.f32 %v2258, %v2372
      %v2527 = vadd.f32 %v2259, %v2377
      %v2528 = vadd.f32 %v2260, %v2382
      %v2529 = vadd.f32 %v2261, %v2387
      %v2530 = vadd.f32 %v2262, %v2392
      %v2531 = vadd.f32 %v2263, %v2397
      %v2532 = vadd.f32 %v2264, %v2402
      %v2533 = vadd.f32 %v2265, %v2407
      %v2534 = vadd.f32 %v2266, %v2412
      %v2535 = vadd.f32 %v2267, %v2417
      %v2536 = vadd.f32 %v2268, %v2422
      %v2537 = vadd.f32 %v2269, %v2427
      %v2538 = vadd.f32 %v2270, %v2432
      %v2539 = vadd.f32 %v2271, %v2437
      %v2540 = vadd.f32 %v2272, %v2442
      %v2541 = vadd.f32 %v2273, %v2447
      %v2542 = vadd.f32 %v2274, %v2452
      %v2543 = vadd.f32 %v2275, %v2457
      %v2544 = vadd.f32 %v2276, %v2462
      %v2545 = vadd.f32 %v2277, %v2467
      %v2546 = vadd.f32 %v2278, %v2472
      %v2547 = vadd.f32 %v2279, %v2477
      %v2548 = vadd.f32 %v2280, %v2482
      %v2549 = vadd.f32 %v2281, %v2487
      %v2550 = vadd.f32 %v2282, %v2492
      %v2551 = vadd.f32 %v2283, %v2497
      %v2552 = vadd.f32 %v2284, %v2502
      %v2553 = vadd.f32 %v2285, %v2507
      %v2554 = vadd.f32 %v2286, %v2512
      %v2555 = vadd.f32 %v2287, %v2517
      %v2556 = vadd.f32 %v2288, %v2522
      %v2558 = vrot.slane %v350, 1
      %v2559 = vrot.slane %v351, 1
      %v2560 = vsel %vm402, %v2558, %v2559
      %v2561 = vrot.slane %v352, 1
      %v2562 = vsel %vm402, %v2559, %v2561
      %s2563 = scalar_lea.vmem [#allocation2], 28
      %v2564 = vld [vmem:[%s2563] sm:$0xf]
      %v2565 = vsel %vm485, %v2560, 0
      %v2567 = vsel %vm485, %v2562, 0
      %v2570 = vsel %vm550, %v2564, 0
      %2572 = vmatprep.subr.mxu0 0.0
      %2573 = vmatpush1.msra.mxu0 %v2570
      %2574 = vmatprep.subr.mxu0 0.0
      %2575 = vmatpush1.msra.mxu0 0.0
      %2576 = vmatprep.subr.mxu0 0.0
      %2577 = vmatpush1.msra.mxu0 0.0
      %2578 = vmatprep.subr.mxu0 0.0
      %2579 = vmatpush1.msra.mxu0 0.0
      %2580 = vmatprep.subr.mxu0 0.0
      %2581 = vmatpush1.msra.mxu0 0.0
      %2582 = vmatprep.subr.mxu0 0.0
      %2583 = vmatpush1.msra.mxu0 0.0
      %2584 = vmatprep.subr.mxu0 0.0
      %2585 = vmatpush1.msra.mxu0 0.0
      %2586 = vmatprep.subr.mxu0 0.0
      %2587 = vmatpush1.msra.mxu0 0.0
      %2588 = vmatprep.subr.mxu0 0.0
      %2589 = vmatpush1.msra.mxu0 0.0
      %2590 = vmatprep.subr.mxu0 0.0
      %2591 = vmatpush1.msra.mxu0 0.0
      %2592 = vmatprep.subr.mxu0 0.0
      %2593 = vmatpush1.msra.mxu0 0.0
      %2594 = vmatprep.subr.mxu0 0.0
      %2595 = vmatpush1.msra.mxu0 0.0
      %2596 = vmatprep.subr.mxu0 0.0
      %2597 = vmatpush1.msra.mxu0 0.0
      %2598 = vmatprep.subr.mxu0 0.0
      %2599 = vmatpush1.msra.mxu0 0.0
      %2600 = vmatprep.subr.mxu0 0.0
      %2601 = vmatpush1.msra.mxu0 0.0
      %2602 = vmatprep.subr.mxu0 0.0
      %2603 = vmatpush1.msra.mxu0 0.0
      %2604 = vmatprep.subr.mxu0 0.0
      %2605 = vmatpush1.msra.mxu0 0.0
      %2606 = vmatprep.subr.mxu0 0.0
      %2607 = vmatpush1.msra.mxu0 0.0
      %2608 = vmatprep.subr.mxu0 0.0
      %2609 = vmatpush1.msra.mxu0 0.0
      %2610 = vmatprep.subr.mxu0 0.0
      %2611 = vmatpush1.msra.mxu0 0.0
      %2612 = vmatprep.subr.mxu0 0.0
      %2613 = vmatpush1.msra.mxu0 0.0
      %2614 = vmatprep.subr.mxu0 0.0
      %2615 = vmatpush1.msra.mxu0 0.0
      %2616 = vmatprep.subr.mxu0 0.0
      %2617 = vmatpush1.msra.mxu0 0.0
      %2618 = vmatprep.subr.mxu0 0.0
      %2619 = vmatpush1.msra.mxu0 0.0
      %2620 = vmatprep.subr.mxu0 0.0
      %2621 = vmatpush1.msra.mxu0 0.0
      %2622 = vmatprep.subr.mxu0 0.0
      %2623 = vmatpush1.msra.mxu0 0.0
      %2624 = vmatprep.subr.mxu0 0.0
      %2625 = vmatpush1.msra.mxu0 0.0
      %2626 = vmatprep.subr.mxu0 0.0
      %2627 = vmatpush1.msra.mxu0 0.0
      %2628 = vmatprep.subr.mxu0 0.0
      %2629 = vmatpush1.msra.mxu0 0.0
      %2630 = vmatprep.subr.mxu0 0.0
      %2631 = vmatpush1.msra.mxu0 0.0
      %2632 = vmatprep.subr.mxu0 0.0
      %2633 = vmatpush1.msra.mxu0 0.0
      %2634 = vmatprep.subr.mxu0 0.0
      %2635 = vmatpush1.msra.mxu0 0.0
      %2636 = vmatprep.mubr.f32.mxu0 0.0
      %2637 = vmatmul.mubr.f32.gmra.mrb[0].mxu0 %v494
      %v2638 = vpop.f32.mrb[0].mxu0
      %v2639 = vadd.f32 0.0, %v2638
      %v2640 = vpop.f32.mrb[0].mxu0
      %2641 = vmatprep.mubr.f32.mxu0 0.0
      %2642 = vmatmul.mubr.f32.gmra.mrb[0].mxu0 %v496
      %v2643 = vpop.f32.mrb[0].mxu0
      %v2644 = vadd.f32 0.0, %v2643
      %v2645 = vpop.f32.mrb[0].mxu0
      %2646 = vmatprep.mubr.f32.mxu0 0.0
      %2647 = vmatmul.mubr.f32.gmra.mrb[0].mxu0 %v498
      %v2648 = vpop.f32.mrb[0].mxu0
      %v2649 = vadd.f32 0.0, %v2648
      %v2650 = vpop.f32.mrb[0].mxu0
      %2651 = vmatprep.mubr.f32.mxu0 0.0
      %2652 = vmatmul.mubr.f32.gmra.mrb[0].mxu0 %v500
      %v2653 = vpop.f32.mrb[0].mxu0
      %v2654 = vadd.f32 0.0, %v2653
      %v2655 = vpop.f32.mrb[0].mxu0
      %2656 = vmatprep.mubr.f32.mxu0 0.0
      %2657 = vmatmul.mubr.f32.gmra.mrb[0].mxu0 %v502
      %v2658 = vpop.f32.mrb[0].mxu0
      %v2659 = vadd.f32 0.0, %v2658
      %v2660 = vpop.f32.mrb[0].mxu0
      %2661 = vmatprep.mubr.f32.mxu0 0.0
      %2662 = vmatmul.mubr.f32.gmra.mrb[0].mxu0 %v504
      %v2663 = vpop.f32.mrb[0].mxu0
      %v2664 = vadd.f32 0.0, %v2663
      %v2665 = vpop.f32.mrb[0].mxu0
      %2666 = vmatprep.mubr.f32.mxu0 0.0
      %2667 = vmatmul.mubr.f32.gmra.mrb[0].mxu0 %v506
      %v2668 = vpop.f32.mrb[0].mxu0
      %v2669 = vadd.f32 0.0, %v2668
      %v2670 = vpop.f32.mrb[0].mxu0
      %2671 = vmatprep.mubr.f32.mxu0 0.0
      %2672 = vmatmul.mubr.f32.gmra.mrb[0].mxu0 %v508
      %v2673 = vpop.f32.mrb[0].mxu0
      %v2674 = vadd.f32 0.0, %v2673
      %v2675 = vpop.f32.mrb[0].mxu0
      %2676 = vmatprep.mubr.f32.mxu0 0.0
      %2677 = vmatmul.mubr.f32.gmra.mrb[0].mxu0 %v510
      %v2678 = vpop.f32.mrb[0].mxu0
      %v2679 = vadd.f32 0.0, %v2678
      %v2680 = vpop.f32.mrb[0].mxu0
      %2681 = vmatprep.mubr.f32.mxu0 0.0
      %2682 = vmatmul.mubr.f32.gmra.mrb[0].mxu0 %v512
      %v2683 = vpop.f32.mrb[0].mxu0
      %v2684 = vadd.f32 0.0, %v2683
      %v2685 = vpop.f32.mrb[0].mxu0
      %2686 = vmatprep.mubr.f32.mxu0 0.0
      %2687 = vmatmul.mubr.f32.gmra.mrb[0].mxu0 %v514
      %v2688 = vpop.f32.mrb[0].mxu0
      %v2689 = vadd.f32 0.0, %v2688
      %v2690 = vpop.f32.mrb[0].mxu0
      %2691 = vmatprep.mubr.f32.mxu0 0.0
      %2692 = vmatmul.mubr.f32.gmra.mrb[0].mxu0 %v516
      %v2693 = vpop.f32.mrb[0].mxu0
      %v2694 = vadd.f32 0.0, %v2693
      %v2695 = vpop.f32.mrb[0].mxu0
      %2696 = vmatprep.mubr.f32.mxu0 0.0
      %2697 = vmatmul.mubr.f32.gmra.mrb[0].mxu0 %v518
      %v2698 = vpop.f32.mrb[0].mxu0
      %v2699 = vadd.f32 0.0, %v2698
      %v2700 = vpop.f32.mrb[0].mxu0
      %2701 = vmatprep.mubr.f32.mxu0 0.0
      %2702 = vmatmul.mubr.f32.gmra.mrb[0].mxu0 %v520
      %v2703 = vpop.f32.mrb[0].mxu0
      %v2704 = vadd.f32 0.0, %v2703
      %v2705 = vpop.f32.mrb[0].mxu0
      %2706 = vmatprep.mubr.f32.mxu0 0.0
      %2707 = vmatmul.mubr.f32.gmra.mrb[0].mxu0 %v522
      %v2708 = vpop.f32.mrb[0].mxu0
      %v2709 = vadd.f32 0.0, %v2708
      %v2710 = vpop.f32.mrb[0].mxu0
      %2711 = vmatprep.mubr.f32.mxu0 0.0
      %2712 = vmatmul.mubr.f32.gmra.mrb[0].mxu0 %v524
      %v2713 = vpop.f32.mrb[0].mxu0
      %v2714 = vadd.f32 0.0, %v2713
      %v2715 = vpop.f32.mrb[0].mxu0
      %2716 = vmatprep.mubr.f32.mxu0 0.0
      %2717 = vmatmul.mubr.f32.gmra.mrb[0].mxu0 %v526
      %v2718 = vpop.f32.mrb[0].mxu0
      %v2719 = vadd.f32 0.0, %v2718
      %v2720 = vpop.f32.mrb[0].mxu0
      %2721 = vmatprep.mubr.f32.mxu0 0.0
      %2722 = vmatmul.mubr.f32.gmra.mrb[0].mxu0 %v528
      %v2723 = vpop.f32.mrb[0].mxu0
      %v2724 = vadd.f32 0.0, %v2723
      %v2725 = vpop.f32.mrb[0].mxu0
      %2726 = vmatprep.mubr.f32.mxu0 0.0
      %2727 = vmatmul.mubr.f32.gmra.mrb[0].mxu0 %v530
      %v2728 = vpop.f32.mrb[0].mxu0
      %v2729 = vadd.f32 0.0, %v2728
      %v2730 = vpop.f32.mrb[0].mxu0
      %2731 = vmatprep.mubr.f32.mxu0 0.0
      %2732 = vmatmul.mubr.f32.gmra.mrb[0].mxu0 %v532
      %v2733 = vpop.f32.mrb[0].mxu0
      %v2734 = vadd.f32 0.0, %v2733
      %v2735 = vpop.f32.mrb[0].mxu0
      %2736 = vmatprep.mubr.f32.mxu0 0.0
      %2737 = vmatmul.mubr.f32.gmra.mrb[0].mxu0 %v534
      %v2738 = vpop.f32.mrb[0].mxu0
      %v2739 = vadd.f32 0.0, %v2738
      %v2740 = vpop.f32.mrb[0].mxu0
      %2741 = vmatprep.mubr.f32.mxu0 0.0
      %2742 = vmatmul.mubr.f32.gmra.mrb[0].mxu0 %v536
      %v2743 = vpop.f32.mrb[0].mxu0
      %v2744 = vadd.f32 0.0, %v2743
      %v2745 = vpop.f32.mrb[0].mxu0
      %2746 = vmatprep.mubr.f32.mxu0 0.0
      %2747 = vmatmul.mubr.f32.gmra.mrb[0].mxu0 %v538
      %v2748 = vpop.f32.mrb[0].mxu0
      %v2749 = vadd.f32 0.0, %v2748
      %v2750 = vpop.f32.mrb[0].mxu0
      %2751 = vmatprep.mubr.f32.mxu0 0.0
      %2752 = vmatmul.mubr.f32.gmra.mrb[0].mxu0 %v540
      %v2753 = vpop.f32.mrb[0].mxu0
      %v2754 = vadd.f32 0.0, %v2753
      %v2755 = vpop.f32.mrb[0].mxu0
      %2756 = vmatprep.mubr.f32.mxu0 0.0
      %2757 = vmatmul.mubr.f32.gmra.mrb[0].mxu0 %v542
      %v2758 = vpop.f32.mrb[0].mxu0
      %v2759 = vadd.f32 0.0, %v2758
      %v2760 = vpop.f32.mrb[0].mxu0
      %2761 = vmatprep.mubr.f32.mxu0 0.0
      %2762 = vmatmul.mubr.f32.gmra.mrb[0].mxu0 %v544
      %v2763 = vpop.f32.mrb[0].mxu0
      %v2764 = vadd.f32 0.0, %v2763
      %v2765 = vpop.f32.mrb[0].mxu0
      %2766 = vmatprep.mubr.f32.mxu0 0.0
      %2767 = vmatmul.mubr.f32.gmra.mrb[0].mxu0 %v546
      %v2768 = vpop.f32.mrb[0].mxu0
      %v2769 = vadd.f32 0.0, %v2768
      %v2770 = vpop.f32.mrb[0].mxu0
      %2771 = vmatprep.mubr.f32.mxu0 0.0
      %2772 = vmatmul.mubr.f32.gmra.mrb[0].mxu0 %v548
      %v2773 = vpop.f32.mrb[0].mxu0
      %v2774 = vadd.f32 0.0, %v2773
      %v2775 = vpop.f32.mrb[0].mxu0
      %2776 = vmatprep.mubr.f32.mxu0 0.0
      %2777 = vmatmul.mubr.f32.gmra.mrb[0].mxu0 %v1754
      %v2778 = vpop.f32.mrb[0].mxu0
      %v2779 = vadd.f32 0.0, %v2778
      %v2780 = vpop.f32.mrb[0].mxu0
      %2781 = vmatprep.mubr.f32.mxu0 0.0
      %2782 = vmatmul.mubr.f32.gmra.mrb[0].mxu0 %v1756
      %v2783 = vpop.f32.mrb[0].mxu0
      %v2784 = vadd.f32 0.0, %v2783
      %v2785 = vpop.f32.mrb[0].mxu0
      %2786 = vmatprep.mubr.f32.mxu0 0.0
      %2787 = vmatmul.mubr.f32.gmra.mrb[0].mxu0 %v2565
      %v2788 = vpop.f32.mrb[0].mxu0
      %v2789 = vadd.f32 0.0, %v2788
      %v2790 = vpop.f32.mrb[0].mxu0
      %2791 = vmatprep.mubr.f32.mxu0 0.0
      %2792 = vmatmul.mubr.f32.gmra.mrb[0].mxu0 %v2567
      %v2793 = vpop.f32.mrb[0].mxu0
      %v2794 = vadd.f32 0.0, %v2793
      %v2795 = vpop.f32.mrb[0].mxu0
      %2796 = vdwg.mxu0
      %v2797 = vadd.f32 %v2525, %v2639
      %v2798 = vadd.f32 %v2526, %v2644
      %v2799 = vadd.f32 %v2527, %v2649
      %v2800 = vadd.f32 %v2528, %v2654
      %v2801 = vadd.f32 %v2529, %v2659
      %v2802 = vadd.f32 %v2530, %v2664
      %v2803 = vadd.f32 %v2531, %v2669
      %v2804 = vadd.f32 %v2532, %v2674
      %v2805 = vadd.f32 %v2533, %v2679
      %v2806 = vadd.f32 %v2534, %v2684
      %v2807 = vadd.f32 %v2535, %v2689
      %v2808 = vadd.f32 %v2536, %v2694
      %v2809 = vadd.f32 %v2537, %v2699
      %v2810 = vadd.f32 %v2538, %v2704
      %v2811 = vadd.f32 %v2539, %v2709
      %v2812 = vadd.f32 %v2540, %v2714
      %v2813 = vadd.f32 %v2541, %v2719
      %v2814 = vadd.f32 %v2542, %v2724
      %v2815 = vadd.f32 %v2543, %v2729
      %v2816 = vadd.f32 %v2544, %v2734
      %v2817 = vadd.f32 %v2545, %v2739
      %v2818 = vadd.f32 %v2546, %v2744
      %v2819 = vadd.f32 %v2547, %v2749
      %v2820 = vadd.f32 %v2548, %v2754
      %v2821 = vadd.f32 %v2549, %v2759
      %v2822 = vadd.f32 %v2550, %v2764
      %v2823 = vadd.f32 %v2551, %v2769
      %v2824 = vadd.f32 %v2552, %v2774
      %v2825 = vadd.f32 %v2553, %v2779
      %v2826 = vadd.f32 %v2554, %v2784
      %v2827 = vadd.f32 %v2555, %v2789
      %v2828 = vadd.f32 %v2556, %v2794
      %v2829 = vrot.slane %v350, 2
      %v2830 = vrot.slane %v351, 2
      %v2831 = vsel %vm1071, %v2829, %v2830
      %v2832 = vrot.slane %v352, 2
      %v2833 = vsel %vm1071, %v2830, %v2832
      %s2834 = scalar_lea.vmem [#allocation2], 32
      %v2835 = vld [vmem:[%s2834] sm:$0xf]
      %v2836 = vsel %vm485, %v2831, 0
      %v2838 = vsel %vm485, %v2833, 0
      %v2841 = vsel %vm550, %v2835, 0
      %2843 = vmatprep.subr.mxu0 0.0
      %2844 = vmatpush1.msra.mxu0 %v2841
      %2845 = vmatprep.subr.mxu0 0.0
      %2846 = vmatpush1.msra.mxu0 0.0
      %2847 = vmatprep.subr.mxu0 0.0
      %2848 = vmatpush1.msra.mxu0 0.0
      %2849 = vmatprep.subr.mxu0 0.0
      %2850 = vmatpush1.msra.mxu0 0.0
      %2851 = vmatprep.subr.mxu0 0.0
      %2852 = vmatpush1.msra.mxu0 0.0
      %2853 = vmatprep.subr.mxu0 0.0
      %2854 = vmatpush1.msra.mxu0 0.0
      %2855 = vmatprep.subr.mxu0 0.0
      %2856 = vmatpush1.msra.mxu0 0.0
      %2857 = vmatprep.subr.mxu0 0.0
      %2858 = vmatpush1.msra.mxu0 0.0
      %2859 = vmatprep.subr.mxu0 0.0
      %2860 = vmatpush1.msra.mxu0 0.0
      %2861 = vmatprep.subr.mxu0 0.0
      %2862 = vmatpush1.msra.mxu0 0.0
      %2863 = vmatprep.subr.mxu0 0.0
      %2864 = vmatpush1.msra.mxu0 0.0
      %2865 = vmatprep.subr.mxu0 0.0
      %2866 = vmatpush1.msra.mxu0 0.0
      %2867 = vmatprep.subr.mxu0 0.0
      %2868 = vmatpush1.msra.mxu0 0.0
      %2869 = vmatprep.subr.mxu0 0.0
      %2870 = vmatpush1.msra.mxu0 0.0
      %2871 = vmatprep.subr.mxu0 0.0
      %2872 = vmatpush1.msra.mxu0 0.0
      %2873 = vmatprep.subr.mxu0 0.0
      %2874 = vmatpush1.msra.mxu0 0.0
      %2875 = vmatprep.subr.mxu0 0.0
      %2876 = vmatpush1.msra.mxu0 0.0
      %2877 = vmatprep.subr.mxu0 0.0
      %2878 = vmatpush1.msra.mxu0 0.0
      %2879 = vmatprep.subr.mxu0 0.0
      %2880 = vmatpush1.msra.mxu0 0.0
      %2881 = vmatprep.subr.mxu0 0.0
      %2882 = vmatpush1.msra.mxu0 0.0
      %2883 = vmatprep.subr.mxu0 0.0
      %2884 = vmatpush1.msra.mxu0 0.0
      %2885 = vmatprep.subr.mxu0 0.0
      %2886 = vmatpush1.msra.mxu0 0.0
      %2887 = vmatprep.subr.mxu0 0.0
      %2888 = vmatpush1.msra.mxu0 0.0
      %2889 = vmatprep.subr.mxu0 0.0
      %2890 = vmatpush1.msra.mxu0 0.0
      %2891 = vmatprep.subr.mxu0 0.0
      %2892 = vmatpush1.msra.mxu0 0.0
      %2893 = vmatprep.subr.mxu0 0.0
      %2894 = vmatpush1.msra.mxu0 0.0
      %2895 = vmatprep.subr.mxu0 0.0
      %2896 = vmatpush1.msra.mxu0 0.0
      %2897 = vmatprep.subr.mxu0 0.0
      %2898 = vmatpush1.msra.mxu0 0.0
      %2899 = vmatprep.subr.mxu0 0.0
      %2900 = vmatpush1.msra.mxu0 0.0
      %2901 = vmatprep.subr.mxu0 0.0
      %2902 = vmatpush1.msra.mxu0 0.0
      %2903 = vmatprep.subr.mxu0 0.0
      %2904 = vmatpush1.msra.mxu0 0.0
      %2905 = vmatprep.subr.mxu0 0.0
      %2906 = vmatpush1.msra.mxu0 0.0
      %2907 = vmatprep.mubr.f32.mxu0 0.0
      %2908 = vmatmul.mubr.f32.gmra.mrb[0].mxu0 %v1162
      %v2909 = vpop.f32.mrb[0].mxu0
      %v2910 = vadd.f32 0.0, %v2909
      %v2911 = vpop.f32.mrb[0].mxu0
      %2912 = vmatprep.mubr.f32.mxu0 0.0
      %2913 = vmatmul.mubr.f32.gmra.mrb[0].mxu0 %v1164
      %v2914 = vpop.f32.mrb[0].mxu0
      %v2915 = vadd.f32 0.0, %v2914
      %v2916 = vpop.f32.mrb[0].mxu0
      %2917 = vmatprep.mubr.f32.mxu0 0.0
      %2918 = vmatmul.mubr.f32.gmra.mrb[0].mxu0 %v1166
      %v2919 = vpop.f32.mrb[0].mxu0
      %v2920 = vadd.f32 0.0, %v2919
      %v2921 = vpop.f32.mrb[0].mxu0
      %2922 = vmatprep.mubr.f32.mxu0 0.0
      %2923 = vmatmul.mubr.f32.gmra.mrb[0].mxu0 %v1168
      %v2924 = vpop.f32.mrb[0].mxu0
      %v2925 = vadd.f32 0.0, %v2924
      %v2926 = vpop.f32.mrb[0].mxu0
      %2927 = vmatprep.mubr.f32.mxu0 0.0
      %2928 = vmatmul.mubr.f32.gmra.mrb[0].mxu0 %v1170
      %v2929 = vpop.f32.mrb[0].mxu0
      %v2930 = vadd.f32 0.0, %v2929
      %v2931 = vpop.f32.mrb[0].mxu0
      %2932 = vmatprep.mubr.f32.mxu0 0.0
      %2933 = vmatmul.mubr.f32.gmra.mrb[0].mxu0 %v1172
      %v2934 = vpop.f32.mrb[0].mxu0
      %v2935 = vadd.f32 0.0, %v2934
      %v2936 = vpop.f32.mrb[0].mxu0
      %2937 = vmatprep.mubr.f32.mxu0 0.0
      %2938 = vmatmul.mubr.f32.gmra.mrb[0].mxu0 %v1174
      %v2939 = vpop.f32.mrb[0].mxu0
      %v2940 = vadd.f32 0.0, %v2939
      %v2941 = vpop.f32.mrb[0].mxu0
      %2942 = vmatprep.mubr.f32.mxu0 0.0
      %2943 = vmatmul.mubr.f32.gmra.mrb[0].mxu0 %v1176
      %v2944 = vpop.f32.mrb[0].mxu0
      %v2945 = vadd.f32 0.0, %v2944
      %v2946 = vpop.f32.mrb[0].mxu0
      %2947 = vmatprep.mubr.f32.mxu0 0.0
      %2948 = vmatmul.mubr.f32.gmra.mrb[0].mxu0 %v1178
      %v2949 = vpop.f32.mrb[0].mxu0
      %v2950 = vadd.f32 0.0, %v2949
      %v2951 = vpop.f32.mrb[0].mxu0
      %2952 = vmatprep.mubr.f32.mxu0 0.0
      %2953 = vmatmul.mubr.f32.gmra.mrb[0].mxu0 %v1180
      %v2954 = vpop.f32.mrb[0].mxu0
      %v2955 = vadd.f32 0.0, %v2954
      %v2956 = vpop.f32.mrb[0].mxu0
      %2957 = vmatprep.mubr.f32.mxu0 0.0
      %2958 = vmatmul.mubr.f32.gmra.mrb[0].mxu0 %v1182
      %v2959 = vpop.f32.mrb[0].mxu0
      %v2960 = vadd.f32 0.0, %v2959
      %v2961 = vpop.f32.mrb[0].mxu0
      %2962 = vmatprep.mubr.f32.mxu0 0.0
      %2963 = vmatmul.mubr.f32.gmra.mrb[0].mxu0 %v1184
      %v2964 = vpop.f32.mrb[0].mxu0
      %v2965 = vadd.f32 0.0, %v2964
      %v2966 = vpop.f32.mrb[0].mxu0
      %2967 = vmatprep.mubr.f32.mxu0 0.0
      %2968 = vmatmul.mubr.f32.gmra.mrb[0].mxu0 %v1186
      %v2969 = vpop.f32.mrb[0].mxu0
      %v2970 = vadd.f32 0.0, %v2969
      %v2971 = vpop.f32.mrb[0].mxu0
      %2972 = vmatprep.mubr.f32.mxu0 0.0
      %2973 = vmatmul.mubr.f32.gmra.mrb[0].mxu0 %v1188
      %v2974 = vpop.f32.mrb[0].mxu0
      %v2975 = vadd.f32 0.0, %v2974
      %v2976 = vpop.f32.mrb[0].mxu0
      %2977 = vmatprep.mubr.f32.mxu0 0.0
      %2978 = vmatmul.mubr.f32.gmra.mrb[0].mxu0 %v1190
      %v2979 = vpop.f32.mrb[0].mxu0
      %v2980 = vadd.f32 0.0, %v2979
      %v2981 = vpop.f32.mrb[0].mxu0
      %2982 = vmatprep.mubr.f32.mxu0 0.0
      %2983 = vmatmul.mubr.f32.gmra.mrb[0].mxu0 %v1192
      %v2984 = vpop.f32.mrb[0].mxu0
      %v2985 = vadd.f32 0.0, %v2984
      %v2986 = vpop.f32.mrb[0].mxu0
      %2987 = vmatprep.mubr.f32.mxu0 0.0
      %2988 = vmatmul.mubr.f32.gmra.mrb[0].mxu0 %v1194
      %v2989 = vpop.f32.mrb[0].mxu0
      %v2990 = vadd.f32 0.0, %v2989
      %v2991 = vpop.f32.mrb[0].mxu0
      %2992 = vmatprep.mubr.f32.mxu0 0.0
      %2993 = vmatmul.mubr.f32.gmra.mrb[0].mxu0 %v1196
      %v2994 = vpop.f32.mrb[0].mxu0
      %v2995 = vadd.f32 0.0, %v2994
      %v2996 = vpop.f32.mrb[0].mxu0
      %2997 = vmatprep.mubr.f32.mxu0 0.0
      %2998 = vmatmul.mubr.f32.gmra.mrb[0].mxu0 %v1198
      %v2999 = vpop.f32.mrb[0].mxu0
      %v3000 = vadd.f32 0.0, %v2999
      %v3001 = vpop.f32.mrb[0].mxu0
      %3002 = vmatprep.mubr.f32.mxu0 0.0
      %3003 = vmatmul.mubr.f32.gmra.mrb[0].mxu0 %v1200
      %v3004 = vpop.f32.mrb[0].mxu0
      %v3005 = vadd.f32 0.0, %v3004
      %v3006 = vpop.f32.mrb[0].mxu0
      %3007 = vmatprep.mubr.f32.mxu0 0.0
      %3008 = vmatmul.mubr.f32.gmra.mrb[0].mxu0 %v1202
      %v3009 = vpop.f32.mrb[0].mxu0
      %v3010 = vadd.f32 0.0, %v3009
      %v3011 = vpop.f32.mrb[0].mxu0
      %3012 = vmatprep.mubr.f32.mxu0 0.0
      %3013 = vmatmul.mubr.f32.gmra.mrb[0].mxu0 %v1204
      %v3014 = vpop.f32.mrb[0].mxu0
      %v3015 = vadd.f32 0.0, %v3014
      %v3016 = vpop.f32.mrb[0].mxu0
      %3017 = vmatprep.mubr.f32.mxu0 0.0
      %3018 = vmatmul.mubr.f32.gmra.mrb[0].mxu0 %v1206
      %v3019 = vpop.f32.mrb[0].mxu0
      %v3020 = vadd.f32 0.0, %v3019
      %v3021 = vpop.f32.mrb[0].mxu0
      %3022 = vmatprep.mubr.f32.mxu0 0.0
      %3023 = vmatmul.mubr.f32.gmra.mrb[0].mxu0 %v1208
      %v3024 = vpop.f32.mrb[0].mxu0
      %v3025 = vadd.f32 0.0, %v3024
      %v3026 = vpop.f32.mrb[0].mxu0
      %3027 = vmatprep.mubr.f32.mxu0 0.0
      %3028 = vmatmul.mubr.f32.gmra.mrb[0].mxu0 %v1210
      %v3029 = vpop.f32.mrb[0].mxu0
      %v3030 = vadd.f32 0.0, %v3029
      %v3031 = vpop.f32.mrb[0].mxu0
      %3032 = vmatprep.mubr.f32.mxu0 0.0
      %3033 = vmatmul.mubr.f32.gmra.mrb[0].mxu0 %v1212
      %v3034 = vpop.f32.mrb[0].mxu0
      %v3035 = vadd.f32 0.0, %v3034
      %v3036 = vpop.f32.mrb[0].mxu0
      %3037 = vmatprep.mubr.f32.mxu0 0.0
      %3038 = vmatmul.mubr.f32.gmra.mrb[0].mxu0 %v1214
      %v3039 = vpop.f32.mrb[0].mxu0
      %v3040 = vadd.f32 0.0, %v3039
      %v3041 = vpop.f32.mrb[0].mxu0
      %3042 = vmatprep.mubr.f32.mxu0 0.0
      %3043 = vmatmul.mubr.f32.gmra.mrb[0].mxu0 %v1216
      %v3044 = vpop.f32.mrb[0].mxu0
      %v3045 = vadd.f32 0.0, %v3044
      %v3046 = vpop.f32.mrb[0].mxu0
      %3047 = vmatprep.mubr.f32.mxu0 0.0
      %3048 = vmatmul.mubr.f32.gmra.mrb[0].mxu0 %v2025
      %v3049 = vpop.f32.mrb[0].mxu0
      %v3050 = vadd.f32 0.0, %v3049
      %v3051 = vpop.f32.mrb[0].mxu0
      %3052 = vmatprep.mubr.f32.mxu0 0.0
      %3053 = vmatmul.mubr.f32.gmra.mrb[0].mxu0 %v2027
      %v3054 = vpop.f32.mrb[0].mxu0
      %v3055 = vadd.f32 0.0, %v3054
      %v3056 = vpop.f32.mrb[0].mxu0
      %3057 = vmatprep.mubr.f32.mxu0 0.0
      %3058 = vmatmul.mubr.f32.gmra.mrb[0].mxu0 %v2836
      %v3059 = vpop.f32.mrb[0].mxu0
      %v3060 = vadd.f32 0.0, %v3059
      %v3061 = vpop.f32.mrb[0].mxu0
      %3062 = vmatprep.mubr.f32.mxu0 0.0
      %3063 = vmatmul.mubr.f32.gmra.mrb[0].mxu0 %v2838
      %v3064 = vpop.f32.mrb[0].mxu0
      %v3065 = vadd.f32 0.0, %v3064
      %v3066 = vpop.f32.mrb[0].mxu0
      %3067 = vdwg.mxu0
      %v3068 = vadd.f32 %v2797, %v2910
      %v3069 = vadd.f32 %v2798, %v2915
      %v3070 = vadd.f32 %v2799, %v2920
      %v3071 = vadd.f32 %v2800, %v2925
      %v3072 = vadd.f32 %v2801, %v2930
      %v3073 = vadd.f32 %v2802, %v2935
      %v3074 = vadd.f32 %v2803, %v2940
      %v3075 = vadd.f32 %v2804, %v2945
      %v3076 = vadd.f32 %v2805, %v2950
      %v3077 = vadd.f32 %v2806, %v2955
      %v3078 = vadd.f32 %v2807, %v2960
      %v3079 = vadd.f32 %v2808, %v2965
      %v3080 = vadd.f32 %v2809, %v2970
      %v3081 = vadd.f32 %v2810, %v2975
      %v3082 = vadd.f32 %v2811, %v2980
      %v3083 = vadd.f32 %v2812, %v2985
      %v3084 = vadd.f32 %v2813, %v2990
      %v3085 = vadd.f32 %v2814, %v2995
      %v3086 = vadd.f32 %v2815, %v3000
      %v3087 = vadd.f32 %v2816, %v3005
      %v3088 = vadd.f32 %v2817, %v3010
      %v3089 = vadd.f32 %v2818, %v3015
      %v3090 = vadd.f32 %v2819, %v3020
      %v3091 = vadd.f32 %v2820, %v3025
      %v3092 = vadd.f32 %v2821, %v3030
      %v3093 = vadd.f32 %v2822, %v3035
      %v3094 = vadd.f32 %v2823, %v3040
      %v3095 = vadd.f32 %v2824, %v3045
      %v3096 = vadd.f32 %v2825, %v3050
      %v3097 = vadd.f32 %v2826, %v3055
      %v3098 = vadd.f32 %v2827, %v3060
      %v3099 = vadd.f32 %v2828, %v3065
      %vm3100 = vcmask 64512
      %3101 = vst.msk [vmem:[%s216] sm:$0xff] %vm3100, %v3068
      %3102 = vst.msk [vmem:[%s216 + $0x8] sm:$0xff] %vm3100, %v3069
      %3103 = vst.msk [vmem:[%s216 + $0x10] sm:$0xff] %vm3100, %v3070
      %3104 = vst.msk [vmem:[%s216 + $0x18] sm:$0xff] %vm3100, %v3071
      %3105 = vst.msk [vmem:[%s216 + $0x20] sm:$0xff] %vm3100, %v3072
      %3106 = vst.msk [vmem:[%s216 + $0x28] sm:$0xff] %vm3100, %v3073
      %3107 = vst.msk [vmem:[%s216 + $0x30] sm:$0xff] %vm3100, %v3074
      %3108 = vst.msk [vmem:[%s216 + $0x38] sm:$0xff] %vm3100, %v3075
      %3109 = vst.msk [vmem:[%s216 + $0x40] sm:$0xff] %vm3100, %v3076
      %3110 = vst.msk [vmem:[%s216 + $0x48] sm:$0xff] %vm3100, %v3077
      %3111 = vst.msk [vmem:[%s216 + $0x50] sm:$0xff] %vm3100, %v3078
      %3112 = vst.msk [vmem:[%s216 + $0x58] sm:$0xff] %vm3100, %v3079
      %3113 = vst.msk [vmem:[%s216 + $0x60] sm:$0xff] %vm3100, %v3080
      %3114 = vst.msk [vmem:[%s216 + $0x68] sm:$0xff] %vm3100, %v3081
      %3115 = vst.msk [vmem:[%s216 + $0x70] sm:$0xff] %vm3100, %v3082
      %3116 = vst.msk [vmem:[%s216 + $0x78] sm:$0xff] %vm3100, %v3083
      %3117 = vst.msk [vmem:[%s216 + $0x80] sm:$0xff] %vm3100, %v3084
      %3118 = vst.msk [vmem:[%s216 + $0x88] sm:$0xff] %vm3100, %v3085
      %3119 = vst.msk [vmem:[%s216 + $0x90] sm:$0xff] %vm3100, %v3086
      %3120 = vst.msk [vmem:[%s216 + $0x98] sm:$0xff] %vm3100, %v3087
      %3121 = vst.msk [vmem:[%s216 + $0xa0] sm:$0xff] %vm3100, %v3088
      %3122 = vst.msk [vmem:[%s216 + $0xa8] sm:$0xff] %vm3100, %v3089
      %3123 = vst.msk [vmem:[%s216 + $0xb0] sm:$0xff] %vm3100, %v3090
      %3124 = vst.msk [vmem:[%s216 + $0xb8] sm:$0xff] %vm3100, %v3091
      %3125 = vst.msk [vmem:[%s216 + $0xc0] sm:$0xff] %vm3100, %v3092
      %3126 = vst.msk [vmem:[%s216 + $0xc8] sm:$0xff] %vm3100, %v3093
      %3127 = vst.msk [vmem:[%s216 + $0xd0] sm:$0xff] %vm3100, %v3094
      %3128 = vst.msk [vmem:[%s216 + $0xd8] sm:$0xff] %vm3100, %v3095
      %3129 = vst.msk [vmem:[%s216 + $0xe0] sm:$0xff] %vm3100, %v3096
      %3130 = vst.msk [vmem:[%s216 + $0xe8] sm:$0xff] %vm3100, %v3097
      %3131 = vst.msk [vmem:[%s216 + $0xf0] sm:$0xff] %vm3100, %v3098
      %3132 = vst.msk [vmem:[%s216 + $0xf8] sm:$0xff] %vm3100, %v3099
      %s3133 = smul.u32 32, %s19
      %p3134 = scmp.lt.s32.totalorder %s18, 1
      %s3135 = scalar_select %p3134, %s18, 1
      %p3136 = scmp.lt.s32.totalorder %s3133, 31
      %s3137 = scalar_select %p3136, %s3133, 31
      %s3138 = smul.addr %s3135, 32
      %s3139 = sadd.s32 %s3137, %s3138
      %s3140 = smul.addr %s3139, 8
      %s3141 = scalar_lea.vmem %s3, %s3140
      // Predicated region
      $region37: #{tpu_custom_call.1} parent=31 // pred_check
        %p3142 = pneg %p121
      $region38: #{tpu_custom_call.1} parent=31 // pred_check_branch
        %3144 = sbr.rel (%p3142) target = $region40
      $region39: #{tpu_custom_call.1} parent=31 // pred_region
        %s3145 = smul.u32 32, %s19
      $region40: #{tpu_custom_call.1} parent=31 // pred_fallthru
        _
    $region32: #{tpu_custom_call.1} parent=5 // pred_fallthru
      _
    %p3146 = scmp.le.s32.totalorder 2, %s9
    // Predicated region
    $region41: #{tpu_custom_call.1} parent=5 // pred_check
      %p3147 = pneg %p3146
    $region42: #{tpu_custom_call.1} parent=5 // pred_check_branch
      %3149 = sbr.rel (%p3147) target = $region44
    $region43: #{tpu_custom_call.1} parent=5 // pred_region
      %s3150 = ssub.s32 %s9, 2
      // Predicated region
      $region45: #{tpu_custom_call.1} parent=43 // pred_check
        %p3151 = pneg %p127
      $region46: #{tpu_custom_call.1} parent=43 // pred_check_branch
        %3153 = sbr.rel (%p3151) target = $region48
      $region47: #{tpu_custom_call.1} parent=43 // pred_region
        %s3154 = smul.u32 32, %s21
        %p3155 = scmp.lt.s32.totalorder %s20, 1
        %s3156 = scalar_select %p3155, %s20, 1
        %p3157 = scmp.lt.s32.totalorder %s3154, 31
        %s3158 = scalar_select %p3157, %s3154, 31
        %s3159 = smul.addr %s3156, 32
        %s3160 = sadd.s32 %s3158, %s3159
        %s3161 = smul.addr %s3160, 8
        %s3162 = scalar_lea.vmem %s3, %s3161
      $region48: #{tpu_custom_call.1} parent=43 // pred_fallthru
        _
    $region44: #{tpu_custom_call.1} parent=5 // pred_fallthru
      _
  $region6: #{tpu_custom_call.1} parent=0 // loop_footer
    %s13 = sadd.s32 1, %s9
  $region7: #{tpu_custom_call.1} parent=0 // loop_footer_branch
    %8 = sbr.rel target = $region3
  $region8: #{tpu_custom_call.1} parent=0 // loop_exit
    _

</llo_original>
